<compile_context>
chip_gen: v7x
topology: tpu7x:2x2x1
jax: 0.10.0
libtpu: 0.0.40
codegen_flags: <defaults>
</compile_context>

<pallas_src>
import functools

import jax
import jax.numpy as jnp
from jax.experimental import pallas as pl
from jax.experimental.pallas import tpu as pltpu


_GROUP_TAPS = 4   # taps per grouped scratch store: 4 taps * Cin(=4) rows
                  # = 16 rows = one full bf16 sublane tile.


def _round_up(v, m):
    return ((v + m - 1) // m) * m


def _mrconv_kernel(x_ref, w_ref, b_ref, o_ref, s_ref, *,
                   K, Wp, Cin, n_cols, Bt, taps, group):
    """Fused multi-kernel-size 'same' conv for Bt images via im2col + one matmul.

    x_ref: (Bt, Cin, Lpad)          bf16  flat zero-padded images (row-major (h, w))
    w_ref: (Cout_total, taps*Cin)   bf16  fused weight matrix (zero-padded tap cols)
    b_ref: (Cout_total, 1)          f32   fused bias
    o_ref: (Bt, Cout_total, n_cols) f32   lane-dense output (columns = h*Wp + w)
    s_ref: (taps*Cin, Bt*n_cols)    bf16  im2col scratch
    """
    rows_per_group = group * Cin
    n_groups = len(taps) // group

    # Build the bf16 im2col matrix with full-tile grouped stores.  Each tap
    # (i, j) is a static lane-offset slice of the flat padded row; 4 taps are
    # concatenated into one 16-row bf16 tile and stored once (no RMW stores).
    for b in range(Bt):
        c0 = b * n_cols
        for g in range(n_groups):
            pieces = []
            for t in taps[g * group:(g + 1) * group]:
                i, j = divmod(t, K)
                off = i * Wp + j
                pieces.append(x_ref[b, :, off:off + n_cols])   # (Cin, n_cols) bf16
            s_ref[g * rows_per_group:(g + 1) * rows_per_group,
                  c0:c0 + n_cols] = jnp.concatenate(pieces, axis=0)

    # Single MXU matmul: (Cout_total, taps*Cin) x (taps*Cin, Bt*n_cols),
    # bf16 operands, f32 accumulation.
    acc = jax.lax.dot_general(
        w_ref[...], s_ref[...],
        dimension_numbers=(((1,), (0,)), ((), ())),
        preferred_element_type=jnp.float32)          # (Cout_total, Bt*n_cols)
    acc = acc + b_ref[...]

    for b in range(Bt):                              # lane-aligned full stores
        o_ref[b] = acc[:, b * n_cols:(b + 1) * n_cols].astype(o_ref.dtype)


def mrconv_forward(x_nchw, wmat, bias2d, kmax):
    """MRConv forward: fused 'same' convs, output channel-concatenated (NCHW)."""
    B, Cin, H, W = x_nchw.shape
    Cout_total, kkc_pad = wmat.shape
    K = kmax
    pad = K // 2
    Wp = W + 2 * pad
    taps_pad = kkc_pad // Cin                          # padded tap count (52)
    taps = tuple(min(t, K * K - 1) for t in range(taps_pad))

    n_valid = H * Wp                                   # valid flat output columns
    n_cols = _round_up(n_valid, 128)                   # lane-dense store width
    # Flat length needed so the deepest tap read stays in range.
    l_need = n_cols + (K - 1) * Wp + (K - 1)
    Hp_ext = max(-(-l_need // Wp), H + 2 * pad)        # padded-image rows
    Lpad = Hp_ext * Wp

    # Pick how many images share one grid step (bigger matmul N, fewer per-step
    # overheads), bounded by a conservative VMEM budget and N <= ~4K lanes.
    per_img = (2 * Cin * Lpad * 2                      # double-buffered bf16 input
               + taps_pad * Cin * n_cols * 2           # bf16 im2col scratch
               + 2 * Cout_total * n_cols * 4)          # double-buffered f32 output
    budget = 20 << 20
    Bt = max(1, min(B, budget // max(per_img, 1), max(1, 4096 // n_cols)))
    B_pad = _round_up(B, Bt)
    grid = (B_pad // Bt,)

    # ONE pad: batch pad + zero halo + enough bottom rows for the flat tail,
    # then a free row-major reshape (no second pad, no transposes).
    xflat = jnp.pad(
        x_nchw.astype(jnp.bfloat16),
        ((0, B_pad - B), (0, 0), (pad, Hp_ext - H - pad), (pad, pad)),
    ).reshape(B_pad, Cin, Lpad)

    vmem_need = (2 * Bt * Cin * Lpad * 2
                 + 2 * Cout_total * kkc_pad * 2
                 + 2 * Cout_total * 4
                 + 2 * Bt * Cout_total * n_cols * 4
                 + taps_pad * Cin * Bt * n_cols * 2)
    vmem_limit = int(min(100 << 20, max(32 << 20, 2 * vmem_need)))

    cost = pl.CostEstimate(
        flops=2 * B * Cout_total * K * K * Cin * H * W,
        transcendentals=0,
        bytes_accessed=(B_pad * Cin * Lpad * 2
                        + Cout_total * kkc_pad * 2 + Cout_total * 4
                        + B_pad * Cout_total * n_cols * 4))

    kern = functools.partial(_mrconv_kernel, K=K, Wp=Wp, Cin=Cin,
                             n_cols=n_cols, Bt=Bt, taps=taps, group=_GROUP_TAPS)
    out_flat = pl.pallas_call(
        kern,
        out_shape=jax.ShapeDtypeStruct((B_pad, Cout_total, n_cols), jnp.float32),
        grid=grid,
        in_specs=[
            pl.BlockSpec((Bt, Cin, Lpad), lambda g: (g, 0, 0)),
            pl.BlockSpec((Cout_total, kkc_pad), lambda g: (0, 0)),
            pl.BlockSpec((Cout_total, 1), lambda g: (0, 0)),
        ],
        out_specs=pl.BlockSpec((Bt, Cout_total, n_cols), lambda g: (g, 0, 0)),
        scratch_shapes=[pltpu.VMEM((taps_pad * Cin, Bt * n_cols), jnp.bfloat16)],
        compiler_params=pltpu.CompilerParams(
            dimension_semantics=("parallel",),
            vmem_limit_bytes=vmem_limit),
        cost_estimate=cost,
    )(xflat, wmat, bias2d)

    # Columns are flat (h, w) in the *padded* width; crop and reshape to NCHW.
    out = out_flat[:B, :, :n_valid].reshape(B, Cout_total, H, Wp)[..., :W]
    return out


def fuse_mrconv_params(params, kernel_sizes):
    """Zero-pad every kernel to K_max x K_max, concat along Cout, flatten.

    Returns (wmat (Cout_total, taps_pad*Cin) bf16, bias (Cout_total, 1) f32, K_max).
    Column order of wmat is (i*K + j)*Cin + c, matching the kernel's im2col rows;
    the tap dimension is padded to a multiple of _GROUP_TAPS with zero columns so
    every scratch store in the kernel is a full 16-row bf16 tile.
    """
    K = max(kernel_sizes)
    w_list, b_list = [], []
    for (w_hwio, bias), k in zip(params, kernel_sizes):
        d = (K - k) // 2
        w_pad = jnp.pad(w_hwio, ((d, K - k - d), (d, K - k - d), (0, 0), (0, 0)))
        w_list.append(w_pad)
        b_list.append(bias)
    w_all = jnp.concatenate(w_list, axis=-1)               # (K, K, Cin, Cout_total)
    cin = w_all.shape[2]
    cout_total = w_all.shape[-1]
    wmat = jnp.transpose(w_all, (3, 0, 1, 2)).reshape(cout_total, -1)
    taps_pad = _round_up(K * K, _GROUP_TAPS)
    wmat = jnp.pad(wmat, ((0, 0), (0, (taps_pad - K * K) * cin)))
    bias_all = jnp.concatenate(b_list).reshape(cout_total, 1)
    return wmat.astype(jnp.bfloat16), bias_all.astype(jnp.float32), K


def make_mrconv_params(key, in_channels, out_channels, kernel_sizes):
    """Deterministic synthetic weights, shaped like nn.Conv2d (OIHW) -> HWIO."""
    params = []
    for idx, k in enumerate(kernel_sizes):
        kw, kb = jax.random.split(jax.random.fold_in(key, idx))
        fan_in = in_channels * k * k
        bound = 1.0 / jnp.sqrt(fan_in)
        w_oihw = jax.random.uniform(
            kw, (out_channels, in_channels, k, k),
            minval=-bound, maxval=bound, dtype=jnp.float32)
        bias = jax.random.uniform(
            kb, (out_channels,), minval=-bound, maxval=bound,
            dtype=jnp.float32)
        w_hwio = jnp.transpose(w_oihw, (2, 3, 1, 0))        # (k, k, Cin, Cout)
        params.append((w_hwio, bias))
    return params


def _reference_forward(x_nchw, params, kernel_sizes, cast_operands_to_bf16):
    """Pure-JAX reference (lax conv, exact f32 accumulation)."""
    xr = x_nchw
    if cast_operands_to_bf16:
        xr = xr.astype(jnp.bfloat16).astype(jnp.float32)
    outs = []
    for (w_hwio, bias), k in zip(params, kernel_sizes):
        w = w_hwio
        if cast_operands_to_bf16:
            w = w.astype(jnp.bfloat16).astype(jnp.float32)
        w_oihw = jnp.transpose(w, (3, 2, 0, 1))
        y = jax.lax.conv_general_dilated(
            xr, w_oihw, window_strides=(1, 1), padding="SAME",
            dimension_numbers=("NCHW", "OIHW", "NCHW"),
            precision=jax.lax.Precision.HIGHEST)
        outs.append(y + bias[None, :, None, None])
    return jnp.concatenate(outs, axis=1)


if __name__ == "__main__":
    B, Cin, Hs, Ws = 2, 4, 16, 16
    Cout = 8
    kernel_sizes = [3, 5, 7]

    key = jax.random.PRNGKey(0)
    kx, kp = jax.random.split(key)
    x = jax.random.normal(kx, (B, Cin, Hs, Ws), dtype=jnp.float32)
    params = make_mrconv_params(kp, Cin, Cout, kernel_sizes)
    wmat, bias2d, kmax = fuse_mrconv_params(params, kernel_sizes)

    fwd = jax.jit(functools.partial(
        mrconv_forward, wmat=wmat, bias2d=bias2d, kmax=kmax))
    out = jax.block_until_ready(fwd(x))

    assert out.shape == (B, Cout * len(kernel_sizes), Hs, Ws), out.shape

    # Tight check: same bf16-rounded operands, f32 accumulation in both paths.
    ref_bf16 = _reference_forward(x, params, kernel_sizes,
                                  cast_operands_to_bf16=True)
    if not jnp.allclose(out, ref_bf16, atol=1e-3, rtol=1e-3):
        err = float(jnp.max(jnp.abs(out - ref_bf16)))
        raise AssertionError(f"mismatch vs bf16-operand reference (max {err})")

    # Loose check vs the pure-f32 module semantics (bf16 operand tolerance).
    ref_f32 = _reference_forward(x, params, kernel_sizes,
                                 cast_operands_to_bf16=False)
    if not jnp.allclose(out, ref_f32, atol=1e-1, rtol=5e-2):
        err = float(jnp.max(jnp.abs(out - ref_f32)))
        raise AssertionError(f"mismatch vs f32 reference (max {err})")

    print("KERNEL_OK")
</pallas_src>

<mosaic_0001>
module attributes {stable_mosaic.version = 11 : i64} {
  func.func @_mrconv_kernel(%arg0: i32, %arg1: memref<2x4x528xbf16, #tpu.memory_space<vmem>>, %arg2: memref<24x208xbf16, #tpu.memory_space<vmem>>, %arg3: memref<24x1xf32, #tpu.memory_space<vmem>>, %arg4: memref<2x24x384xf32, #tpu.memory_space<vmem>>, %arg5: memref<208x768xbf16, #tpu.memory_space<vmem>>) attributes {dimension_semantics = [#tpu.dimension_semantics<parallel>], iteration_bounds = array<i64: 1>, scalar_prefetch = 0 : i64, scratch_operands = 1 : i64, tpu.core_type = #tpu.core_type<tc>, window_params = [{transform_indices = @transform_0, window_bounds = array<i64: 2, 4, 528>}, {pipeline_mode = #tpu.pipeline_mode<synchronous>, transform_indices = @transform_1, window_bounds = array<i64: 24, 208>}, {pipeline_mode = #tpu.pipeline_mode<synchronous>, transform_indices = @transform_2, window_bounds = array<i64: 24, 1>}, {transform_indices = @transform_3, window_bounds = array<i64: 2, 24, 384>}]} {
    %c0 = arith.constant 0 : index
    %c0_0 = arith.constant 0 : index
    %c0_1 = arith.constant 0 : index
    %0 = vector.load %arg1[%c0, %c0_0, %c0_1] : memref<2x4x528xbf16, #tpu.memory_space<vmem>>, vector<1x4x384xbf16>
    %1 = vector.shape_cast %0 : vector<1x4x384xbf16> to vector<4x384xbf16>
    %c0_2 = arith.constant 0 : index
    %c0_3 = arith.constant 0 : index
    %c1 = arith.constant 1 : index
    %2 = vector.load %arg1[%c0_2, %c0_3, %c1] : memref<2x4x528xbf16, #tpu.memory_space<vmem>>, vector<1x4x384xbf16>
    %3 = vector.shape_cast %2 : vector<1x4x384xbf16> to vector<4x384xbf16>
    %c0_4 = arith.constant 0 : index
    %c0_5 = arith.constant 0 : index
    %c2 = arith.constant 2 : index
    %4 = vector.load %arg1[%c0_4, %c0_5, %c2] : memref<2x4x528xbf16, #tpu.memory_space<vmem>>, vector<1x4x384xbf16>
    %5 = vector.shape_cast %4 : vector<1x4x384xbf16> to vector<4x384xbf16>
    %c0_6 = arith.constant 0 : index
    %c0_7 = arith.constant 0 : index
    %c3 = arith.constant 3 : index
    %6 = vector.load %arg1[%c0_6, %c0_7, %c3] : memref<2x4x528xbf16, #tpu.memory_space<vmem>>, vector<1x4x384xbf16>
    %7 = vector.shape_cast %6 : vector<1x4x384xbf16> to vector<4x384xbf16>
    %8 = tpu.concatenate %1, %3, %5, %7 in 0 : vector<4x384xbf16>, vector<4x384xbf16>, vector<4x384xbf16>, vector<4x384xbf16> -> vector<16x384xbf16>
    %c0_8 = arith.constant 0 : index
    %c0_9 = arith.constant 0 : index
    %9 = vector.load %arg5[%c0_8, %c0_9] : memref<208x768xbf16, #tpu.memory_space<vmem>>, vector<16x384xbf16>
    tpu.vector_store %arg5[%c0_8, %c0_9], %8 {strides = array<i32>} : memref<208x768xbf16, #tpu.memory_space<vmem>>, vector<16x384xbf16>,
    %c0_10 = arith.constant 0 : index
    %c0_11 = arith.constant 0 : index
    %c4 = arith.constant 4 : index
    %10 = vector.load %arg1[%c0_10, %c0_11, %c4] : memref<2x4x528xbf16, #tpu.memory_space<vmem>>, vector<1x4x384xbf16>
    %11 = vector.shape_cast %10 : vector<1x4x384xbf16> to vector<4x384xbf16>
    %c0_12 = arith.constant 0 : index
    %c0_13 = arith.constant 0 : index
    %c5 = arith.constant 5 : index
    %12 = vector.load %arg1[%c0_12, %c0_13, %c5] : memref<2x4x528xbf16, #tpu.memory_space<vmem>>, vector<1x4x384xbf16>
    %13 = vector.shape_cast %12 : vector<1x4x384xbf16> to vector<4x384xbf16>
    %c0_14 = arith.constant 0 : index
    %c0_15 = arith.constant 0 : index
    %c6 = arith.constant 6 : index
    %14 = vector.load %arg1[%c0_14, %c0_15, %c6] : memref<2x4x528xbf16, #tpu.memory_space<vmem>>, vector<1x4x384xbf16>
    %15 = vector.shape_cast %14 : vector<1x4x384xbf16> to vector<4x384xbf16>
    %c0_16 = arith.constant 0 : index
    %c0_17 = arith.constant 0 : index
    %c22 = arith.constant 22 : index
    %16 = vector.load %arg1[%c0_16, %c0_17, %c22] : memref<2x4x528xbf16, #tpu.memory_space<vmem>>, vector<1x4x384xbf16>
    %17 = vector.shape_cast %16 : vector<1x4x384xbf16> to vector<4x384xbf16>
    %18 = tpu.concatenate %11, %13, %15, %17 in 0 : vector<4x384xbf16>, vector<4x384xbf16>, vector<4x384xbf16>, vector<4x384xbf16> -> vector<16x384xbf16>
    %c16 = arith.constant 16 : index
    %c0_18 = arith.constant 0 : index
    %19 = vector.load %arg5[%c16, %c0_18] : memref<208x768xbf16, #tpu.memory_space<vmem>>, vector<16x384xbf16>
    tpu.vector_store %arg5[%c16, %c0_18], %18 {strides = array<i32>} : memref<208x768xbf16, #tpu.memory_space<vmem>>, vector<16x384xbf16>,
    %c0_19 = arith.constant 0 : index
    %c0_20 = arith.constant 0 : index
    %c23 = arith.constant 23 : index
    %20 = vector.load %arg1[%c0_19, %c0_20, %c23] : memref<2x4x528xbf16, #tpu.memory_space<vmem>>, vector<1x4x384xbf16>
    %21 = vector.shape_cast %20 : vector<1x4x384xbf16> to vector<4x384xbf16>
    %c0_21 = arith.constant 0 : index
    %c0_22 = arith.constant 0 : index
    %c24 = arith.constant 24 : index
    %22 = vector.load %arg1[%c0_21, %c0_22, %c24] : memref<2x4x528xbf16, #tpu.memory_space<vmem>>, vector<1x4x384xbf16>
    %23 = vector.shape_cast %22 : vector<1x4x384xbf16> to vector<4x384xbf16>
    %c0_23 = arith.constant 0 : index
    %c0_24 = arith.constant 0 : index
    %c25 = arith.constant 25 : index
    %24 = vector.load %arg1[%c0_23, %c0_24, %c25] : memref<2x4x528xbf16, #tpu.memory_space<vmem>>, vector<1x4x384xbf16>
    %25 = vector.shape_cast %24 : vector<1x4x384xbf16> to vector<4x384xbf16>
    %c0_25 = arith.constant 0 : index
    %c0_26 = arith.constant 0 : index
    %c26 = arith.constant 26 : index
    %26 = vector.load %arg1[%c0_25, %c0_26, %c26] : memref<2x4x528xbf16, #tpu.memory_space<vmem>>, vector<1x4x384xbf16>
    %27 = vector.shape_cast %26 : vector<1x4x384xbf16> to vector<4x384xbf16>
    %28 = tpu.concatenate %21, %23, %25, %27 in 0 : vector<4x384xbf16>, vector<4x384xbf16>, vector<4x384xbf16>, vector<4x384xbf16> -> vector<16x384xbf16>
    %c32 = arith.constant 32 : index
    %c0_27 = arith.constant 0 : index
    %29 = vector.load %arg5[%c32, %c0_27] : memref<208x768xbf16, #tpu.memory_space<vmem>>, vector<16x384xbf16>
    tpu.vector_store %arg5[%c32, %c0_27], %28 {strides = array<i32>} : memref<208x768xbf16, #tpu.memory_space<vmem>>, vector<16x384xbf16>,
    %c0_28 = arith.constant 0 : index
    %c0_29 = arith.constant 0 : index
    %c27 = arith.constant 27 : index
    %30 = vector.load %arg1[%c0_28, %c0_29, %c27] : memref<2x4x528xbf16, #tpu.memory_space<vmem>>, vector<1x4x384xbf16>
    %31 = vector.shape_cast %30 : vector<1x4x384xbf16> to vector<4x384xbf16>
    %c0_30 = arith.constant 0 : index
    %c0_31 = arith.constant 0 : index
    %c28 = arith.constant 28 : index
    %32 = vector.load %arg1[%c0_30, %c0_31, %c28] : memref<2x4x528xbf16, #tpu.memory_space<vmem>>, vector<1x4x384xbf16>
    %33 = vector.shape_cast %32 : vector<1x4x384xbf16> to vector<4x384xbf16>
    %c0_32 = arith.constant 0 : index
    %c0_33 = arith.constant 0 : index
    %c44 = arith.constant 44 : index
    %34 = vector.load %arg1[%c0_32, %c0_33, %c44] : memref<2x4x528xbf16, #tpu.memory_space<vmem>>, vector<1x4x384xbf16>
    %35 = vector.shape_cast %34 : vector<1x4x384xbf16> to vector<4x384xbf16>
    %c0_34 = arith.constant 0 : index
    %c0_35 = arith.constant 0 : index
    %c45 = arith.constant 45 : index
    %36 = vector.load %arg1[%c0_34, %c0_35, %c45] : memref<2x4x528xbf16, #tpu.memory_space<vmem>>, vector<1x4x384xbf16>
    %37 = vector.shape_cast %36 : vector<1x4x384xbf16> to vector<4x384xbf16>
    %38 = tpu.concatenate %31, %33, %35, %37 in 0 : vector<4x384xbf16>, vector<4x384xbf16>, vector<4x384xbf16>, vector<4x384xbf16> -> vector<16x384xbf16>
    %c48 = arith.constant 48 : index
    %c0_36 = arith.constant 0 : index
    %39 = vector.load %arg5[%c48, %c0_36] : memref<208x768xbf16, #tpu.memory_space<vmem>>, vector<16x384xbf16>
    tpu.vector_store %arg5[%c48, %c0_36], %38 {strides = array<i32>} : memref<208x768xbf16, #tpu.memory_space<vmem>>, vector<16x384xbf16>,
    %c0_37 = arith.constant 0 : index
    %c0_38 = arith.constant 0 : index
    %c46 = arith.constant 46 : index
    %40 = vector.load %arg1[%c0_37, %c0_38, %c46] : memref<2x4x528xbf16, #tpu.memory_space<vmem>>, vector<1x4x384xbf16>
    %41 = vector.shape_cast %40 : vector<1x4x384xbf16> to vector<4x384xbf16>
    %c0_39 = arith.constant 0 : index
    %c0_40 = arith.constant 0 : index
    %c47 = arith.constant 47 : index
    %42 = vector.load %arg1[%c0_39, %c0_40, %c47] : memref<2x4x528xbf16, #tpu.memory_space<vmem>>, vector<1x4x384xbf16>
    %43 = vector.shape_cast %42 : vector<1x4x384xbf16> to vector<4x384xbf16>
    %c0_41 = arith.constant 0 : index
    %c0_42 = arith.constant 0 : index
    %c48_43 = arith.constant 48 : index
    %44 = vector.load %arg1[%c0_41, %c0_42, %c48_43] : memref<2x4x528xbf16, #tpu.memory_space<vmem>>, vector<1x4x384xbf16>
    %45 = vector.shape_cast %44 : vector<1x4x384xbf16> to vector<4x384xbf16>
    %c0_44 = arith.constant 0 : index
    %c0_45 = arith.constant 0 : index
    %c49 = arith.constant 49 : index
    %46 = vector.load %arg1[%c0_44, %c0_45, %c49] : memref<2x4x528xbf16, #tpu.memory_space<vmem>>, vector<1x4x384xbf16>
    %47 = vector.shape_cast %46 : vector<1x4x384xbf16> to vector<4x384xbf16>
    %48 = tpu.concatenate %41, %43, %45, %47 in 0 : vector<4x384xbf16>, vector<4x384xbf16>, vector<4x384xbf16>, vector<4x384xbf16> -> vector<16x384xbf16>
    %c64 = arith.constant 64 : index
    %c0_46 = arith.constant 0 : index
    %49 = vector.load %arg5[%c64, %c0_46] : memref<208x768xbf16, #tpu.memory_space<vmem>>, vector<16x384xbf16>
    tpu.vector_store %arg5[%c64, %c0_46], %48 {strides = array<i32>} : memref<208x768xbf16, #tpu.memory_space<vmem>>, vector<16x384xbf16>,
    %c0_47 = arith.constant 0 : index
    %c0_48 = arith.constant 0 : index
    %c50 = arith.constant 50 : index
    %50 = vector.load %arg1[%c0_47, %c0_48, %c50] : memref<2x4x528xbf16, #tpu.memory_space<vmem>>, vector<1x4x384xbf16>
    %51 = vector.shape_cast %50 : vector<1x4x384xbf16> to vector<4x384xbf16>
    %c0_49 = arith.constant 0 : index
    %c0_50 = arith.constant 0 : index
    %c66 = arith.constant 66 : index
    %52 = vector.load %arg1[%c0_49, %c0_50, %c66] : memref<2x4x528xbf16, #tpu.memory_space<vmem>>, vector<1x4x384xbf16>
    %53 = vector.shape_cast %52 : vector<1x4x384xbf16> to vector<4x384xbf16>
    %c0_51 = arith.constant 0 : index
    %c0_52 = arith.constant 0 : index
    %c67 = arith.constant 67 : index
    %54 = vector.load %arg1[%c0_51, %c0_52, %c67] : memref<2x4x528xbf16, #tpu.memory_space<vmem>>, vector<1x4x384xbf16>
    %55 = vector.shape_cast %54 : vector<1x4x384xbf16> to vector<4x384xbf16>
    %c0_53 = arith.constant 0 : index
    %c0_54 = arith.constant 0 : index
    %c68 = arith.constant 68 : index
    %56 = vector.load %arg1[%c0_53, %c0_54, %c68] : memref<2x4x528xbf16, #tpu.memory_space<vmem>>, vector<1x4x384xbf16>
    %57 = vector.shape_cast %56 : vector<1x4x384xbf16> to vector<4x384xbf16>
    %58 = tpu.concatenate %51, %53, %55, %57 in 0 : vector<4x384xbf16>, vector<4x384xbf16>, vector<4x384xbf16>, vector<4x384xbf16> -> vector<16x384xbf16>
    %c80 = arith.constant 80 : index
    %c0_55 = arith.constant 0 : index
    %59 = vector.load %arg5[%c80, %c0_55] : memref<208x768xbf16, #tpu.memory_space<vmem>>, vector<16x384xbf16>
    tpu.vector_store %arg5[%c80, %c0_55], %58 {strides = array<i32>} : memref<208x768xbf16, #tpu.memory_space<vmem>>, vector<16x384xbf16>,
    %c0_56 = arith.constant 0 : index
    %c0_57 = arith.constant 0 : index
    %c69 = arith.constant 69 : index
    %60 = vector.load %arg1[%c0_56, %c0_57, %c69] : memref<2x4x528xbf16, #tpu.memory_space<vmem>>, vector<1x4x384xbf16>
    %61 = vector.shape_cast %60 : vector<1x4x384xbf16> to vector<4x384xbf16>
    %c0_58 = arith.constant 0 : index
    %c0_59 = arith.constant 0 : index
    %c70 = arith.constant 70 : index
    %62 = vector.load %arg1[%c0_58, %c0_59, %c70] : memref<2x4x528xbf16, #tpu.memory_space<vmem>>, vector<1x4x384xbf16>
    %63 = vector.shape_cast %62 : vector<1x4x384xbf16> to vector<4x384xbf16>
    %c0_60 = arith.constant 0 : index
    %c0_61 = arith.constant 0 : index
    %c71 = arith.constant 71 : index
    %64 = vector.load %arg1[%c0_60, %c0_61, %c71] : memref<2x4x528xbf16, #tpu.memory_space<vmem>>, vector<1x4x384xbf16>
    %65 = vector.shape_cast %64 : vector<1x4x384xbf16> to vector<4x384xbf16>
    %c0_62 = arith.constant 0 : index
    %c0_63 = arith.constant 0 : index
    %c72 = arith.constant 72 : index
    %66 = vector.load %arg1[%c0_62, %c0_63, %c72] : memref<2x4x528xbf16, #tpu.memory_space<vmem>>, vector<1x4x384xbf16>
    %67 = vector.shape_cast %66 : vector<1x4x384xbf16> to vector<4x384xbf16>
    %68 = tpu.concatenate %61, %63, %65, %67 in 0 : vector<4x384xbf16>, vector<4x384xbf16>, vector<4x384xbf16>, vector<4x384xbf16> -> vector<16x384xbf16>
    %c96 = arith.constant 96 : index
    %c0_64 = arith.constant 0 : index
    %69 = vector.load %arg5[%c96, %c0_64] : memref<208x768xbf16, #tpu.memory_space<vmem>>, vector<16x384xbf16>
    tpu.vector_store %arg5[%c96, %c0_64], %68 {strides = array<i32>} : memref<208x768xbf16, #tpu.memory_space<vmem>>, vector<16x384xbf16>,
    %c0_65 = arith.constant 0 : index
    %c0_66 = arith.constant 0 : index
    %c88 = arith.constant 88 : index
    %70 = vector.load %arg1[%c0_65, %c0_66, %c88] : memref<2x4x528xbf16, #tpu.memory_space<vmem>>, vector<1x4x384xbf16>
    %71 = vector.shape_cast %70 : vector<1x4x384xbf16> to vector<4x384xbf16>
    %c0_67 = arith.constant 0 : index
    %c0_68 = arith.constant 0 : index
    %c89 = arith.constant 89 : index
    %72 = vector.load %arg1[%c0_67, %c0_68, %c89] : memref<2x4x528xbf16, #tpu.memory_space<vmem>>, vector<1x4x384xbf16>
    %73 = vector.shape_cast %72 : vector<1x4x384xbf16> to vector<4x384xbf16>
    %c0_69 = arith.constant 0 : index
    %c0_70 = arith.constant 0 : index
    %c90 = arith.constant 90 : index
    %74 = vector.load %arg1[%c0_69, %c0_70, %c90] : memref<2x4x528xbf16, #tpu.memory_space<vmem>>, vector<1x4x384xbf16>
    %75 = vector.shape_cast %74 : vector<1x4x384xbf16> to vector<4x384xbf16>
    %c0_71 = arith.constant 0 : index
    %c0_72 = arith.constant 0 : index
    %c91 = arith.constant 91 : index
    %76 = vector.load %arg1[%c0_71, %c0_72, %c91] : memref<2x4x528xbf16, #tpu.memory_space<vmem>>, vector<1x4x384xbf16>
    %77 = vector.shape_cast %76 : vector<1x4x384xbf16> to vector<4x384xbf16>
    %78 = tpu.concatenate %71, %73, %75, %77 in 0 : vector<4x384xbf16>, vector<4x384xbf16>, vector<4x384xbf16>, vector<4x384xbf16> -> vector<16x384xbf16>
    %c112 = arith.constant 112 : index
    %c0_73 = arith.constant 0 : index
    %79 = vector.load %arg5[%c112, %c0_73] : memref<208x768xbf16, #tpu.memory_space<vmem>>, vector<16x384xbf16>
    tpu.vector_store %arg5[%c112, %c0_73], %78 {strides = array<i32>} : memref<208x768xbf16, #tpu.memory_space<vmem>>, vector<16x384xbf16>,
    %c0_74 = arith.constant 0 : index
    %c0_75 = arith.constant 0 : index
    %c92 = arith.constant 92 : index
    %80 = vector.load %arg1[%c0_74, %c0_75, %c92] : memref<2x4x528xbf16, #tpu.memory_space<vmem>>, vector<1x4x384xbf16>
    %81 = vector.shape_cast %80 : vector<1x4x384xbf16> to vector<4x384xbf16>
    %c0_76 = arith.constant 0 : index
    %c0_77 = arith.constant 0 : index
    %c93 = arith.constant 93 : index
    %82 = vector.load %arg1[%c0_76, %c0_77, %c93] : memref<2x4x528xbf16, #tpu.memory_space<vmem>>, vector<1x4x384xbf16>
    %83 = vector.shape_cast %82 : vector<1x4x384xbf16> to vector<4x384xbf16>
    %c0_78 = arith.constant 0 : index
    %c0_79 = arith.constant 0 : index
    %c94 = arith.constant 94 : index
    %84 = vector.load %arg1[%c0_78, %c0_79, %c94] : memref<2x4x528xbf16, #tpu.memory_space<vmem>>, vector<1x4x384xbf16>
    %85 = vector.shape_cast %84 : vector<1x4x384xbf16> to vector<4x384xbf16>
    %c0_80 = arith.constant 0 : index
    %c0_81 = arith.constant 0 : index
    %c110 = arith.constant 110 : index
    %86 = vector.load %arg1[%c0_80, %c0_81, %c110] : memref<2x4x528xbf16, #tpu.memory_space<vmem>>, vector<1x4x384xbf16>
    %87 = vector.shape_cast %86 : vector<1x4x384xbf16> to vector<4x384xbf16>
    %88 = tpu.concatenate %81, %83, %85, %87 in 0 : vector<4x384xbf16>, vector<4x384xbf16>, vector<4x384xbf16>, vector<4x384xbf16> -> vector<16x384xbf16>
    %c128 = arith.constant 128 : index
    %c0_82 = arith.constant 0 : index
    %89 = vector.load %arg5[%c128, %c0_82] : memref<208x768xbf16, #tpu.memory_space<vmem>>, vector<16x384xbf16>
    tpu.vector_store %arg5[%c128, %c0_82], %88 {strides = array<i32>} : memref<208x768xbf16, #tpu.memory_space<vmem>>, vector<16x384xbf16>,
    %c0_83 = arith.constant 0 : index
    %c0_84 = arith.constant 0 : index
    %c111 = arith.constant 111 : index
    %90 = vector.load %arg1[%c0_83, %c0_84, %c111] : memref<2x4x528xbf16, #tpu.memory_space<vmem>>, vector<1x4x384xbf16>
    %91 = vector.shape_cast %90 : vector<1x4x384xbf16> to vector<4x384xbf16>
    %c0_85 = arith.constant 0 : index
    %c0_86 = arith.constant 0 : index
    %c112_87 = arith.constant 112 : index
    %92 = vector.load %arg1[%c0_85, %c0_86, %c112_87] : memref<2x4x528xbf16, #tpu.memory_space<vmem>>, vector<1x4x384xbf16>
    %93 = vector.shape_cast %92 : vector<1x4x384xbf16> to vector<4x384xbf16>
    %c0_88 = arith.constant 0 : index
    %c0_89 = arith.constant 0 : index
    %c113 = arith.constant 113 : index
    %94 = vector.load %arg1[%c0_88, %c0_89, %c113] : memref<2x4x528xbf16, #tpu.memory_space<vmem>>, vector<1x4x384xbf16>
    %95 = vector.shape_cast %94 : vector<1x4x384xbf16> to vector<4x384xbf16>
    %c0_90 = arith.constant 0 : index
    %c0_91 = arith.constant 0 : index
    %c114 = arith.constant 114 : index
    %96 = vector.load %arg1[%c0_90, %c0_91, %c114] : memref<2x4x528xbf16, #tpu.memory_space<vmem>>, vector<1x4x384xbf16>
    %97 = vector.shape_cast %96 : vector<1x4x384xbf16> to vector<4x384xbf16>
    %98 = tpu.concatenate %91, %93, %95, %97 in 0 : vector<4x384xbf16>, vector<4x384xbf16>, vector<4x384xbf16>, vector<4x384xbf16> -> vector<16x384xbf16>
    %c144 = arith.constant 144 : index
    %c0_92 = arith.constant 0 : index
    %99 = vector.load %arg5[%c144, %c0_92] : memref<208x768xbf16, #tpu.memory_space<vmem>>, vector<16x384xbf16>
    tpu.vector_store %arg5[%c144, %c0_92], %98 {strides = array<i32>} : memref<208x768xbf16, #tpu.memory_space<vmem>>, vector<16x384xbf16>,
    %c0_93 = arith.constant 0 : index
    %c0_94 = arith.constant 0 : index
    %c115 = arith.constant 115 : index
    %100 = vector.load %arg1[%c0_93, %c0_94, %c115] : memref<2x4x528xbf16, #tpu.memory_space<vmem>>, vector<1x4x384xbf16>
    %101 = vector.shape_cast %100 : vector<1x4x384xbf16> to vector<4x384xbf16>
    %c0_95 = arith.constant 0 : index
    %c0_96 = arith.constant 0 : index
    %c116 = arith.constant 116 : index
    %102 = vector.load %arg1[%c0_95, %c0_96, %c116] : memref<2x4x528xbf16, #tpu.memory_space<vmem>>, vector<1x4x384xbf16>
    %103 = vector.shape_cast %102 : vector<1x4x384xbf16> to vector<4x384xbf16>
    %c0_97 = arith.constant 0 : index
    %c0_98 = arith.constant 0 : index
    %c132 = arith.constant 132 : index
    %104 = vector.load %arg1[%c0_97, %c0_98, %c132] : memref<2x4x528xbf16, #tpu.memory_space<vmem>>, vector<1x4x384xbf16>
    %105 = vector.shape_cast %104 : vector<1x4x384xbf16> to vector<4x384xbf16>
    %c0_99 = arith.constant 0 : index
    %c0_100 = arith.constant 0 : index
    %c133 = arith.constant 133 : index
    %106 = vector.load %arg1[%c0_99, %c0_100, %c133] : memref<2x4x528xbf16, #tpu.memory_space<vmem>>, vector<1x4x384xbf16>
    %107 = vector.shape_cast %106 : vector<1x4x384xbf16> to vector<4x384xbf16>
    %108 = tpu.concatenate %101, %103, %105, %107 in 0 : vector<4x384xbf16>, vector<4x384xbf16>, vector<4x384xbf16>, vector<4x384xbf16> -> vector<16x384xbf16>
    %c160 = arith.constant 160 : index
    %c0_101 = arith.constant 0 : index
    %109 = vector.load %arg5[%c160, %c0_101] : memref<208x768xbf16, #tpu.memory_space<vmem>>, vector<16x384xbf16>
    tpu.vector_store %arg5[%c160, %c0_101], %108 {strides = array<i32>} : memref<208x768xbf16, #tpu.memory_space<vmem>>, vector<16x384xbf16>,
    %c0_102 = arith.constant 0 : index
    %c0_103 = arith.constant 0 : index
    %c134 = arith.constant 134 : index
    %110 = vector.load %arg1[%c0_102, %c0_103, %c134] : memref<2x4x528xbf16, #tpu.memory_space<vmem>>, vector<1x4x384xbf16>
    %111 = vector.shape_cast %110 : vector<1x4x384xbf16> to vector<4x384xbf16>
    %c0_104 = arith.constant 0 : index
    %c0_105 = arith.constant 0 : index
    %c135 = arith.constant 135 : index
    %112 = vector.load %arg1[%c0_104, %c0_105, %c135] : memref<2x4x528xbf16, #tpu.memory_space<vmem>>, vector<1x4x384xbf16>
    %113 = vector.shape_cast %112 : vector<1x4x384xbf16> to vector<4x384xbf16>
    %c0_106 = arith.constant 0 : index
    %c0_107 = arith.constant 0 : index
    %c136 = arith.constant 136 : index
    %114 = vector.load %arg1[%c0_106, %c0_107, %c136] : memref<2x4x528xbf16, #tpu.memory_space<vmem>>, vector<1x4x384xbf16>
    %115 = vector.shape_cast %114 : vector<1x4x384xbf16> to vector<4x384xbf16>
    %c0_108 = arith.constant 0 : index
    %c0_109 = arith.constant 0 : index
    %c137 = arith.constant 137 : index
    %116 = vector.load %arg1[%c0_108, %c0_109, %c137] : memref<2x4x528xbf16, #tpu.memory_space<vmem>>, vector<1x4x384xbf16>
    %117 = vector.shape_cast %116 : vector<1x4x384xbf16> to vector<4x384xbf16>
    %118 = tpu.concatenate %111, %113, %115, %117 in 0 : vector<4x384xbf16>, vector<4x384xbf16>, vector<4x384xbf16>, vector<4x384xbf16> -> vector<16x384xbf16>
    %c176 = arith.constant 176 : index
    %c0_110 = arith.constant 0 : index
    %119 = vector.load %arg5[%c176, %c0_110] : memref<208x768xbf16, #tpu.memory_space<vmem>>, vector<16x384xbf16>
    tpu.vector_store %arg5[%c176, %c0_110], %118 {strides = array<i32>} : memref<208x768xbf16, #tpu.memory_space<vmem>>, vector<16x384xbf16>,
    %c0_111 = arith.constant 0 : index
    %c0_112 = arith.constant 0 : index
    %c138 = arith.constant 138 : index
    %120 = vector.load %arg1[%c0_111, %c0_112, %c138] : memref<2x4x528xbf16, #tpu.memory_space<vmem>>, vector<1x4x384xbf16>
    %121 = vector.shape_cast %120 : vector<1x4x384xbf16> to vector<4x384xbf16>
    %c0_113 = arith.constant 0 : index
    %c0_114 = arith.constant 0 : index
    %c138_115 = arith.constant 138 : index
    %122 = vector.load %arg1[%c0_113, %c0_114, %c138_115] : memref<2x4x528xbf16, #tpu.memory_space<vmem>>, vector<1x4x384xbf16>
    %123 = vector.shape_cast %122 : vector<1x4x384xbf16> to vector<4x384xbf16>
    %c0_116 = arith.constant 0 : index
    %c0_117 = arith.constant 0 : index
    %c138_118 = arith.constant 138 : index
    %124 = vector.load %arg1[%c0_116, %c0_117, %c138_118] : memref<2x4x528xbf16, #tpu.memory_space<vmem>>, vector<1x4x384xbf16>
    %125 = vector.shape_cast %124 : vector<1x4x384xbf16> to vector<4x384xbf16>
    %c0_119 = arith.constant 0 : index
    %c0_120 = arith.constant 0 : index
    %c138_121 = arith.constant 138 : index
    %126 = vector.load %arg1[%c0_119, %c0_120, %c138_121] : memref<2x4x528xbf16, #tpu.memory_space<vmem>>, vector<1x4x384xbf16>
    %127 = vector.shape_cast %126 : vector<1x4x384xbf16> to vector<4x384xbf16>
    %128 = tpu.concatenate %121, %123, %125, %127 in 0 : vector<4x384xbf16>, vector<4x384xbf16>, vector<4x384xbf16>, vector<4x384xbf16> -> vector<16x384xbf16>
    %c192 = arith.constant 192 : index
    %c0_122 = arith.constant 0 : index
    %129 = vector.load %arg5[%c192, %c0_122] : memref<208x768xbf16, #tpu.memory_space<vmem>>, vector<16x384xbf16>
    tpu.vector_store %arg5[%c192, %c0_122], %128 {strides = array<i32>} : memref<208x768xbf16, #tpu.memory_space<vmem>>, vector<16x384xbf16>,
    %c1_123 = arith.constant 1 : index
    %c0_124 = arith.constant 0 : index
    %c0_125 = arith.constant 0 : index
    %130 = vector.load %arg1[%c1_123, %c0_124, %c0_125] : memref<2x4x528xbf16, #tpu.memory_space<vmem>>, vector<1x4x384xbf16>
    %131 = vector.shape_cast %130 : vector<1x4x384xbf16> to vector<4x384xbf16>
    %c1_126 = arith.constant 1 : index
    %c0_127 = arith.constant 0 : index
    %c1_128 = arith.constant 1 : index
    %132 = vector.load %arg1[%c1_126, %c0_127, %c1_128] : memref<2x4x528xbf16, #tpu.memory_space<vmem>>, vector<1x4x384xbf16>
    %133 = vector.shape_cast %132 : vector<1x4x384xbf16> to vector<4x384xbf16>
    %c1_129 = arith.constant 1 : index
    %c0_130 = arith.constant 0 : index
    %c2_131 = arith.constant 2 : index
    %134 = vector.load %arg1[%c1_129, %c0_130, %c2_131] : memref<2x4x528xbf16, #tpu.memory_space<vmem>>, vector<1x4x384xbf16>
    %135 = vector.shape_cast %134 : vector<1x4x384xbf16> to vector<4x384xbf16>
    %c1_132 = arith.constant 1 : index
    %c0_133 = arith.constant 0 : index
    %c3_134 = arith.constant 3 : index
    %136 = vector.load %arg1[%c1_132, %c0_133, %c3_134] : memref<2x4x528xbf16, #tpu.memory_space<vmem>>, vector<1x4x384xbf16>
    %137 = vector.shape_cast %136 : vector<1x4x384xbf16> to vector<4x384xbf16>
    %138 = tpu.concatenate %131, %133, %135, %137 in 0 : vector<4x384xbf16>, vector<4x384xbf16>, vector<4x384xbf16>, vector<4x384xbf16> -> vector<16x384xbf16>
    %c0_135 = arith.constant 0 : index
    %c384 = arith.constant 384 : index
    %139 = vector.load %arg5[%c0_135, %c384] : memref<208x768xbf16, #tpu.memory_space<vmem>>, vector<16x384xbf16>
    tpu.vector_store %arg5[%c0_135, %c384], %138 {strides = array<i32>} : memref<208x768xbf16, #tpu.memory_space<vmem>>, vector<16x384xbf16>,
    %c1_136 = arith.constant 1 : index
    %c0_137 = arith.constant 0 : index
    %c4_138 = arith.constant 4 : index
    %140 = vector.load %arg1[%c1_136, %c0_137, %c4_138] : memref<2x4x528xbf16, #tpu.memory_space<vmem>>, vector<1x4x384xbf16>
    %141 = vector.shape_cast %140 : vector<1x4x384xbf16> to vector<4x384xbf16>
    %c1_139 = arith.constant 1 : index
    %c0_140 = arith.constant 0 : index
    %c5_141 = arith.constant 5 : index
    %142 = vector.load %arg1[%c1_139, %c0_140, %c5_141] : memref<2x4x528xbf16, #tpu.memory_space<vmem>>, vector<1x4x384xbf16>
    %143 = vector.shape_cast %142 : vector<1x4x384xbf16> to vector<4x384xbf16>
    %c1_142 = arith.constant 1 : index
    %c0_143 = arith.constant 0 : index
    %c6_144 = arith.constant 6 : index
    %144 = vector.load %arg1[%c1_142, %c0_143, %c6_144] : memref<2x4x528xbf16, #tpu.memory_space<vmem>>, vector<1x4x384xbf16>
    %145 = vector.shape_cast %144 : vector<1x4x384xbf16> to vector<4x384xbf16>
    %c1_145 = arith.constant 1 : index
    %c0_146 = arith.constant 0 : index
    %c22_147 = arith.constant 22 : index
    %146 = vector.load %arg1[%c1_145, %c0_146, %c22_147] : memref<2x4x528xbf16, #tpu.memory_space<vmem>>, vector<1x4x384xbf16>
    %147 = vector.shape_cast %146 : vector<1x4x384xbf16> to vector<4x384xbf16>
    %148 = tpu.concatenate %141, %143, %145, %147 in 0 : vector<4x384xbf16>, vector<4x384xbf16>, vector<4x384xbf16>, vector<4x384xbf16> -> vector<16x384xbf16>
    %c16_148 = arith.constant 16 : index
    %c384_149 = arith.constant 384 : index
    %149 = vector.load %arg5[%c16_148, %c384_149] : memref<208x768xbf16, #tpu.memory_space<vmem>>, vector<16x384xbf16>
    tpu.vector_store %arg5[%c16_148, %c384_149], %148 {strides = array<i32>} : memref<208x768xbf16, #tpu.memory_space<vmem>>, vector<16x384xbf16>,
    %c1_150 = arith.constant 1 : index
    %c0_151 = arith.constant 0 : index
    %c23_152 = arith.constant 23 : index
    %150 = vector.load %arg1[%c1_150, %c0_151, %c23_152] : memref<2x4x528xbf16, #tpu.memory_space<vmem>>, vector<1x4x384xbf16>
    %151 = vector.shape_cast %150 : vector<1x4x384xbf16> to vector<4x384xbf16>
    %c1_153 = arith.constant 1 : index
    %c0_154 = arith.constant 0 : index
    %c24_155 = arith.constant 24 : index
    %152 = vector.load %arg1[%c1_153, %c0_154, %c24_155] : memref<2x4x528xbf16, #tpu.memory_space<vmem>>, vector<1x4x384xbf16>
    %153 = vector.shape_cast %152 : vector<1x4x384xbf16> to vector<4x384xbf16>
    %c1_156 = arith.constant 1 : index
    %c0_157 = arith.constant 0 : index
    %c25_158 = arith.constant 25 : index
    %154 = vector.load %arg1[%c1_156, %c0_157, %c25_158] : memref<2x4x528xbf16, #tpu.memory_space<vmem>>, vector<1x4x384xbf16>
    %155 = vector.shape_cast %154 : vector<1x4x384xbf16> to vector<4x384xbf16>
    %c1_159 = arith.constant 1 : index
    %c0_160 = arith.constant 0 : index
    %c26_161 = arith.constant 26 : index
    %156 = vector.load %arg1[%c1_159, %c0_160, %c26_161] : memref<2x4x528xbf16, #tpu.memory_space<vmem>>, vector<1x4x384xbf16>
    %157 = vector.shape_cast %156 : vector<1x4x384xbf16> to vector<4x384xbf16>
    %158 = tpu.concatenate %151, %153, %155, %157 in 0 : vector<4x384xbf16>, vector<4x384xbf16>, vector<4x384xbf16>, vector<4x384xbf16> -> vector<16x384xbf16>
    %c32_162 = arith.constant 32 : index
    %c384_163 = arith.constant 384 : index
    %159 = vector.load %arg5[%c32_162, %c384_163] : memref<208x768xbf16, #tpu.memory_space<vmem>>, vector<16x384xbf16>
    tpu.vector_store %arg5[%c32_162, %c384_163], %158 {strides = array<i32>} : memref<208x768xbf16, #tpu.memory_space<vmem>>, vector<16x384xbf16>,
    %c1_164 = arith.constant 1 : index
    %c0_165 = arith.constant 0 : index
    %c27_166 = arith.constant 27 : index
    %160 = vector.load %arg1[%c1_164, %c0_165, %c27_166] : memref<2x4x528xbf16, #tpu.memory_space<vmem>>, vector<1x4x384xbf16>
    %161 = vector.shape_cast %160 : vector<1x4x384xbf16> to vector<4x384xbf16>
    %c1_167 = arith.constant 1 : index
    %c0_168 = arith.constant 0 : index
    %c28_169 = arith.constant 28 : index
    %162 = vector.load %arg1[%c1_167, %c0_168, %c28_169] : memref<2x4x528xbf16, #tpu.memory_space<vmem>>, vector<1x4x384xbf16>
    %163 = vector.shape_cast %162 : vector<1x4x384xbf16> to vector<4x384xbf16>
    %c1_170 = arith.constant 1 : index
    %c0_171 = arith.constant 0 : index
    %c44_172 = arith.constant 44 : index
    %164 = vector.load %arg1[%c1_170, %c0_171, %c44_172] : memref<2x4x528xbf16, #tpu.memory_space<vmem>>, vector<1x4x384xbf16>
    %165 = vector.shape_cast %164 : vector<1x4x384xbf16> to vector<4x384xbf16>
    %c1_173 = arith.constant 1 : index
    %c0_174 = arith.constant 0 : index
    %c45_175 = arith.constant 45 : index
    %166 = vector.load %arg1[%c1_173, %c0_174, %c45_175] : memref<2x4x528xbf16, #tpu.memory_space<vmem>>, vector<1x4x384xbf16>
    %167 = vector.shape_cast %166 : vector<1x4x384xbf16> to vector<4x384xbf16>
    %168 = tpu.concatenate %161, %163, %165, %167 in 0 : vector<4x384xbf16>, vector<4x384xbf16>, vector<4x384xbf16>, vector<4x384xbf16> -> vector<16x384xbf16>
    %c48_176 = arith.constant 48 : index
    %c384_177 = arith.constant 384 : index
    %169 = vector.load %arg5[%c48_176, %c384_177] : memref<208x768xbf16, #tpu.memory_space<vmem>>, vector<16x384xbf16>
    tpu.vector_store %arg5[%c48_176, %c384_177], %168 {strides = array<i32>} : memref<208x768xbf16, #tpu.memory_space<vmem>>, vector<16x384xbf16>,
    %c1_178 = arith.constant 1 : index
    %c0_179 = arith.constant 0 : index
    %c46_180 = arith.constant 46 : index
    %170 = vector.load %arg1[%c1_178, %c0_179, %c46_180] : memref<2x4x528xbf16, #tpu.memory_space<vmem>>, vector<1x4x384xbf16>
    %171 = vector.shape_cast %170 : vector<1x4x384xbf16> to vector<4x384xbf16>
    %c1_181 = arith.constant 1 : index
    %c0_182 = arith.constant 0 : index
    %c47_183 = arith.constant 47 : index
    %172 = vector.load %arg1[%c1_181, %c0_182, %c47_183] : memref<2x4x528xbf16, #tpu.memory_space<vmem>>, vector<1x4x384xbf16>
    %173 = vector.shape_cast %172 : vector<1x4x384xbf16> to vector<4x384xbf16>
    %c1_184 = arith.constant 1 : index
    %c0_185 = arith.constant 0 : index
    %c48_186 = arith.constant 48 : index
    %174 = vector.load %arg1[%c1_184, %c0_185, %c48_186] : memref<2x4x528xbf16, #tpu.memory_space<vmem>>, vector<1x4x384xbf16>
    %175 = vector.shape_cast %174 : vector<1x4x384xbf16> to vector<4x384xbf16>
    %c1_187 = arith.constant 1 : index
    %c0_188 = arith.constant 0 : index
    %c49_189 = arith.constant 49 : index
    %176 = vector.load %arg1[%c1_187, %c0_188, %c49_189] : memref<2x4x528xbf16, #tpu.memory_space<vmem>>, vector<1x4x384xbf16>
    %177 = vector.shape_cast %176 : vector<1x4x384xbf16> to vector<4x384xbf16>
    %178 = tpu.concatenate %171, %173, %175, %177 in 0 : vector<4x384xbf16>, vector<4x384xbf16>, vector<4x384xbf16>, vector<4x384xbf16> -> vector<16x384xbf16>
    %c64_190 = arith.constant 64 : index
    %c384_191 = arith.constant 384 : index
    %179 = vector.load %arg5[%c64_190, %c384_191] : memref<208x768xbf16, #tpu.memory_space<vmem>>, vector<16x384xbf16>
    tpu.vector_store %arg5[%c64_190, %c384_191], %178 {strides = array<i32>} : memref<208x768xbf16, #tpu.memory_space<vmem>>, vector<16x384xbf16>,
    %c1_192 = arith.constant 1 : index
    %c0_193 = arith.constant 0 : index
    %c50_194 = arith.constant 50 : index
    %180 = vector.load %arg1[%c1_192, %c0_193, %c50_194] : memref<2x4x528xbf16, #tpu.memory_space<vmem>>, vector<1x4x384xbf16>
    %181 = vector.shape_cast %180 : vector<1x4x384xbf16> to vector<4x384xbf16>
    %c1_195 = arith.constant 1 : index
    %c0_196 = arith.constant 0 : index
    %c66_197 = arith.constant 66 : index
    %182 = vector.load %arg1[%c1_195, %c0_196, %c66_197] : memref<2x4x528xbf16, #tpu.memory_space<vmem>>, vector<1x4x384xbf16>
    %183 = vector.shape_cast %182 : vector<1x4x384xbf16> to vector<4x384xbf16>
    %c1_198 = arith.constant 1 : index
    %c0_199 = arith.constant 0 : index
    %c67_200 = arith.constant 67 : index
    %184 = vector.load %arg1[%c1_198, %c0_199, %c67_200] : memref<2x4x528xbf16, #tpu.memory_space<vmem>>, vector<1x4x384xbf16>
    %185 = vector.shape_cast %184 : vector<1x4x384xbf16> to vector<4x384xbf16>
    %c1_201 = arith.constant 1 : index
    %c0_202 = arith.constant 0 : index
    %c68_203 = arith.constant 68 : index
    %186 = vector.load %arg1[%c1_201, %c0_202, %c68_203] : memref<2x4x528xbf16, #tpu.memory_space<vmem>>, vector<1x4x384xbf16>
    %187 = vector.shape_cast %186 : vector<1x4x384xbf16> to vector<4x384xbf16>
    %188 = tpu.concatenate %181, %183, %185, %187 in 0 : vector<4x384xbf16>, vector<4x384xbf16>, vector<4x384xbf16>, vector<4x384xbf16> -> vector<16x384xbf16>
    %c80_204 = arith.constant 80 : index
    %c384_205 = arith.constant 384 : index
    %189 = vector.load %arg5[%c80_204, %c384_205] : memref<208x768xbf16, #tpu.memory_space<vmem>>, vector<16x384xbf16>
    tpu.vector_store %arg5[%c80_204, %c384_205], %188 {strides = array<i32>} : memref<208x768xbf16, #tpu.memory_space<vmem>>, vector<16x384xbf16>,
    %c1_206 = arith.constant 1 : index
    %c0_207 = arith.constant 0 : index
    %c69_208 = arith.constant 69 : index
    %190 = vector.load %arg1[%c1_206, %c0_207, %c69_208] : memref<2x4x528xbf16, #tpu.memory_space<vmem>>, vector<1x4x384xbf16>
    %191 = vector.shape_cast %190 : vector<1x4x384xbf16> to vector<4x384xbf16>
    %c1_209 = arith.constant 1 : index
    %c0_210 = arith.constant 0 : index
    %c70_211 = arith.constant 70 : index
    %192 = vector.load %arg1[%c1_209, %c0_210, %c70_211] : memref<2x4x528xbf16, #tpu.memory_space<vmem>>, vector<1x4x384xbf16>
    %193 = vector.shape_cast %192 : vector<1x4x384xbf16> to vector<4x384xbf16>
    %c1_212 = arith.constant 1 : index
    %c0_213 = arith.constant 0 : index
    %c71_214 = arith.constant 71 : index
    %194 = vector.load %arg1[%c1_212, %c0_213, %c71_214] : memref<2x4x528xbf16, #tpu.memory_space<vmem>>, vector<1x4x384xbf16>
    %195 = vector.shape_cast %194 : vector<1x4x384xbf16> to vector<4x384xbf16>
    %c1_215 = arith.constant 1 : index
    %c0_216 = arith.constant 0 : index
    %c72_217 = arith.constant 72 : index
    %196 = vector.load %arg1[%c1_215, %c0_216, %c72_217] : memref<2x4x528xbf16, #tpu.memory_space<vmem>>, vector<1x4x384xbf16>
    %197 = vector.shape_cast %196 : vector<1x4x384xbf16> to vector<4x384xbf16>
    %198 = tpu.concatenate %191, %193, %195, %197 in 0 : vector<4x384xbf16>, vector<4x384xbf16>, vector<4x384xbf16>, vector<4x384xbf16> -> vector<16x384xbf16>
    %c96_218 = arith.constant 96 : index
    %c384_219 = arith.constant 384 : index
    %199 = vector.load %arg5[%c96_218, %c384_219] : memref<208x768xbf16, #tpu.memory_space<vmem>>, vector<16x384xbf16>
    tpu.vector_store %arg5[%c96_218, %c384_219], %198 {strides = array<i32>} : memref<208x768xbf16, #tpu.memory_space<vmem>>, vector<16x384xbf16>,
    %c1_220 = arith.constant 1 : index
    %c0_221 = arith.constant 0 : index
    %c88_222 = arith.constant 88 : index
    %200 = vector.load %arg1[%c1_220, %c0_221, %c88_222] : memref<2x4x528xbf16, #tpu.memory_space<vmem>>, vector<1x4x384xbf16>
    %201 = vector.shape_cast %200 : vector<1x4x384xbf16> to vector<4x384xbf16>
    %c1_223 = arith.constant 1 : index
    %c0_224 = arith.constant 0 : index
    %c89_225 = arith.constant 89 : index
    %202 = vector.load %arg1[%c1_223, %c0_224, %c89_225] : memref<2x4x528xbf16, #tpu.memory_space<vmem>>, vector<1x4x384xbf16>
    %203 = vector.shape_cast %202 : vector<1x4x384xbf16> to vector<4x384xbf16>
    %c1_226 = arith.constant 1 : index
    %c0_227 = arith.constant 0 : index
    %c90_228 = arith.constant 90 : index
    %204 = vector.load %arg1[%c1_226, %c0_227, %c90_228] : memref<2x4x528xbf16, #tpu.memory_space<vmem>>, vector<1x4x384xbf16>
    %205 = vector.shape_cast %204 : vector<1x4x384xbf16> to vector<4x384xbf16>
    %c1_229 = arith.constant 1 : index
    %c0_230 = arith.constant 0 : index
    %c91_231 = arith.constant 91 : index
    %206 = vector.load %arg1[%c1_229, %c0_230, %c91_231] : memref<2x4x528xbf16, #tpu.memory_space<vmem>>, vector<1x4x384xbf16>
    %207 = vector.shape_cast %206 : vector<1x4x384xbf16> to vector<4x384xbf16>
    %208 = tpu.concatenate %201, %203, %205, %207 in 0 : vector<4x384xbf16>, vector<4x384xbf16>, vector<4x384xbf16>, vector<4x384xbf16> -> vector<16x384xbf16>
    %c112_232 = arith.constant 112 : index
    %c384_233 = arith.constant 384 : index
    %209 = vector.load %arg5[%c112_232, %c384_233] : memref<208x768xbf16, #tpu.memory_space<vmem>>, vector<16x384xbf16>
    tpu.vector_store %arg5[%c112_232, %c384_233], %208 {strides = array<i32>} : memref<208x768xbf16, #tpu.memory_space<vmem>>, vector<16x384xbf16>,
    %c1_234 = arith.constant 1 : index
    %c0_235 = arith.constant 0 : index
    %c92_236 = arith.constant 92 : index
    %210 = vector.load %arg1[%c1_234, %c0_235, %c92_236] : memref<2x4x528xbf16, #tpu.memory_space<vmem>>, vector<1x4x384xbf16>
    %211 = vector.shape_cast %210 : vector<1x4x384xbf16> to vector<4x384xbf16>
    %c1_237 = arith.constant 1 : index
    %c0_238 = arith.constant 0 : index
    %c93_239 = arith.constant 93 : index
    %212 = vector.load %arg1[%c1_237, %c0_238, %c93_239] : memref<2x4x528xbf16, #tpu.memory_space<vmem>>, vector<1x4x384xbf16>
    %213 = vector.shape_cast %212 : vector<1x4x384xbf16> to vector<4x384xbf16>
    %c1_240 = arith.constant 1 : index
    %c0_241 = arith.constant 0 : index
    %c94_242 = arith.constant 94 : index
    %214 = vector.load %arg1[%c1_240, %c0_241, %c94_242] : memref<2x4x528xbf16, #tpu.memory_space<vmem>>, vector<1x4x384xbf16>
    %215 = vector.shape_cast %214 : vector<1x4x384xbf16> to vector<4x384xbf16>
    %c1_243 = arith.constant 1 : index
    %c0_244 = arith.constant 0 : index
    %c110_245 = arith.constant 110 : index
    %216 = vector.load %arg1[%c1_243, %c0_244, %c110_245] : memref<2x4x528xbf16, #tpu.memory_space<vmem>>, vector<1x4x384xbf16>
    %217 = vector.shape_cast %216 : vector<1x4x384xbf16> to vector<4x384xbf16>
    %218 = tpu.concatenate %211, %213, %215, %217 in 0 : vector<4x384xbf16>, vector<4x384xbf16>, vector<4x384xbf16>, vector<4x384xbf16> -> vector<16x384xbf16>
    %c128_246 = arith.constant 128 : index
    %c384_247 = arith.constant 384 : index
    %219 = vector.load %arg5[%c128_246, %c384_247] : memref<208x768xbf16, #tpu.memory_space<vmem>>, vector<16x384xbf16>
    tpu.vector_store %arg5[%c128_246, %c384_247], %218 {strides = array<i32>} : memref<208x768xbf16, #tpu.memory_space<vmem>>, vector<16x384xbf16>,
    %c1_248 = arith.constant 1 : index
    %c0_249 = arith.constant 0 : index
    %c111_250 = arith.constant 111 : index
    %220 = vector.load %arg1[%c1_248, %c0_249, %c111_250] : memref<2x4x528xbf16, #tpu.memory_space<vmem>>, vector<1x4x384xbf16>
    %221 = vector.shape_cast %220 : vector<1x4x384xbf16> to vector<4x384xbf16>
    %c1_251 = arith.constant 1 : index
    %c0_252 = arith.constant 0 : index
    %c112_253 = arith.constant 112 : index
    %222 = vector.load %arg1[%c1_251, %c0_252, %c112_253] : memref<2x4x528xbf16, #tpu.memory_space<vmem>>, vector<1x4x384xbf16>
    %223 = vector.shape_cast %222 : vector<1x4x384xbf16> to vector<4x384xbf16>
    %c1_254 = arith.constant 1 : index
    %c0_255 = arith.constant 0 : index
    %c113_256 = arith.constant 113 : index
    %224 = vector.load %arg1[%c1_254, %c0_255, %c113_256] : memref<2x4x528xbf16, #tpu.memory_space<vmem>>, vector<1x4x384xbf16>
    %225 = vector.shape_cast %224 : vector<1x4x384xbf16> to vector<4x384xbf16>
    %c1_257 = arith.constant 1 : index
    %c0_258 = arith.constant 0 : index
    %c114_259 = arith.constant 114 : index
    %226 = vector.load %arg1[%c1_257, %c0_258, %c114_259] : memref<2x4x528xbf16, #tpu.memory_space<vmem>>, vector<1x4x384xbf16>
    %227 = vector.shape_cast %226 : vector<1x4x384xbf16> to vector<4x384xbf16>
    %228 = tpu.concatenate %221, %223, %225, %227 in 0 : vector<4x384xbf16>, vector<4x384xbf16>, vector<4x384xbf16>, vector<4x384xbf16> -> vector<16x384xbf16>
    %c144_260 = arith.constant 144 : index
    %c384_261 = arith.constant 384 : index
    %229 = vector.load %arg5[%c144_260, %c384_261] : memref<208x768xbf16, #tpu.memory_space<vmem>>, vector<16x384xbf16>
    tpu.vector_store %arg5[%c144_260, %c384_261], %228 {strides = array<i32>} : memref<208x768xbf16, #tpu.memory_space<vmem>>, vector<16x384xbf16>,
    %c1_262 = arith.constant 1 : index
    %c0_263 = arith.constant 0 : index
    %c115_264 = arith.constant 115 : index
    %230 = vector.load %arg1[%c1_262, %c0_263, %c115_264] : memref<2x4x528xbf16, #tpu.memory_space<vmem>>, vector<1x4x384xbf16>
    %231 = vector.shape_cast %230 : vector<1x4x384xbf16> to vector<4x384xbf16>
    %c1_265 = arith.constant 1 : index
    %c0_266 = arith.constant 0 : index
    %c116_267 = arith.constant 116 : index
    %232 = vector.load %arg1[%c1_265, %c0_266, %c116_267] : memref<2x4x528xbf16, #tpu.memory_space<vmem>>, vector<1x4x384xbf16>
    %233 = vector.shape_cast %232 : vector<1x4x384xbf16> to vector<4x384xbf16>
    %c1_268 = arith.constant 1 : index
    %c0_269 = arith.constant 0 : index
    %c132_270 = arith.constant 132 : index
    %234 = vector.load %arg1[%c1_268, %c0_269, %c132_270] : memref<2x4x528xbf16, #tpu.memory_space<vmem>>, vector<1x4x384xbf16>
    %235 = vector.shape_cast %234 : vector<1x4x384xbf16> to vector<4x384xbf16>
    %c1_271 = arith.constant 1 : index
    %c0_272 = arith.constant 0 : index
    %c133_273 = arith.constant 133 : index
    %236 = vector.load %arg1[%c1_271, %c0_272, %c133_273] : memref<2x4x528xbf16, #tpu.memory_space<vmem>>, vector<1x4x384xbf16>
    %237 = vector.shape_cast %236 : vector<1x4x384xbf16> to vector<4x384xbf16>
    %238 = tpu.concatenate %231, %233, %235, %237 in 0 : vector<4x384xbf16>, vector<4x384xbf16>, vector<4x384xbf16>, vector<4x384xbf16> -> vector<16x384xbf16>
    %c160_274 = arith.constant 160 : index
    %c384_275 = arith.constant 384 : index
    %239 = vector.load %arg5[%c160_274, %c384_275] : memref<208x768xbf16, #tpu.memory_space<vmem>>, vector<16x384xbf16>
    tpu.vector_store %arg5[%c160_274, %c384_275], %238 {strides = array<i32>} : memref<208x768xbf16, #tpu.memory_space<vmem>>, vector<16x384xbf16>,
    %c1_276 = arith.constant 1 : index
    %c0_277 = arith.constant 0 : index
    %c134_278 = arith.constant 134 : index
    %240 = vector.load %arg1[%c1_276, %c0_277, %c134_278] : memref<2x4x528xbf16, #tpu.memory_space<vmem>>, vector<1x4x384xbf16>
    %241 = vector.shape_cast %240 : vector<1x4x384xbf16> to vector<4x384xbf16>
    %c1_279 = arith.constant 1 : index
    %c0_280 = arith.constant 0 : index
    %c135_281 = arith.constant 135 : index
    %242 = vector.load %arg1[%c1_279, %c0_280, %c135_281] : memref<2x4x528xbf16, #tpu.memory_space<vmem>>, vector<1x4x384xbf16>
    %243 = vector.shape_cast %242 : vector<1x4x384xbf16> to vector<4x384xbf16>
    %c1_282 = arith.constant 1 : index
    %c0_283 = arith.constant 0 : index
    %c136_284 = arith.constant 136 : index
    %244 = vector.load %arg1[%c1_282, %c0_283, %c136_284] : memref<2x4x528xbf16, #tpu.memory_space<vmem>>, vector<1x4x384xbf16>
    %245 = vector.shape_cast %244 : vector<1x4x384xbf16> to vector<4x384xbf16>
    %c1_285 = arith.constant 1 : index
    %c0_286 = arith.constant 0 : index
    %c137_287 = arith.constant 137 : index
    %246 = vector.load %arg1[%c1_285, %c0_286, %c137_287] : memref<2x4x528xbf16, #tpu.memory_space<vmem>>, vector<1x4x384xbf16>
    %247 = vector.shape_cast %246 : vector<1x4x384xbf16> to vector<4x384xbf16>
    %248 = tpu.concatenate %241, %243, %245, %247 in 0 : vector<4x384xbf16>, vector<4x384xbf16>, vector<4x384xbf16>, vector<4x384xbf16> -> vector<16x384xbf16>
    %c176_288 = arith.constant 176 : index
    %c384_289 = arith.constant 384 : index
    %249 = vector.load %arg5[%c176_288, %c384_289] : memref<208x768xbf16, #tpu.memory_space<vmem>>, vector<16x384xbf16>
    tpu.vector_store %arg5[%c176_288, %c384_289], %248 {strides = array<i32>} : memref<208x768xbf16, #tpu.memory_space<vmem>>, vector<16x384xbf16>,
    %c1_290 = arith.constant 1 : index
    %c0_291 = arith.constant 0 : index
    %c138_292 = arith.constant 138 : index
    %250 = vector.load %arg1[%c1_290, %c0_291, %c138_292] : memref<2x4x528xbf16, #tpu.memory_space<vmem>>, vector<1x4x384xbf16>
    %251 = vector.shape_cast %250 : vector<1x4x384xbf16> to vector<4x384xbf16>
    %c1_293 = arith.constant 1 : index
    %c0_294 = arith.constant 0 : index
    %c138_295 = arith.constant 138 : index
    %252 = vector.load %arg1[%c1_293, %c0_294, %c138_295] : memref<2x4x528xbf16, #tpu.memory_space<vmem>>, vector<1x4x384xbf16>
    %253 = vector.shape_cast %252 : vector<1x4x384xbf16> to vector<4x384xbf16>
    %c1_296 = arith.constant 1 : index
    %c0_297 = arith.constant 0 : index
    %c138_298 = arith.constant 138 : index
    %254 = vector.load %arg1[%c1_296, %c0_297, %c138_298] : memref<2x4x528xbf16, #tpu.memory_space<vmem>>, vector<1x4x384xbf16>
    %255 = vector.shape_cast %254 : vector<1x4x384xbf16> to vector<4x384xbf16>
    %c1_299 = arith.constant 1 : index
    %c0_300 = arith.constant 0 : index
    %c138_301 = arith.constant 138 : index
    %256 = vector.load %arg1[%c1_299, %c0_300, %c138_301] : memref<2x4x528xbf16, #tpu.memory_space<vmem>>, vector<1x4x384xbf16>
    %257 = vector.shape_cast %256 : vector<1x4x384xbf16> to vector<4x384xbf16>
    %258 = tpu.concatenate %251, %253, %255, %257 in 0 : vector<4x384xbf16>, vector<4x384xbf16>, vector<4x384xbf16>, vector<4x384xbf16> -> vector<16x384xbf16>
    %c192_302 = arith.constant 192 : index
    %c384_303 = arith.constant 384 : index
    %259 = vector.load %arg5[%c192_302, %c384_303] : memref<208x768xbf16, #tpu.memory_space<vmem>>, vector<16x384xbf16>
    tpu.vector_store %arg5[%c192_302, %c384_303], %258 {strides = array<i32>} : memref<208x768xbf16, #tpu.memory_space<vmem>>, vector<16x384xbf16>,
    %c0_304 = arith.constant 0 : index
    %c0_305 = arith.constant 0 : index
    %260 = vector.load %arg2[%c0_304, %c0_305] : memref<24x208xbf16, #tpu.memory_space<vmem>>, vector<24x208xbf16>
    %c0_306 = arith.constant 0 : index
    %c0_307 = arith.constant 0 : index
    %261 = vector.load %arg5[%c0_306, %c0_307] : memref<208x768xbf16, #tpu.memory_space<vmem>>, vector<208x768xbf16>
    %cst = arith.constant dense<0.000000e+00> : vector<24x768xf32>
    %262 = tpu.matmul %260, %261, %cst {dimension_numbers = #tpu.dot_dimension_numbers<[1], [0], [0], [1], [0, 0, 1, 1], [], []>} : vector<24x208xbf16>, vector<208x768xbf16>, vector<24x768xf32> -> vector<24x768xf32>
    %c0_308 = arith.constant 0 : index
    %c0_309 = arith.constant 0 : index
    %263 = vector.load %arg3[%c0_308, %c0_309] : memref<24x1xf32, #tpu.memory_space<vmem>>, vector<24x1xf32>
    %264 = vector.broadcast %263 : vector<24x1xf32> to vector<24x768xf32>
    %265 = arith.addf %262, %264 : vector<24x768xf32>
    %266 = vector.extract_strided_slice %265 {offsets = [0, 0], sizes = [24, 384], strides = [1, 1]} : vector<24x768xf32> to vector<24x384xf32>
    %c0_310 = arith.constant 0 : index
    %c0_311 = arith.constant 0 : index
    %c0_312 = arith.constant 0 : index
    %267 = vector.load %arg4[%c0_310, %c0_311, %c0_312] : memref<2x24x384xf32, #tpu.memory_space<vmem>>, vector<1x24x384xf32>
    %268 = vector.shape_cast %267 : vector<1x24x384xf32> to vector<24x384xf32>
    %269 = vector.shape_cast %266 : vector<24x384xf32> to vector<1x24x384xf32>
    tpu.vector_store %arg4[%c0_310, %c0_311, %c0_312], %269 {strides = array<i32>} : memref<2x24x384xf32, #tpu.memory_space<vmem>>, vector<1x24x384xf32>,
    %270 = vector.extract_strided_slice %265 {offsets = [0, 384], sizes = [24, 384], strides = [1, 1]} : vector<24x768xf32> to vector<24x384xf32>
    %c1_313 = arith.constant 1 : index
    %c0_314 = arith.constant 0 : index
    %c0_315 = arith.constant 0 : index
    %271 = vector.load %arg4[%c1_313, %c0_314, %c0_315] : memref<2x24x384xf32, #tpu.memory_space<vmem>>, vector<1x24x384xf32>
    %272 = vector.shape_cast %271 : vector<1x24x384xf32> to vector<24x384xf32>
    %273 = vector.shape_cast %270 : vector<24x384xf32> to vector<1x24x384xf32>
    tpu.vector_store %arg4[%c1_313, %c0_314, %c0_315], %273 {strides = array<i32>} : memref<2x24x384xf32, #tpu.memory_space<vmem>>, vector<1x24x384xf32>,
    return
  }
  func.func @transform_0(%arg0: i32) -> (i32, i32, i32) {
    %c0_i32 = arith.constant 0 : i32
    %c0_i32_0 = arith.constant 0 : i32
    %c0_i32_1 = arith.constant 0 : i32
    return %arg0, %c0_i32, %c0_i32_0 : i32, i32, i32
  }
  func.func @transform_1(%arg0: i32) -> (i32, i32) {
    %c0_i32 = arith.constant 0 : i32
    %c0_i32_0 = arith.constant 0 : i32
    %c0_i32_1 = arith.constant 0 : i32
    return %c0_i32, %c0_i32_0 : i32, i32
  }
  func.func @transform_2(%arg0: i32) -> (i32, i32) {
    %c0_i32 = arith.constant 0 : i32
    %c0_i32_0 = arith.constant 0 : i32
    %c0_i32_1 = arith.constant 0 : i32
    return %c0_i32, %c0_i32_0 : i32, i32
  }
  func.func @transform_3(%arg0: i32) -> (i32, i32, i32) {
    %c0_i32 = arith.constant 0 : i32
    %c0_i32_0 = arith.constant 0 : i32
    %c0_i32_1 = arith.constant 0 : i32
    return %arg0, %c0_i32, %c0_i32_0 : i32, i32, i32
  }
}

</mosaic_0001>

<llo_original>
// kernel: mrconv_forward.1
$region0: #{mrconv_forward.1}
  #allocation0 [shape = 'u32[]', space=smem, size = 0x4, offset = 0x4, fixed_abs, tag = 'smem constant byte address 0x4 - core index']
  #allocation1 [shape = 'u32[144,128]{1,0:T(1,128)}', space=vmem, size = 0x12000, scoped, tag = 'internal scratch']
  #allocation2 [shape = 'bf16[208,768]{1,0:T(16,128)(2,1)}', space=vmem, size = 0x4e000, scoped, tag = 'scratch operand']
  %s0 = inlined_call_operand.vmem [shape: bf16[2,4,528], index: 0, kind: input, shape index: {}]
  %s1 = inlined_call_operand.vmem [shape: bf16[24,208], index: 1, kind: input, shape index: {}]
  %s2 = inlined_call_operand.vmem [shape: f32[24,1], index: 2, kind: input, shape index: {}]
  %s3 = inlined_call_operand.vmem [shape: f32[2,24,384], index: 3, kind: output, shape index: {}]
  %s4 = sld [smem:[#allocation0]]
  $region22: #{mrconv_forward.1} parent=0
    _
  %s6 = ssub.s32 1, %s4
  %s7 = scalar_select 0, %s6, %s4
  // Predicated region
  $region2: #{mrconv_forward.1} parent=0 // pred_check
    _
  $region3: #{mrconv_forward.1} parent=0 // pred_check_branch
    %9 = sbr.rel (0) target = $region5
  $region4: #{mrconv_forward.1} parent=0 // pred_region
    _
  $region5: #{mrconv_forward.1} parent=0 // pred_fallthru
    _
  // Predicated region
  $region6: #{mrconv_forward.1} parent=0 // pred_check
    _
  $region7: #{mrconv_forward.1} parent=0 // pred_check_branch
    %11 = sbr.rel (0) target = $region9
  $region8: #{mrconv_forward.1} parent=0 // pred_region
    _
  $region9: #{mrconv_forward.1} parent=0 // pred_fallthru
    _
  // Predicated region
  $region10: #{mrconv_forward.1} parent=0 // pred_check
    _
  $region11: #{mrconv_forward.1} parent=0 // pred_check_branch
    %13 = sbr.rel (0) target = $region13
  $region12: #{mrconv_forward.1} parent=0 // pred_region
    _
  $region13: #{mrconv_forward.1} parent=0 // pred_fallthru
    _
  %v15 = vld [vmem:[%s0] sm:$0x3f]
  %v16 = vld [vmem:[%s0] sm:$0xff]
  %v18 = vcombine.high %v15, %v15
  %v20 = vunpack.c.l.s4 1983009808
  %v21 = vunpack.c.0.s8 %v20
  %v22 = vlaneseq
  %v23 = vshrl.u32 %v22, 7
  %v24 = vsub.s32 %v21, %v23
  %v25 = vrot.slane %v15, %v24
  %v27 = vunpack.c.l.s4 1983009808
  %v28 = vunpack.c.0.s8 %v27
  %v29 = vlaneseq
  %v30 = vshrl.u32 %v29, 7
  %v31 = vsub.s32 %v28, %v30
  %v32 = vrot.slane %v18, %v31
  %v33 = vcombine.high %v25, %v25
  %v35 = vcombine.low %v16, %v16
  %v37 = vunpack.c.l.s4 1983009808
  %v38 = vunpack.c.0.s8 %v37
  %v39 = vlaneseq
  %v40 = vshrl.u32 %v39, 7
  %v41 = vsub.s32 %v38, %v40
  %v42 = vrot.slane %v35, %v41
  %v44 = vunpack.c.l.s4 1983009808
  %v45 = vunpack.c.0.s8 %v44
  %v46 = vlaneseq
  %v47 = vshrl.u32 %v46, 7
  %v48 = vsub.s32 %v45, %v47
  %v49 = vrot.slane %v16, %v48
  %v50 = vcombine.high %v42, %v42
  %v51 = vcombine.high %v49, %v49
  %52 = vrot.lane.b32.xlu0 %v42, 127
  %v53 = vpop.permute.xlu0 %52
  %54 = vrot.lane.b32.xlu0 %v50, 127
  %v55 = vpop.permute.xlu0 %54
  %56 = vrot.lane.b32.xlu0 %v49, 127
  %v57 = vpop.permute.xlu0 %56
  %58 = vrot.lane.b32.xlu0 %v51, 127
  %v59 = vpop.permute.xlu0 %58
  %vm60 = vcmask 1039360
  %v61 = vsel %vm60, %v53, %v55
  %v62 = vsel %vm60, %v55, %v57
  %v63 = vsel %vm60, %v57, %v59
  %v64 = vcombine.high %v16, %v16
  %v66 = vunpack.c.l.s4 1983009808
  %v67 = vunpack.c.0.s8 %v66
  %v68 = vlaneseq
  %v69 = vshrl.u32 %v68, 7
  %v70 = vsub.s32 %v67, %v69
  %v71 = vrot.slane %v64, %v70
  %v72 = vcombine.low %v49, %v49
  %v73 = vcombine.low %v71, %v71
  %74 = vrot.lane.b32.xlu0 %v72, 126
  %v75 = vpop.permute.xlu0 %74
  %76 = vrot.lane.b32.xlu0 %v49, 126
  %v77 = vpop.permute.xlu0 %76
  %78 = vrot.lane.b32.xlu0 %v73, 126
  %v79 = vpop.permute.xlu0 %78
  %80 = vrot.lane.b32.xlu0 %v71, 126
  %v81 = vpop.permute.xlu0 %80
  %vm82 = vcmask 1031168
  %v83 = vsel %vm82, %v75, %v77
  %v84 = vsel %vm82, %v77, %v79
  %v85 = vsel %vm82, %v79, %v81
  %v86 = vcombine.low %v42, %v42
  %87 = vrot.lane.b32.xlu0 %v86, 125
  %v88 = vpop.permute.xlu0 %87
  %89 = vrot.lane.b32.xlu0 %v42, 125
  %v90 = vpop.permute.xlu0 %89
  %91 = vrot.lane.b32.xlu0 %v72, 125
  %v92 = vpop.permute.xlu0 %91
  %93 = vrot.lane.b32.xlu0 %v49, 125
  %v94 = vpop.permute.xlu0 %93
  %vm95 = vcmask 1022976
  %v96 = vsel %vm95, %v88, %v90
  %v97 = vsel %vm95, %v90, %v92
  %v98 = vsel %vm95, %v92, %v94
  %vm99 = vcmask 1041408
  %v102 = vsel %vm99, %v25, %v61
  %v105 = vsel %vm99, %v33, %v62
  %v108 = vsel %vm99, %v32, %v63
  %vm109 = vcmask 1043456
  %v111 = vsel %vm109, %v102, %v83
  %v113 = vsel %vm109, %v105, %v84
  %v115 = vsel %vm109, %v108, %v85
  %vm116 = vcmask 1045504
  %v118 = vsel %vm116, %v111, %v96
  %v121 = vsel %vm116, %v113, %v97
  %v124 = vsel %vm116, %v115, %v98
  %126 = vst [vmem:[#allocation2] sm:$0xff] %v118
  %127 = vst [vmem:[#allocation2 + $0x8] sm:$0xff] %v121
  %128 = vst [vmem:[#allocation2 + $0x10] sm:$0xff] %v124
  %v129 = vld [vmem:[%s0] sm:$0xff]
  %v131 = vcombine.high %v129, %v129
  %v133 = vunpack.c.l.s4 1983009808
  %v134 = vunpack.c.0.s8 %v133
  %v135 = vlaneseq
  %v136 = vshrl.u32 %v135, 7
  %v137 = vsub.s32 %v134, %v136
  %v138 = vrot.slane %v129, %v137
  %v140 = vunpack.c.l.s4 1983009808
  %v141 = vunpack.c.0.s8 %v140
  %v142 = vlaneseq
  %v143 = vshrl.u32 %v142, 7
  %v144 = vsub.s32 %v141, %v143
  %v145 = vrot.slane %v131, %v144
  %v146 = vcombine.high %v138, %v138
  %v147 = vcombine.high %v145, %v145
  %v148 = vcombine.low %v129, %v129
  %v150 = vunpack.c.l.s4 1983009808
  %v151 = vunpack.c.0.s8 %v150
  %v152 = vlaneseq
  %v153 = vshrl.u32 %v152, 7
  %v154 = vsub.s32 %v151, %v153
  %v155 = vrot.slane %v148, %v154
  %v156 = vcombine.high %v155, %v155
  %157 = vrot.lane.b32.xlu0 %v155, 127
  %v158 = vpop.permute.xlu0 %157
  %159 = vrot.lane.b32.xlu0 %v156, 127
  %v160 = vpop.permute.xlu0 %159
  %161 = vrot.lane.b32.xlu0 %v138, 127
  %v162 = vpop.permute.xlu0 %161
  %163 = vrot.lane.b32.xlu0 %v146, 127
  %v164 = vpop.permute.xlu0 %163
  %v165 = vsel %vm60, %v158, %v160
  %v166 = vsel %vm60, %v160, %v162
  %v167 = vsel %vm60, %v162, %v164
  %v168 = vcombine.low %v138, %v138
  %v169 = vcombine.low %v145, %v145
  %170 = vrot.lane.b32.xlu0 %v168, 126
  %v171 = vpop.permute.xlu0 %170
  %172 = vrot.lane.b32.xlu0 %v138, 126
  %v173 = vpop.permute.xlu0 %172
  %174 = vrot.lane.b32.xlu0 %v169, 126
  %v175 = vpop.permute.xlu0 %174
  %176 = vrot.lane.b32.xlu0 %v145, 126
  %v177 = vpop.permute.xlu0 %176
  %v178 = vsel %vm82, %v171, %v173
  %v179 = vsel %vm82, %v173, %v175
  %v180 = vsel %vm82, %v175, %v177
  %v181 = vcombine.low %v155, %v155
  %182 = vrot.lane.b32.xlu0 %v181, 110
  %v183 = vpop.permute.xlu0 %182
  %184 = vrot.lane.b32.xlu0 %v155, 110
  %v185 = vpop.permute.xlu0 %184
  %186 = vrot.lane.b32.xlu0 %v168, 110
  %v187 = vpop.permute.xlu0 %186
  %188 = vrot.lane.b32.xlu0 %v138, 110
  %v189 = vpop.permute.xlu0 %188
  %vm190 = vcmask 900096
  %v191 = vsel %vm190, %v183, %v185
  %v192 = vsel %vm190, %v185, %v187
  %v193 = vsel %vm190, %v187, %v189
  %v196 = vsel %vm99, %v138, %v165
  %v199 = vsel %vm99, %v146, %v166
  %v202 = vsel %vm99, %v145, %v167
  %v205 = vsel %vm99, %v147, %v164
  %v207 = vsel %vm109, %v196, %v178
  %v209 = vsel %vm109, %v199, %v179
  %v211 = vsel %vm109, %v202, %v180
  %v213 = vsel %vm109, %v205, %v177
  %v215 = vsel %vm116, %v207, %v191
  %v217 = vsel %vm116, %v209, %v192
  %v219 = vsel %vm116, %v211, %v193
  %v221 = vsel %vm116, %v213, %v189
  %226 = vrot.lane.b32.xlu0 %v215, 124
  %v227 = vpop.permute.xlu0 %226
  %228 = vrot.lane.b32.xlu0 %v217, 124
  %v229 = vpop.permute.xlu0 %228
  %230 = vrot.lane.b32.xlu0 %v219, 124
  %v231 = vpop.permute.xlu0 %230
  %232 = vrot.lane.b32.xlu0 %v221, 124
  %v233 = vpop.permute.xlu0 %232
  %vm234 = vcmask 1014784
  %v235 = vsel %vm234, %v227, %v229
  %v236 = vsel %vm234, %v229, %v231
  %v237 = vsel %vm234, %v231, %v233
  %241 = vst [vmem:[#allocation2 + $0x30] sm:$0xff] %v235
  %242 = vst [vmem:[#allocation2 + $0x38] sm:$0xff] %v236
  %243 = vst [vmem:[#allocation2 + $0x40] sm:$0xff] %v237
  %v244 = vld [vmem:[%s0] sm:$0xff]
  %v246 = vcombine.high %v244, %v244
  %v248 = vunpack.c.l.s4 1983009808
  %v249 = vunpack.c.0.s8 %v248
  %v250 = vlaneseq
  %v251 = vshrl.u32 %v250, 7
  %v252 = vsub.s32 %v249, %v251
  %v253 = vrot.slane %v244, %v252
  %v255 = vunpack.c.l.s4 1983009808
  %v256 = vunpack.c.0.s8 %v255
  %v257 = vlaneseq
  %v258 = vshrl.u32 %v257, 7
  %v259 = vsub.s32 %v256, %v258
  %v260 = vrot.slane %v246, %v259
  %v261 = vcombine.high %v253, %v253
  %v262 = vcombine.high %v260, %v260
  %v263 = vcombine.low %v244, %v244
  %v265 = vunpack.c.l.s4 1983009808
  %v266 = vunpack.c.0.s8 %v265
  %v267 = vlaneseq
  %v268 = vshrl.u32 %v267, 7
  %v269 = vsub.s32 %v266, %v268
  %v270 = vrot.slane %v263, %v269
  %v271 = vcombine.high %v270, %v270
  %272 = vrot.lane.b32.xlu0 %v270, 127
  %v273 = vpop.permute.xlu0 %272
  %274 = vrot.lane.b32.xlu0 %v271, 127
  %v275 = vpop.permute.xlu0 %274
  %276 = vrot.lane.b32.xlu0 %v253, 127
  %v277 = vpop.permute.xlu0 %276
  %278 = vrot.lane.b32.xlu0 %v261, 127
  %v279 = vpop.permute.xlu0 %278
  %v280 = vsel %vm60, %v273, %v275
  %v281 = vsel %vm60, %v275, %v277
  %v282 = vsel %vm60, %v277, %v279
  %v283 = vcombine.low %v253, %v253
  %v284 = vcombine.low %v260, %v260
  %285 = vrot.lane.b32.xlu0 %v283, 126
  %v286 = vpop.permute.xlu0 %285
  %287 = vrot.lane.b32.xlu0 %v253, 126
  %v288 = vpop.permute.xlu0 %287
  %289 = vrot.lane.b32.xlu0 %v284, 126
  %v290 = vpop.permute.xlu0 %289
  %291 = vrot.lane.b32.xlu0 %v260, 126
  %v292 = vpop.permute.xlu0 %291
  %v293 = vsel %vm82, %v286, %v288
  %v294 = vsel %vm82, %v288, %v290
  %v295 = vsel %vm82, %v290, %v292
  %v296 = vcombine.low %v270, %v270
  %297 = vrot.lane.b32.xlu0 %v296, 125
  %v298 = vpop.permute.xlu0 %297
  %299 = vrot.lane.b32.xlu0 %v270, 125
  %v300 = vpop.permute.xlu0 %299
  %301 = vrot.lane.b32.xlu0 %v283, 125
  %v302 = vpop.permute.xlu0 %301
  %303 = vrot.lane.b32.xlu0 %v253, 125
  %v304 = vpop.permute.xlu0 %303
  %v305 = vsel %vm95, %v298, %v300
  %v306 = vsel %vm95, %v300, %v302
  %v307 = vsel %vm95, %v302, %v304
  %v310 = vsel %vm99, %v253, %v280
  %v313 = vsel %vm99, %v261, %v281
  %v316 = vsel %vm99, %v260, %v282
  %v319 = vsel %vm99, %v262, %v279
  %v321 = vsel %vm109, %v310, %v293
  %v323 = vsel %vm109, %v313, %v294
  %v325 = vsel %vm109, %v316, %v295
  %v327 = vsel %vm109, %v319, %v292
  %v329 = vsel %vm116, %v321, %v305
  %v331 = vsel %vm116, %v323, %v306
  %v333 = vsel %vm116, %v325, %v307
  %v335 = vsel %vm116, %v327, %v304
  %340 = vrot.lane.b32.xlu0 %v329, 105
  %v341 = vpop.permute.xlu0 %340
  %342 = vrot.lane.b32.xlu0 %v331, 105
  %v343 = vpop.permute.xlu0 %342
  %344 = vrot.lane.b32.xlu0 %v333, 105
  %v345 = vpop.permute.xlu0 %344
  %346 = vrot.lane.b32.xlu0 %v335, 105
  %v347 = vpop.permute.xlu0 %346
  %vm348 = vcmask 859136
  %v349 = vsel %vm348, %v341, %v343
  %v350 = vsel %vm348, %v343, %v345
  %v351 = vsel %vm348, %v345, %v347
  %355 = vst [vmem:[#allocation2 + $0x60] sm:$0xff] %v349
  %356 = vst [vmem:[#allocation2 + $0x68] sm:$0xff] %v350
  %357 = vst [vmem:[#allocation2 + $0x70] sm:$0xff] %v351
  %v358 = vld [vmem:[%s0] sm:$0xff]
  %v360 = vcombine.high %v358, %v358
  %v362 = vunpack.c.l.s4 1983009808
  %v363 = vunpack.c.0.s8 %v362
  %v364 = vlaneseq
  %v365 = vshrl.u32 %v364, 7
  %v366 = vsub.s32 %v363, %v365
  %v367 = vrot.slane %v358, %v366
  %v369 = vunpack.c.l.s4 1983009808
  %v370 = vunpack.c.0.s8 %v369
  %v371 = vlaneseq
  %v372 = vshrl.u32 %v371, 7
  %v373 = vsub.s32 %v370, %v372
  %v374 = vrot.slane %v360, %v373
  %v375 = vcombine.high %v367, %v367
  %v376 = vcombine.high %v374, %v374
  %v377 = vcombine.low %v358, %v358
  %v379 = vunpack.c.l.s4 1983009808
  %v380 = vunpack.c.0.s8 %v379
  %v381 = vlaneseq
  %v382 = vshrl.u32 %v381, 7
  %v383 = vsub.s32 %v380, %v382
  %v384 = vrot.slane %v377, %v383
  %v385 = vcombine.high %v384, %v384
  %386 = vrot.lane.b32.xlu0 %v384, 127
  %v387 = vpop.permute.xlu0 %386
  %388 = vrot.lane.b32.xlu0 %v385, 127
  %v389 = vpop.permute.xlu0 %388
  %390 = vrot.lane.b32.xlu0 %v367, 127
  %v391 = vpop.permute.xlu0 %390
  %392 = vrot.lane.b32.xlu0 %v375, 127
  %v393 = vpop.permute.xlu0 %392
  %v394 = vsel %vm60, %v387, %v389
  %v395 = vsel %vm60, %v389, %v391
  %v396 = vsel %vm60, %v391, %v393
  %v397 = vcombine.low %v367, %v367
  %v398 = vcombine.low %v374, %v374
  %399 = vrot.lane.b32.xlu0 %v397, 111
  %v400 = vpop.permute.xlu0 %399
  %401 = vrot.lane.b32.xlu0 %v367, 111
  %v402 = vpop.permute.xlu0 %401
  %403 = vrot.lane.b32.xlu0 %v398, 111
  %v404 = vpop.permute.xlu0 %403
  %405 = vrot.lane.b32.xlu0 %v374, 111
  %v406 = vpop.permute.xlu0 %405
  %vm407 = vcmask 908288
  %v408 = vsel %vm407, %v400, %v402
  %v409 = vsel %vm407, %v402, %v404
  %v410 = vsel %vm407, %v404, %v406
  %v411 = vcombine.low %v384, %v384
  %412 = vrot.lane.b32.xlu0 %v411, 110
  %v413 = vpop.permute.xlu0 %412
  %414 = vrot.lane.b32.xlu0 %v384, 110
  %v415 = vpop.permute.xlu0 %414
  %416 = vrot.lane.b32.xlu0 %v397, 110
  %v417 = vpop.permute.xlu0 %416
  %418 = vrot.lane.b32.xlu0 %v367, 110
  %v419 = vpop.permute.xlu0 %418
  %v420 = vsel %vm190, %v413, %v415
  %v421 = vsel %vm190, %v415, %v417
  %v422 = vsel %vm190, %v417, %v419
  %v425 = vsel %vm99, %v367, %v394
  %v428 = vsel %vm99, %v375, %v395
  %v431 = vsel %vm99, %v374, %v396
  %v434 = vsel %vm99, %v376, %v393
  %v436 = vsel %vm109, %v425, %v408
  %v438 = vsel %vm109, %v428, %v409
  %v440 = vsel %vm109, %v431, %v410
  %v442 = vsel %vm109, %v434, %v406
  %v444 = vsel %vm116, %v436, %v420
  %v446 = vsel %vm116, %v438, %v421
  %v448 = vsel %vm116, %v440, %v422
  %v450 = vsel %vm116, %v442, %v419
  %455 = vrot.lane.b32.xlu0 %v444, 101
  %v456 = vpop.permute.xlu0 %455
  %457 = vrot.lane.b32.xlu0 %v446, 101
  %v458 = vpop.permute.xlu0 %457
  %459 = vrot.lane.b32.xlu0 %v448, 101
  %v460 = vpop.permute.xlu0 %459
  %461 = vrot.lane.b32.xlu0 %v450, 101
  %v462 = vpop.permute.xlu0 %461
  %vm463 = vcmask 826368
  %v464 = vsel %vm463, %v456, %v458
  %v465 = vsel %vm463, %v458, %v460
  %v466 = vsel %vm463, %v460, %v462
  %470 = vst [vmem:[#allocation2 + $0x90] sm:$0xff] %v464
  %471 = vst [vmem:[#allocation2 + $0x98] sm:$0xff] %v465
  %472 = vst [vmem:[#allocation2 + $0xa0] sm:$0xff] %v466
  %v473 = vld [vmem:[%s0] sm:$0xff]
  %v475 = vcombine.high %v473, %v473
  %v477 = vunpack.c.l.s4 1983009808
  %v478 = vunpack.c.0.s8 %v477
  %v479 = vlaneseq
  %v480 = vshrl.u32 %v479, 7
  %v481 = vsub.s32 %v478, %v480
  %v482 = vrot.slane %v473, %v481
  %v484 = vunpack.c.l.s4 1983009808
  %v485 = vunpack.c.0.s8 %v484
  %v486 = vlaneseq
  %v487 = vshrl.u32 %v486, 7
  %v488 = vsub.s32 %v485, %v487
  %v489 = vrot.slane %v475, %v488
  %v490 = vcombine.high %v482, %v482
  %v491 = vcombine.high %v489, %v489
  %v492 = vcombine.low %v473, %v473
  %v494 = vunpack.c.l.s4 1983009808
  %v495 = vunpack.c.0.s8 %v494
  %v496 = vlaneseq
  %v497 = vshrl.u32 %v496, 7
  %v498 = vsub.s32 %v495, %v497
  %v499 = vrot.slane %v492, %v498
  %v500 = vcombine.high %v499, %v499
  %501 = vrot.lane.b32.xlu0 %v499, 127
  %v502 = vpop.permute.xlu0 %501
  %503 = vrot.lane.b32.xlu0 %v500, 127
  %v504 = vpop.permute.xlu0 %503
  %505 = vrot.lane.b32.xlu0 %v482, 127
  %v506 = vpop.permute.xlu0 %505
  %507 = vrot.lane.b32.xlu0 %v490, 127
  %v508 = vpop.permute.xlu0 %507
  %v509 = vsel %vm60, %v502, %v504
  %v510 = vsel %vm60, %v504, %v506
  %v511 = vsel %vm60, %v506, %v508
  %v512 = vcombine.low %v482, %v482
  %v513 = vcombine.low %v489, %v489
  %514 = vrot.lane.b32.xlu0 %v512, 126
  %v515 = vpop.permute.xlu0 %514
  %516 = vrot.lane.b32.xlu0 %v482, 126
  %v517 = vpop.permute.xlu0 %516
  %518 = vrot.lane.b32.xlu0 %v513, 126
  %v519 = vpop.permute.xlu0 %518
  %520 = vrot.lane.b32.xlu0 %v489, 126
  %v521 = vpop.permute.xlu0 %520
  %v522 = vsel %vm82, %v515, %v517
  %v523 = vsel %vm82, %v517, %v519
  %v524 = vsel %vm82, %v519, %v521
  %v525 = vcombine.low %v499, %v499
  %526 = vrot.lane.b32.xlu0 %v525, 125
  %v527 = vpop.permute.xlu0 %526
  %528 = vrot.lane.b32.xlu0 %v499, 125
  %v529 = vpop.permute.xlu0 %528
  %530 = vrot.lane.b32.xlu0 %v512, 125
  %v531 = vpop.permute.xlu0 %530
  %532 = vrot.lane.b32.xlu0 %v482, 125
  %v533 = vpop.permute.xlu0 %532
  %v534 = vsel %vm95, %v527, %v529
  %v535 = vsel %vm95, %v529, %v531
  %v536 = vsel %vm95, %v531, %v533
  %v539 = vsel %vm99, %v482, %v509
  %v542 = vsel %vm99, %v490, %v510
  %v545 = vsel %vm99, %v489, %v511
  %v548 = vsel %vm99, %v491, %v508
  %v550 = vsel %vm109, %v539, %v522
  %v552 = vsel %vm109, %v542, %v523
  %v554 = vsel %vm109, %v545, %v524
  %v556 = vsel %vm109, %v548, %v521
  %v558 = vsel %vm116, %v550, %v534
  %v560 = vsel %vm116, %v552, %v535
  %v562 = vsel %vm116, %v554, %v536
  %v564 = vsel %vm116, %v556, %v533
  %569 = vrot.lane.b32.xlu0 %v558, 82
  %v570 = vpop.permute.xlu0 %569
  %571 = vrot.lane.b32.xlu0 %v560, 82
  %v572 = vpop.permute.xlu0 %571
  %573 = vrot.lane.b32.xlu0 %v562, 82
  %v574 = vpop.permute.xlu0 %573
  %575 = vrot.lane.b32.xlu0 %v564, 82
  %v576 = vpop.permute.xlu0 %575
  %vm577 = vcmask 670720
  %v578 = vsel %vm577, %v570, %v572
  %v579 = vsel %vm577, %v572, %v574
  %v580 = vsel %vm577, %v574, %v576
  %584 = vst [vmem:[#allocation2 + $0xc0] sm:$0xff] %v578
  %585 = vst [vmem:[#allocation2 + $0xc8] sm:$0xff] %v579
  %586 = vst [vmem:[#allocation2 + $0xd0] sm:$0xff] %v580
  %v587 = vld [vmem:[%s0] sm:$0xff]
  %v589 = vcombine.high %v587, %v587
  %v591 = vunpack.c.l.s4 1983009808
  %v592 = vunpack.c.0.s8 %v591
  %v593 = vlaneseq
  %v594 = vshrl.u32 %v593, 7
  %v595 = vsub.s32 %v592, %v594
  %v596 = vrot.slane %v587, %v595
  %v598 = vunpack.c.l.s4 1983009808
  %v599 = vunpack.c.0.s8 %v598
  %v600 = vlaneseq
  %v601 = vshrl.u32 %v600, 7
  %v602 = vsub.s32 %v599, %v601
  %v603 = vrot.slane %v589, %v602
  %v604 = vcombine.high %v596, %v596
  %v605 = vcombine.high %v603, %v603
  %v606 = vcombine.low %v587, %v587
  %v608 = vunpack.c.l.s4 1983009808
  %v609 = vunpack.c.0.s8 %v608
  %v610 = vlaneseq
  %v611 = vshrl.u32 %v610, 7
  %v612 = vsub.s32 %v609, %v611
  %v613 = vrot.slane %v606, %v612
  %v614 = vcombine.high %v613, %v613
  %615 = vrot.lane.b32.xlu0 %v613, 112
  %v616 = vpop.permute.xlu0 %615
  %617 = vrot.lane.b32.xlu0 %v614, 112
  %v618 = vpop.permute.xlu0 %617
  %619 = vrot.lane.b32.xlu0 %v596, 112
  %v620 = vpop.permute.xlu0 %619
  %621 = vrot.lane.b32.xlu0 %v604, 112
  %v622 = vpop.permute.xlu0 %621
  %vm623 = vcmask 916480
  %v624 = vsel %vm623, %v616, %v618
  %v625 = vsel %vm623, %v618, %v620
  %v626 = vsel %vm623, %v620, %v622
  %v627 = vcombine.low %v596, %v596
  %v628 = vcombine.low %v603, %v603
  %629 = vrot.lane.b32.xlu0 %v627, 111
  %v630 = vpop.permute.xlu0 %629
  %631 = vrot.lane.b32.xlu0 %v596, 111
  %v632 = vpop.permute.xlu0 %631
  %633 = vrot.lane.b32.xlu0 %v628, 111
  %v634 = vpop.permute.xlu0 %633
  %635 = vrot.lane.b32.xlu0 %v603, 111
  %v636 = vpop.permute.xlu0 %635
  %v637 = vsel %vm407, %v630, %v632
  %v638 = vsel %vm407, %v632, %v634
  %v639 = vsel %vm407, %v634, %v636
  %v640 = vcombine.low %v613, %v613
  %641 = vrot.lane.b32.xlu0 %v640, 110
  %v642 = vpop.permute.xlu0 %641
  %643 = vrot.lane.b32.xlu0 %v613, 110
  %v644 = vpop.permute.xlu0 %643
  %645 = vrot.lane.b32.xlu0 %v627, 110
  %v646 = vpop.permute.xlu0 %645
  %647 = vrot.lane.b32.xlu0 %v596, 110
  %v648 = vpop.permute.xlu0 %647
  %v649 = vsel %vm190, %v642, %v644
  %v650 = vsel %vm190, %v644, %v646
  %v651 = vsel %vm190, %v646, %v648
  %v654 = vsel %vm99, %v596, %v624
  %v657 = vsel %vm99, %v604, %v625
  %v660 = vsel %vm99, %v603, %v626
  %v663 = vsel %vm99, %v605, %v622
  %v665 = vsel %vm109, %v654, %v637
  %v667 = vsel %vm109, %v657, %v638
  %v669 = vsel %vm109, %v660, %v639
  %v671 = vsel %vm109, %v663, %v636
  %v673 = vsel %vm116, %v665, %v649
  %v675 = vsel %vm116, %v667, %v650
  %v677 = vsel %vm116, %v669, %v651
  %v679 = vsel %vm116, %v671, %v648
  %684 = vrot.lane.b32.xlu0 %v673, 78
  %v685 = vpop.permute.xlu0 %684
  %686 = vrot.lane.b32.xlu0 %v675, 78
  %v687 = vpop.permute.xlu0 %686
  %688 = vrot.lane.b32.xlu0 %v677, 78
  %v689 = vpop.permute.xlu0 %688
  %690 = vrot.lane.b32.xlu0 %v679, 78
  %v691 = vpop.permute.xlu0 %690
  %vm692 = vcmask 637952
  %v693 = vsel %vm692, %v685, %v687
  %v694 = vsel %vm692, %v687, %v689
  %v695 = vsel %vm692, %v689, %v691
  %699 = vst [vmem:[#allocation2 + $0xf0] sm:$0xff] %v693
  %700 = vst [vmem:[#allocation2 + $0xf8] sm:$0xff] %v694
  %701 = vst [vmem:[#allocation2 + $0x100] sm:$0xff] %v695
  %v702 = vld [vmem:[%s0] sm:$0xff]
  %v704 = vcombine.high %v702, %v702
  %v706 = vunpack.c.l.s4 1983009808
  %v707 = vunpack.c.0.s8 %v706
  %v708 = vlaneseq
  %v709 = vshrl.u32 %v708, 7
  %v710 = vsub.s32 %v707, %v709
  %v711 = vrot.slane %v702, %v710
  %v713 = vunpack.c.l.s4 1983009808
  %v714 = vunpack.c.0.s8 %v713
  %v715 = vlaneseq
  %v716 = vshrl.u32 %v715, 7
  %v717 = vsub.s32 %v714, %v716
  %v718 = vrot.slane %v704, %v717
  %v719 = vcombine.high %v711, %v711
  %v720 = vcombine.high %v718, %v718
  %v721 = vcombine.low %v702, %v702
  %v723 = vunpack.c.l.s4 1983009808
  %v724 = vunpack.c.0.s8 %v723
  %v725 = vlaneseq
  %v726 = vshrl.u32 %v725, 7
  %v727 = vsub.s32 %v724, %v726
  %v728 = vrot.slane %v721, %v727
  %v729 = vcombine.high %v728, %v728
  %730 = vrot.lane.b32.xlu0 %v728, 127
  %v731 = vpop.permute.xlu0 %730
  %732 = vrot.lane.b32.xlu0 %v729, 127
  %v733 = vpop.permute.xlu0 %732
  %734 = vrot.lane.b32.xlu0 %v711, 127
  %v735 = vpop.permute.xlu0 %734
  %736 = vrot.lane.b32.xlu0 %v719, 127
  %v737 = vpop.permute.xlu0 %736
  %v738 = vsel %vm60, %v731, %v733
  %v739 = vsel %vm60, %v733, %v735
  %v740 = vsel %vm60, %v735, %v737
  %v741 = vcombine.low %v711, %v711
  %v742 = vcombine.low %v718, %v718
  %743 = vrot.lane.b32.xlu0 %v741, 126
  %v744 = vpop.permute.xlu0 %743
  %745 = vrot.lane.b32.xlu0 %v711, 126
  %v746 = vpop.permute.xlu0 %745
  %747 = vrot.lane.b32.xlu0 %v742, 126
  %v748 = vpop.permute.xlu0 %747
  %749 = vrot.lane.b32.xlu0 %v718, 126
  %v750 = vpop.permute.xlu0 %749
  %v751 = vsel %vm82, %v744, %v746
  %v752 = vsel %vm82, %v746, %v748
  %v753 = vsel %vm82, %v748, %v750
  %v754 = vcombine.low %v728, %v728
  %755 = vrot.lane.b32.xlu0 %v754, 125
  %v756 = vpop.permute.xlu0 %755
  %757 = vrot.lane.b32.xlu0 %v728, 125
  %v758 = vpop.permute.xlu0 %757
  %759 = vrot.lane.b32.xlu0 %v741, 125
  %v760 = vpop.permute.xlu0 %759
  %761 = vrot.lane.b32.xlu0 %v711, 125
  %v762 = vpop.permute.xlu0 %761
  %v763 = vsel %vm95, %v756, %v758
  %v764 = vsel %vm95, %v758, %v760
  %v765 = vsel %vm95, %v760, %v762
  %v768 = vsel %vm99, %v711, %v738
  %v771 = vsel %vm99, %v719, %v739
  %v774 = vsel %vm99, %v718, %v740
  %v777 = vsel %vm99, %v720, %v737
  %v779 = vsel %vm109, %v768, %v751
  %v781 = vsel %vm109, %v771, %v752
  %v783 = vsel %vm109, %v774, %v753
  %v785 = vsel %vm109, %v777, %v750
  %v787 = vsel %vm116, %v779, %v763
  %v789 = vsel %vm116, %v781, %v764
  %v791 = vsel %vm116, %v783, %v765
  %v793 = vsel %vm116, %v785, %v762
  %798 = vrot.lane.b32.xlu0 %v787, 59
  %v799 = vpop.permute.xlu0 %798
  %800 = vrot.lane.b32.xlu0 %v789, 59
  %v801 = vpop.permute.xlu0 %800
  %802 = vrot.lane.b32.xlu0 %v791, 59
  %v803 = vpop.permute.xlu0 %802
  %804 = vrot.lane.b32.xlu0 %v793, 59
  %v805 = vpop.permute.xlu0 %804
  %vm806 = vcmask 482304
  %v807 = vsel %vm806, %v799, %v801
  %v808 = vsel %vm806, %v801, %v803
  %v809 = vsel %vm806, %v803, %v805
  %813 = vst [vmem:[#allocation2 + $0x120] sm:$0xff] %v807
  %814 = vst [vmem:[#allocation2 + $0x128] sm:$0xff] %v808
  %815 = vst [vmem:[#allocation2 + $0x130] sm:$0xff] %v809
  %v816 = vld [vmem:[%s0] sm:$0xff]
  %v818 = vcombine.high %v816, %v816
  %v820 = vunpack.c.l.s4 1983009808
  %v821 = vunpack.c.0.s8 %v820
  %v822 = vlaneseq
  %v823 = vshrl.u32 %v822, 7
  %v824 = vsub.s32 %v821, %v823
  %v825 = vrot.slane %v816, %v824
  %v827 = vunpack.c.l.s4 1983009808
  %v828 = vunpack.c.0.s8 %v827
  %v829 = vlaneseq
  %v830 = vshrl.u32 %v829, 7
  %v831 = vsub.s32 %v828, %v830
  %v832 = vrot.slane %v818, %v831
  %v833 = vcombine.high %v825, %v825
  %v834 = vcombine.high %v832, %v832
  %v835 = vcombine.low %v816, %v816
  %v837 = vunpack.c.l.s4 1983009808
  %v838 = vunpack.c.0.s8 %v837
  %v839 = vlaneseq
  %v840 = vshrl.u32 %v839, 7
  %v841 = vsub.s32 %v838, %v840
  %v842 = vrot.slane %v835, %v841
  %v843 = vcombine.high %v842, %v842
  %844 = vrot.lane.b32.xlu0 %v842, 127
  %v845 = vpop.permute.xlu0 %844
  %846 = vrot.lane.b32.xlu0 %v843, 127
  %v847 = vpop.permute.xlu0 %846
  %848 = vrot.lane.b32.xlu0 %v825, 127
  %v849 = vpop.permute.xlu0 %848
  %850 = vrot.lane.b32.xlu0 %v833, 127
  %v851 = vpop.permute.xlu0 %850
  %v852 = vsel %vm60, %v845, %v847
  %v853 = vsel %vm60, %v847, %v849
  %v854 = vsel %vm60, %v849, %v851
  %v855 = vcombine.low %v825, %v825
  %v856 = vcombine.low %v832, %v832
  %857 = vrot.lane.b32.xlu0 %v855, 126
  %v858 = vpop.permute.xlu0 %857
  %859 = vrot.lane.b32.xlu0 %v825, 126
  %v860 = vpop.permute.xlu0 %859
  %861 = vrot.lane.b32.xlu0 %v856, 126
  %v862 = vpop.permute.xlu0 %861
  %863 = vrot.lane.b32.xlu0 %v832, 126
  %v864 = vpop.permute.xlu0 %863
  %v865 = vsel %vm82, %v858, %v860
  %v866 = vsel %vm82, %v860, %v862
  %v867 = vsel %vm82, %v862, %v864
  %v868 = vcombine.low %v842, %v842
  %869 = vrot.lane.b32.xlu0 %v868, 125
  %v870 = vpop.permute.xlu0 %869
  %871 = vrot.lane.b32.xlu0 %v842, 125
  %v872 = vpop.permute.xlu0 %871
  %873 = vrot.lane.b32.xlu0 %v855, 125
  %v874 = vpop.permute.xlu0 %873
  %875 = vrot.lane.b32.xlu0 %v825, 125
  %v876 = vpop.permute.xlu0 %875
  %v877 = vsel %vm95, %v870, %v872
  %v878 = vsel %vm95, %v872, %v874
  %v879 = vsel %vm95, %v874, %v876
  %v882 = vsel %vm99, %v825, %v852
  %v885 = vsel %vm99, %v833, %v853
  %v888 = vsel %vm99, %v832, %v854
  %v891 = vsel %vm99, %v834, %v851
  %v893 = vsel %vm109, %v882, %v865
  %v895 = vsel %vm109, %v885, %v866
  %v897 = vsel %vm109, %v888, %v867
  %v899 = vsel %vm109, %v891, %v864
  %v901 = vsel %vm116, %v893, %v877
  %v903 = vsel %vm116, %v895, %v878
  %v905 = vsel %vm116, %v897, %v879
  %v907 = vsel %vm116, %v899, %v876
  %912 = vrot.lane.b32.xlu0 %v901, 40
  %v913 = vpop.permute.xlu0 %912
  %914 = vrot.lane.b32.xlu0 %v903, 40
  %v915 = vpop.permute.xlu0 %914
  %916 = vrot.lane.b32.xlu0 %v905, 40
  %v917 = vpop.permute.xlu0 %916
  %918 = vrot.lane.b32.xlu0 %v907, 40
  %v919 = vpop.permute.xlu0 %918
  %vm920 = vcmask 326656
  %v921 = vsel %vm920, %v913, %v915
  %v922 = vsel %vm920, %v915, %v917
  %v923 = vsel %vm920, %v917, %v919
  %927 = vst [vmem:[#allocation2 + $0x150] sm:$0xff] %v921
  %928 = vst [vmem:[#allocation2 + $0x158] sm:$0xff] %v922
  %929 = vst [vmem:[#allocation2 + $0x160] sm:$0xff] %v923
  %v930 = vld [vmem:[%s0] sm:$0xff]
  %v932 = vcombine.high %v930, %v930
  %v934 = vunpack.c.l.s4 1983009808
  %v935 = vunpack.c.0.s8 %v934
  %v936 = vlaneseq
  %v937 = vshrl.u32 %v936, 7
  %v938 = vsub.s32 %v935, %v937
  %v939 = vrot.slane %v930, %v938
  %v941 = vunpack.c.l.s4 1983009808
  %v942 = vunpack.c.0.s8 %v941
  %v943 = vlaneseq
  %v944 = vshrl.u32 %v943, 7
  %v945 = vsub.s32 %v942, %v944
  %v946 = vrot.slane %v932, %v945
  %v947 = vcombine.high %v939, %v939
  %v948 = vcombine.high %v946, %v946
  %v949 = vcombine.low %v930, %v930
  %v951 = vunpack.c.l.s4 1983009808
  %v952 = vunpack.c.0.s8 %v951
  %v953 = vlaneseq
  %v954 = vshrl.u32 %v953, 7
  %v955 = vsub.s32 %v952, %v954
  %v956 = vrot.slane %v949, %v955
  %v957 = vcombine.high %v956, %v956
  %958 = vrot.lane.b32.xlu0 %v956, 127
  %v959 = vpop.permute.xlu0 %958
  %960 = vrot.lane.b32.xlu0 %v957, 127
  %v961 = vpop.permute.xlu0 %960
  %962 = vrot.lane.b32.xlu0 %v939, 127
  %v963 = vpop.permute.xlu0 %962
  %964 = vrot.lane.b32.xlu0 %v947, 127
  %v965 = vpop.permute.xlu0 %964
  %v966 = vsel %vm60, %v959, %v961
  %v967 = vsel %vm60, %v961, %v963
  %v968 = vsel %vm60, %v963, %v965
  %v969 = vcombine.low %v939, %v939
  %v970 = vcombine.low %v946, %v946
  %971 = vrot.lane.b32.xlu0 %v969, 126
  %v972 = vpop.permute.xlu0 %971
  %973 = vrot.lane.b32.xlu0 %v939, 126
  %v974 = vpop.permute.xlu0 %973
  %975 = vrot.lane.b32.xlu0 %v970, 126
  %v976 = vpop.permute.xlu0 %975
  %977 = vrot.lane.b32.xlu0 %v946, 126
  %v978 = vpop.permute.xlu0 %977
  %v979 = vsel %vm82, %v972, %v974
  %v980 = vsel %vm82, %v974, %v976
  %v981 = vsel %vm82, %v976, %v978
  %v982 = vcombine.low %v956, %v956
  %983 = vrot.lane.b32.xlu0 %v982, 110
  %v984 = vpop.permute.xlu0 %983
  %985 = vrot.lane.b32.xlu0 %v956, 110
  %v986 = vpop.permute.xlu0 %985
  %987 = vrot.lane.b32.xlu0 %v969, 110
  %v988 = vpop.permute.xlu0 %987
  %989 = vrot.lane.b32.xlu0 %v939, 110
  %v990 = vpop.permute.xlu0 %989
  %v991 = vsel %vm190, %v984, %v986
  %v992 = vsel %vm190, %v986, %v988
  %v993 = vsel %vm190, %v988, %v990
  %v996 = vsel %vm99, %v939, %v966
  %v999 = vsel %vm99, %v947, %v967
  %v1002 = vsel %vm99, %v946, %v968
  %v1005 = vsel %vm99, %v948, %v965
  %v1007 = vsel %vm109, %v996, %v979
  %v1009 = vsel %vm109, %v999, %v980
  %v1011 = vsel %vm109, %v1002, %v981
  %v1013 = vsel %vm109, %v1005, %v978
  %v1015 = vsel %vm116, %v1007, %v991
  %v1017 = vsel %vm116, %v1009, %v992
  %v1019 = vsel %vm116, %v1011, %v993
  %v1021 = vsel %vm116, %v1013, %v990
  %1026 = vrot.lane.b32.xlu0 %v1015, 36
  %v1027 = vpop.permute.xlu0 %1026
  %1028 = vrot.lane.b32.xlu0 %v1017, 36
  %v1029 = vpop.permute.xlu0 %1028
  %1030 = vrot.lane.b32.xlu0 %v1019, 36
  %v1031 = vpop.permute.xlu0 %1030
  %1032 = vrot.lane.b32.xlu0 %v1021, 36
  %v1033 = vpop.permute.xlu0 %1032
  %vm1034 = vcmask 293888
  %v1035 = vsel %vm1034, %v1027, %v1029
  %v1036 = vsel %vm1034, %v1029, %v1031
  %v1037 = vsel %vm1034, %v1031, %v1033
  %1041 = vst [vmem:[#allocation2 + $0x180] sm:$0xff] %v1035
  %1042 = vst [vmem:[#allocation2 + $0x188] sm:$0xff] %v1036
  %1043 = vst [vmem:[#allocation2 + $0x190] sm:$0xff] %v1037
  %v1044 = vld [vmem:[%s0] sm:$0xff]
  %v1046 = vcombine.high %v1044, %v1044
  %v1048 = vunpack.c.l.s4 1983009808
  %v1049 = vunpack.c.0.s8 %v1048
  %v1050 = vlaneseq
  %v1051 = vshrl.u32 %v1050, 7
  %v1052 = vsub.s32 %v1049, %v1051
  %v1053 = vrot.slane %v1044, %v1052
  %v1055 = vunpack.c.l.s4 1983009808
  %v1056 = vunpack.c.0.s8 %v1055
  %v1057 = vlaneseq
  %v1058 = vshrl.u32 %v1057, 7
  %v1059 = vsub.s32 %v1056, %v1058
  %v1060 = vrot.slane %v1046, %v1059
  %v1061 = vcombine.high %v1053, %v1053
  %v1062 = vcombine.high %v1060, %v1060
  %v1063 = vcombine.low %v1044, %v1044
  %v1065 = vunpack.c.l.s4 1983009808
  %v1066 = vunpack.c.0.s8 %v1065
  %v1067 = vlaneseq
  %v1068 = vshrl.u32 %v1067, 7
  %v1069 = vsub.s32 %v1066, %v1068
  %v1070 = vrot.slane %v1063, %v1069
  %v1071 = vcombine.high %v1070, %v1070
  %1072 = vrot.lane.b32.xlu0 %v1070, 127
  %v1073 = vpop.permute.xlu0 %1072
  %1074 = vrot.lane.b32.xlu0 %v1071, 127
  %v1075 = vpop.permute.xlu0 %1074
  %1076 = vrot.lane.b32.xlu0 %v1053, 127
  %v1077 = vpop.permute.xlu0 %1076
  %1078 = vrot.lane.b32.xlu0 %v1061, 127
  %v1079 = vpop.permute.xlu0 %1078
  %v1080 = vsel %vm60, %v1073, %v1075
  %v1081 = vsel %vm60, %v1075, %v1077
  %v1082 = vsel %vm60, %v1077, %v1079
  %v1083 = vcombine.low %v1053, %v1053
  %v1084 = vcombine.low %v1060, %v1060
  %1085 = vrot.lane.b32.xlu0 %v1083, 126
  %v1086 = vpop.permute.xlu0 %1085
  %1087 = vrot.lane.b32.xlu0 %v1053, 126
  %v1088 = vpop.permute.xlu0 %1087
  %1089 = vrot.lane.b32.xlu0 %v1084, 126
  %v1090 = vpop.permute.xlu0 %1089
  %1091 = vrot.lane.b32.xlu0 %v1060, 126
  %v1092 = vpop.permute.xlu0 %1091
  %v1093 = vsel %vm82, %v1086, %v1088
  %v1094 = vsel %vm82, %v1088, %v1090
  %v1095 = vsel %vm82, %v1090, %v1092
  %v1096 = vcombine.low %v1070, %v1070
  %1097 = vrot.lane.b32.xlu0 %v1096, 125
  %v1098 = vpop.permute.xlu0 %1097
  %1099 = vrot.lane.b32.xlu0 %v1070, 125
  %v1100 = vpop.permute.xlu0 %1099
  %1101 = vrot.lane.b32.xlu0 %v1083, 125
  %v1102 = vpop.permute.xlu0 %1101
  %1103 = vrot.lane.b32.xlu0 %v1053, 125
  %v1104 = vpop.permute.xlu0 %1103
  %v1105 = vsel %vm95, %v1098, %v1100
  %v1106 = vsel %vm95, %v1100, %v1102
  %v1107 = vsel %vm95, %v1102, %v1104
  %v1110 = vsel %vm99, %v1053, %v1080
  %v1113 = vsel %vm99, %v1061, %v1081
  %v1116 = vsel %vm99, %v1060, %v1082
  %v1119 = vsel %vm99, %v1062, %v1079
  %v1121 = vsel %vm109, %v1110, %v1093
  %v1123 = vsel %vm109, %v1113, %v1094
  %v1125 = vsel %vm109, %v1116, %v1095
  %v1127 = vsel %vm109, %v1119, %v1092
  %v1129 = vsel %vm116, %v1121, %v1105
  %v1131 = vsel %vm116, %v1123, %v1106
  %v1133 = vsel %vm116, %v1125, %v1107
  %v1135 = vsel %vm116, %v1127, %v1104
  %1140 = vrot.lane.b32.xlu0 %v1129, 17
  %v1141 = vpop.permute.xlu0 %1140
  %1142 = vrot.lane.b32.xlu0 %v1131, 17
  %v1143 = vpop.permute.xlu0 %1142
  %1144 = vrot.lane.b32.xlu0 %v1133, 17
  %v1145 = vpop.permute.xlu0 %1144
  %1146 = vrot.lane.b32.xlu0 %v1135, 17
  %v1147 = vpop.permute.xlu0 %1146
  %vm1148 = vcmask 138240
  %v1149 = vsel %vm1148, %v1141, %v1143
  %v1150 = vsel %vm1148, %v1143, %v1145
  %v1151 = vsel %vm1148, %v1145, %v1147
  %1155 = vst [vmem:[#allocation2 + $0x1b0] sm:$0xff] %v1149
  %1156 = vst [vmem:[#allocation2 + $0x1b8] sm:$0xff] %v1150
  %1157 = vst [vmem:[#allocation2 + $0x1c0] sm:$0xff] %v1151
  %v1158 = vld [vmem:[%s0] sm:$0xff]
  %v1159 = vld [vmem:[%s0 + $0x2] sm:$0xff]
  %v1161 = vcombine.high %v1158, %v1158
  %v1163 = vunpack.c.l.s4 1983009808
  %v1164 = vunpack.c.0.s8 %v1163
  %v1165 = vlaneseq
  %v1166 = vshrl.u32 %v1165, 7
  %v1167 = vsub.s32 %v1164, %v1166
  %v1168 = vrot.slane %v1158, %v1167
  %v1170 = vunpack.c.l.s4 1983009808
  %v1171 = vunpack.c.0.s8 %v1170
  %v1172 = vlaneseq
  %v1173 = vshrl.u32 %v1172, 7
  %v1174 = vsub.s32 %v1171, %v1173
  %v1175 = vrot.slane %v1161, %v1174
  %v1176 = vcombine.high %v1168, %v1168
  %v1177 = vcombine.high %v1175, %v1175
  %v1178 = vcombine.low %v1158, %v1158
  %v1180 = vunpack.c.l.s4 1983009808
  %v1181 = vunpack.c.0.s8 %v1180
  %v1182 = vlaneseq
  %v1183 = vshrl.u32 %v1182, 7
  %v1184 = vsub.s32 %v1181, %v1183
  %v1185 = vrot.slane %v1178, %v1184
  %v1186 = vcombine.high %v1185, %v1185
  %1187 = vrot.lane.b32.xlu0 %v1185, 127
  %v1188 = vpop.permute.xlu0 %1187
  %1189 = vrot.lane.b32.xlu0 %v1186, 127
  %v1190 = vpop.permute.xlu0 %1189
  %1191 = vrot.lane.b32.xlu0 %v1168, 127
  %v1192 = vpop.permute.xlu0 %1191
  %1193 = vrot.lane.b32.xlu0 %v1176, 127
  %v1194 = vpop.permute.xlu0 %1193
  %v1195 = vsel %vm60, %v1188, %v1190
  %v1196 = vsel %vm60, %v1190, %v1192
  %v1197 = vsel %vm60, %v1192, %v1194
  %v1199 = vcombine.high %v1159, %v1159
  %v1201 = vunpack.c.l.s4 1983009808
  %v1202 = vunpack.c.0.s8 %v1201
  %v1203 = vlaneseq
  %v1204 = vshrl.u32 %v1203, 7
  %v1205 = vsub.s32 %v1202, %v1204
  %v1206 = vrot.slane %v1159, %v1205
  %v1208 = vunpack.c.l.s4 1983009808
  %v1209 = vunpack.c.0.s8 %v1208
  %v1210 = vlaneseq
  %v1211 = vshrl.u32 %v1210, 7
  %v1212 = vsub.s32 %v1209, %v1211
  %v1213 = vrot.slane %v1199, %v1212
  %v1214 = vcombine.low %v1206, %v1206
  %v1215 = vcombine.low %v1213, %v1213
  %1216 = vrot.lane.b32.xlu0 %v1214, 111
  %v1217 = vpop.permute.xlu0 %1216
  %1218 = vrot.lane.b32.xlu0 %v1206, 111
  %v1219 = vpop.permute.xlu0 %1218
  %1220 = vrot.lane.b32.xlu0 %v1215, 111
  %v1221 = vpop.permute.xlu0 %1220
  %1222 = vrot.lane.b32.xlu0 %v1213, 111
  %v1223 = vpop.permute.xlu0 %1222
  %v1224 = vsel %vm407, %v1217, %v1219
  %v1225 = vsel %vm407, %v1219, %v1221
  %v1226 = vsel %vm407, %v1221, %v1223
  %v1227 = vcombine.low %v1159, %v1159
  %v1229 = vunpack.c.l.s4 1983009808
  %v1230 = vunpack.c.0.s8 %v1229
  %v1231 = vlaneseq
  %v1232 = vshrl.u32 %v1231, 7
  %v1233 = vsub.s32 %v1230, %v1232
  %v1234 = vrot.slane %v1227, %v1233
  %v1235 = vcombine.low %v1234, %v1234
  %1236 = vrot.lane.b32.xlu0 %v1235, 110
  %v1237 = vpop.permute.xlu0 %1236
  %1238 = vrot.lane.b32.xlu0 %v1234, 110
  %v1239 = vpop.permute.xlu0 %1238
  %1240 = vrot.lane.b32.xlu0 %v1214, 110
  %v1241 = vpop.permute.xlu0 %1240
  %1242 = vrot.lane.b32.xlu0 %v1206, 110
  %v1243 = vpop.permute.xlu0 %1242
  %v1244 = vsel %vm190, %v1237, %v1239
  %v1245 = vsel %vm190, %v1239, %v1241
  %v1246 = vsel %vm190, %v1241, %v1243
  %v1249 = vsel %vm99, %v1168, %v1195
  %v1252 = vsel %vm99, %v1176, %v1196
  %v1255 = vsel %vm99, %v1175, %v1197
  %v1258 = vsel %vm99, %v1177, %v1194
  %v1260 = vsel %vm109, %v1249, %v1217
  %v1262 = vsel %vm109, %v1252, %v1224
  %v1264 = vsel %vm109, %v1255, %v1225
  %v1266 = vsel %vm109, %v1258, %v1226
  %v1268 = vsel %vm116, %v1260, %v1237
  %v1270 = vsel %vm116, %v1262, %v1244
  %v1272 = vsel %vm116, %v1264, %v1245
  %v1274 = vsel %vm116, %v1266, %v1246
  %1279 = vrot.lane.b32.xlu0 %v1268, 13
  %v1280 = vpop.permute.xlu0 %1279
  %1281 = vrot.lane.b32.xlu0 %v1270, 13
  %v1282 = vpop.permute.xlu0 %1281
  %1283 = vrot.lane.b32.xlu0 %v1272, 13
  %v1284 = vpop.permute.xlu0 %1283
  %1285 = vrot.lane.b32.xlu0 %v1274, 13
  %v1286 = vpop.permute.xlu0 %1285
  %vm1287 = vcmask 105472
  %v1288 = vsel %vm1287, %v1280, %v1282
  %v1289 = vsel %vm1287, %v1282, %v1284
  %v1290 = vsel %vm1287, %v1284, %v1286
  %1294 = vst [vmem:[#allocation2 + $0x1e0] sm:$0xff] %v1288
  %1295 = vst [vmem:[#allocation2 + $0x1e8] sm:$0xff] %v1289
  %1296 = vst [vmem:[#allocation2 + $0x1f0] sm:$0xff] %v1290
  %v1297 = vld [vmem:[%s0 + $0x2] sm:$0xff]
  %v1299 = vcombine.high %v1297, %v1297
  %v1301 = vunpack.c.l.s4 1983009808
  %v1302 = vunpack.c.0.s8 %v1301
  %v1303 = vlaneseq
  %v1304 = vshrl.u32 %v1303, 7
  %v1305 = vsub.s32 %v1302, %v1304
  %v1306 = vrot.slane %v1297, %v1305
  %v1308 = vunpack.c.l.s4 1983009808
  %v1309 = vunpack.c.0.s8 %v1308
  %v1310 = vlaneseq
  %v1311 = vshrl.u32 %v1310, 7
  %v1312 = vsub.s32 %v1309, %v1311
  %v1313 = vrot.slane %v1299, %v1312
  %v1314 = vcombine.high %v1306, %v1306
  %v1315 = vcombine.high %v1313, %v1313
  %v1316 = vcombine.low %v1297, %v1297
  %v1318 = vunpack.c.l.s4 1983009808
  %v1319 = vunpack.c.0.s8 %v1318
  %v1320 = vlaneseq
  %v1321 = vshrl.u32 %v1320, 7
  %v1322 = vsub.s32 %v1319, %v1321
  %v1323 = vrot.slane %v1316, %v1322
  %v1324 = vcombine.high %v1323, %v1323
  %1325 = vrot.lane.b32.xlu0 %v1323, 127
  %v1326 = vpop.permute.xlu0 %1325
  %1327 = vrot.lane.b32.xlu0 %v1324, 127
  %v1328 = vpop.permute.xlu0 %1327
  %1329 = vrot.lane.b32.xlu0 %v1306, 127
  %v1330 = vpop.permute.xlu0 %1329
  %1331 = vrot.lane.b32.xlu0 %v1314, 127
  %v1332 = vpop.permute.xlu0 %1331
  %v1333 = vsel %vm60, %v1326, %v1328
  %v1334 = vsel %vm60, %v1328, %v1330
  %v1335 = vsel %vm60, %v1330, %v1332
  %v1336 = vcombine.low %v1306, %v1306
  %v1337 = vcombine.low %v1313, %v1313
  %1338 = vrot.lane.b32.xlu0 %v1336, 126
  %v1339 = vpop.permute.xlu0 %1338
  %1340 = vrot.lane.b32.xlu0 %v1306, 126
  %v1341 = vpop.permute.xlu0 %1340
  %1342 = vrot.lane.b32.xlu0 %v1337, 126
  %v1343 = vpop.permute.xlu0 %1342
  %1344 = vrot.lane.b32.xlu0 %v1313, 126
  %v1345 = vpop.permute.xlu0 %1344
  %v1346 = vsel %vm82, %v1339, %v1341
  %v1347 = vsel %vm82, %v1341, %v1343
  %v1348 = vsel %vm82, %v1343, %v1345
  %v1349 = vcombine.low %v1323, %v1323
  %1350 = vrot.lane.b32.xlu0 %v1349, 125
  %v1351 = vpop.permute.xlu0 %1350
  %1352 = vrot.lane.b32.xlu0 %v1323, 125
  %v1353 = vpop.permute.xlu0 %1352
  %1354 = vrot.lane.b32.xlu0 %v1336, 125
  %v1355 = vpop.permute.xlu0 %1354
  %1356 = vrot.lane.b32.xlu0 %v1306, 125
  %v1357 = vpop.permute.xlu0 %1356
  %v1358 = vsel %vm95, %v1351, %v1353
  %v1359 = vsel %vm95, %v1353, %v1355
  %v1360 = vsel %vm95, %v1355, %v1357
  %v1363 = vsel %vm99, %v1306, %v1333
  %v1366 = vsel %vm99, %v1314, %v1334
  %v1369 = vsel %vm99, %v1313, %v1335
  %v1372 = vsel %vm99, %v1315, %v1332
  %v1374 = vsel %vm109, %v1363, %v1346
  %v1376 = vsel %vm109, %v1366, %v1347
  %v1378 = vsel %vm109, %v1369, %v1348
  %v1380 = vsel %vm109, %v1372, %v1345
  %v1382 = vsel %vm116, %v1374, %v1358
  %v1384 = vsel %vm116, %v1376, %v1359
  %v1386 = vsel %vm116, %v1378, %v1360
  %v1388 = vsel %vm116, %v1380, %v1357
  %1393 = vrot.lane.b32.xlu0 %v1382, 122
  %v1394 = vpop.permute.xlu0 %1393
  %1395 = vrot.lane.b32.xlu0 %v1384, 122
  %v1396 = vpop.permute.xlu0 %1395
  %1397 = vrot.lane.b32.xlu0 %v1386, 122
  %v1398 = vpop.permute.xlu0 %1397
  %1399 = vrot.lane.b32.xlu0 %v1388, 122
  %v1400 = vpop.permute.xlu0 %1399
  %vm1401 = vcmask 998400
  %v1402 = vsel %vm1401, %v1394, %v1396
  %v1403 = vsel %vm1401, %v1396, %v1398
  %v1404 = vsel %vm1401, %v1398, %v1400
  %1408 = vst [vmem:[#allocation2 + $0x210] sm:$0xff] %v1402
  %1409 = vst [vmem:[#allocation2 + $0x218] sm:$0xff] %v1403
  %1410 = vst [vmem:[#allocation2 + $0x220] sm:$0xff] %v1404
  %v1411 = vld [vmem:[%s0 + $0x2] sm:$0xff]
  %v1413 = vcombine.high %v1411, %v1411
  %v1415 = vunpack.c.l.s4 1983009808
  %v1416 = vunpack.c.0.s8 %v1415
  %v1417 = vlaneseq
  %v1418 = vshrl.u32 %v1417, 7
  %v1419 = vsub.s32 %v1416, %v1418
  %v1420 = vrot.slane %v1411, %v1419
  %v1422 = vunpack.c.l.s4 1983009808
  %v1423 = vunpack.c.0.s8 %v1422
  %v1424 = vlaneseq
  %v1425 = vshrl.u32 %v1424, 7
  %v1426 = vsub.s32 %v1423, %v1425
  %v1427 = vrot.slane %v1413, %v1426
  %v1428 = vcombine.high %v1420, %v1420
  %v1429 = vcombine.high %v1427, %v1427
  %v1430 = vcombine.low %v1411, %v1411
  %v1432 = vunpack.c.l.s4 1983009808
  %v1433 = vunpack.c.0.s8 %v1432
  %v1434 = vlaneseq
  %v1435 = vshrl.u32 %v1434, 7
  %v1436 = vsub.s32 %v1433, %v1435
  %v1437 = vrot.slane %v1430, %v1436
  %v1438 = vcombine.high %v1437, %v1437
  %v1439 = vcombine.low %v1420, %v1420
  %v1440 = vcombine.low %v1427, %v1427
  %v1441 = vcombine.low %v1437, %v1437
  %v1444 = vsel %vm99, %v1420, %v1437
  %v1447 = vsel %vm99, %v1428, %v1438
  %v1449 = vsel %vm99, %v1427, %v1420
  %v1451 = vsel %vm99, %v1429, %v1428
  %v1453 = vsel %vm109, %v1444, %v1439
  %v1454 = vsel %vm109, %v1447, %v1420
  %v1456 = vsel %vm109, %v1449, %v1440
  %v1457 = vsel %vm109, %v1451, %v1427
  %v1459 = vsel %vm116, %v1453, %v1441
  %v1460 = vsel %vm116, %v1454, %v1437
  %v1461 = vsel %vm116, %v1456, %v1439
  %v1462 = vsel %vm116, %v1457, %v1420
  %1467 = vrot.lane.b32.xlu0 %v1459, 118
  %v1468 = vpop.permute.xlu0 %1467
  %1469 = vrot.lane.b32.xlu0 %v1460, 118
  %v1470 = vpop.permute.xlu0 %1469
  %1471 = vrot.lane.b32.xlu0 %v1461, 118
  %v1472 = vpop.permute.xlu0 %1471
  %1473 = vrot.lane.b32.xlu0 %v1462, 118
  %v1474 = vpop.permute.xlu0 %1473
  %vm1475 = vcmask 965632
  %v1476 = vsel %vm1475, %v1468, %v1470
  %v1477 = vsel %vm1475, %v1470, %v1472
  %v1478 = vsel %vm1475, %v1472, %v1474
  %1482 = vst [vmem:[#allocation2 + $0x240] sm:$0xff] %v1476
  %1483 = vst [vmem:[#allocation2 + $0x248] sm:$0xff] %v1477
  %1484 = vst [vmem:[#allocation2 + $0x250] sm:$0xff] %v1478
  %s1485 = scalar_lea.vmem %s0, 10
  %v1486 = vld [vmem:[%s1485] sm:$0x3f]
  %v1487 = vld [vmem:[%s1485] sm:$0xff]
  %v1489 = vcombine.high %v1486, %v1486
  %v1491 = vunpack.c.l.s4 1983009808
  %v1492 = vunpack.c.0.s8 %v1491
  %v1493 = vlaneseq
  %v1494 = vshrl.u32 %v1493, 7
  %v1495 = vsub.s32 %v1492, %v1494
  %v1496 = vrot.slane %v1486, %v1495
  %v1498 = vunpack.c.l.s4 1983009808
  %v1499 = vunpack.c.0.s8 %v1498
  %v1500 = vlaneseq
  %v1501 = vshrl.u32 %v1500, 7
  %v1502 = vsub.s32 %v1499, %v1501
  %v1503 = vrot.slane %v1489, %v1502
  %v1504 = vcombine.high %v1496, %v1496
  %v1506 = vcombine.low %v1487, %v1487
  %v1508 = vunpack.c.l.s4 1983009808
  %v1509 = vunpack.c.0.s8 %v1508
  %v1510 = vlaneseq
  %v1511 = vshrl.u32 %v1510, 7
  %v1512 = vsub.s32 %v1509, %v1511
  %v1513 = vrot.slane %v1506, %v1512
  %v1515 = vunpack.c.l.s4 1983009808
  %v1516 = vunpack.c.0.s8 %v1515
  %v1517 = vlaneseq
  %v1518 = vshrl.u32 %v1517, 7
  %v1519 = vsub.s32 %v1516, %v1518
  %v1520 = vrot.slane %v1487, %v1519
  %v1521 = vcombine.high %v1513, %v1513
  %v1522 = vcombine.high %v1520, %v1520
  %1523 = vrot.lane.b32.xlu0 %v1513, 127
  %v1524 = vpop.permute.xlu0 %1523
  %1525 = vrot.lane.b32.xlu0 %v1521, 127
  %v1526 = vpop.permute.xlu0 %1525
  %1527 = vrot.lane.b32.xlu0 %v1520, 127
  %v1528 = vpop.permute.xlu0 %1527
  %1529 = vrot.lane.b32.xlu0 %v1522, 127
  %v1530 = vpop.permute.xlu0 %1529
  %v1531 = vsel %vm60, %v1524, %v1526
  %v1532 = vsel %vm60, %v1526, %v1528
  %v1533 = vsel %vm60, %v1528, %v1530
  %v1534 = vcombine.high %v1487, %v1487
  %v1536 = vunpack.c.l.s4 1983009808
  %v1537 = vunpack.c.0.s8 %v1536
  %v1538 = vlaneseq
  %v1539 = vshrl.u32 %v1538, 7
  %v1540 = vsub.s32 %v1537, %v1539
  %v1541 = vrot.slane %v1534, %v1540
  %v1542 = vcombine.low %v1520, %v1520
  %v1543 = vcombine.low %v1541, %v1541
  %1544 = vrot.lane.b32.xlu0 %v1542, 126
  %v1545 = vpop.permute.xlu0 %1544
  %1546 = vrot.lane.b32.xlu0 %v1520, 126
  %v1547 = vpop.permute.xlu0 %1546
  %1548 = vrot.lane.b32.xlu0 %v1543, 126
  %v1549 = vpop.permute.xlu0 %1548
  %1550 = vrot.lane.b32.xlu0 %v1541, 126
  %v1551 = vpop.permute.xlu0 %1550
  %v1552 = vsel %vm82, %v1545, %v1547
  %v1553 = vsel %vm82, %v1547, %v1549
  %v1554 = vsel %vm82, %v1549, %v1551
  %v1555 = vcombine.low %v1513, %v1513
  %1556 = vrot.lane.b32.xlu0 %v1555, 125
  %v1557 = vpop.permute.xlu0 %1556
  %1558 = vrot.lane.b32.xlu0 %v1513, 125
  %v1559 = vpop.permute.xlu0 %1558
  %1560 = vrot.lane.b32.xlu0 %v1542, 125
  %v1561 = vpop.permute.xlu0 %1560
  %1562 = vrot.lane.b32.xlu0 %v1520, 125
  %v1563 = vpop.permute.xlu0 %1562
  %v1564 = vsel %vm95, %v1557, %v1559
  %v1565 = vsel %vm95, %v1559, %v1561
  %v1566 = vsel %vm95, %v1561, %v1563
  %v1569 = vsel %vm99, %v1496, %v1531
  %v1572 = vsel %vm99, %v1504, %v1532
  %v1575 = vsel %vm99, %v1503, %v1533
  %v1577 = vsel %vm109, %v1569, %v1552
  %v1579 = vsel %vm109, %v1572, %v1553
  %v1581 = vsel %vm109, %v1575, %v1554
  %v1583 = vsel %vm116, %v1577, %v1564
  %v1586 = vsel %vm116, %v1579, %v1565
  %v1589 = vsel %vm116, %v1581, %v1566
  %1591 = vst [vmem:[#allocation2 + $0x18] sm:$0xff] %v1583
  %1592 = vst [vmem:[#allocation2 + $0x20] sm:$0xff] %v1586
  %1593 = vst [vmem:[#allocation2 + $0x28] sm:$0xff] %v1589
  %v1594 = vld [vmem:[%s1485] sm:$0xff]
  %v1596 = vcombine.high %v1594, %v1594
  %v1598 = vunpack.c.l.s4 1983009808
  %v1599 = vunpack.c.0.s8 %v1598
  %v1600 = vlaneseq
  %v1601 = vshrl.u32 %v1600, 7
  %v1602 = vsub.s32 %v1599, %v1601
  %v1603 = vrot.slane %v1594, %v1602
  %v1605 = vunpack.c.l.s4 1983009808
  %v1606 = vunpack.c.0.s8 %v1605
  %v1607 = vlaneseq
  %v1608 = vshrl.u32 %v1607, 7
  %v1609 = vsub.s32 %v1606, %v1608
  %v1610 = vrot.slane %v1596, %v1609
  %v1611 = vcombine.high %v1603, %v1603
  %v1612 = vcombine.high %v1610, %v1610
  %v1613 = vcombine.low %v1594, %v1594
  %v1615 = vunpack.c.l.s4 1983009808
  %v1616 = vunpack.c.0.s8 %v1615
  %v1617 = vlaneseq
  %v1618 = vshrl.u32 %v1617, 7
  %v1619 = vsub.s32 %v1616, %v1618
  %v1620 = vrot.slane %v1613, %v1619
  %v1621 = vcombine.high %v1620, %v1620
  %1622 = vrot.lane.b32.xlu0 %v1620, 127
  %v1623 = vpop.permute.xlu0 %1622
  %1624 = vrot.lane.b32.xlu0 %v1621, 127
  %v1625 = vpop.permute.xlu0 %1624
  %1626 = vrot.lane.b32.xlu0 %v1603, 127
  %v1627 = vpop.permute.xlu0 %1626
  %1628 = vrot.lane.b32.xlu0 %v1611, 127
  %v1629 = vpop.permute.xlu0 %1628
  %v1630 = vsel %vm60, %v1623, %v1625
  %v1631 = vsel %vm60, %v1625, %v1627
  %v1632 = vsel %vm60, %v1627, %v1629
  %v1633 = vcombine.low %v1603, %v1603
  %v1634 = vcombine.low %v1610, %v1610
  %1635 = vrot.lane.b32.xlu0 %v1633, 126
  %v1636 = vpop.permute.xlu0 %1635
  %1637 = vrot.lane.b32.xlu0 %v1603, 126
  %v1638 = vpop.permute.xlu0 %1637
  %1639 = vrot.lane.b32.xlu0 %v1634, 126
  %v1640 = vpop.permute.xlu0 %1639
  %1641 = vrot.lane.b32.xlu0 %v1610, 126
  %v1642 = vpop.permute.xlu0 %1641
  %v1643 = vsel %vm82, %v1636, %v1638
  %v1644 = vsel %vm82, %v1638, %v1640
  %v1645 = vsel %vm82, %v1640, %v1642
  %v1646 = vcombine.low %v1620, %v1620
  %1647 = vrot.lane.b32.xlu0 %v1646, 110
  %v1648 = vpop.permute.xlu0 %1647
  %1649 = vrot.lane.b32.xlu0 %v1620, 110
  %v1650 = vpop.permute.xlu0 %1649
  %1651 = vrot.lane.b32.xlu0 %v1633, 110
  %v1652 = vpop.permute.xlu0 %1651
  %1653 = vrot.lane.b32.xlu0 %v1603, 110
  %v1654 = vpop.permute.xlu0 %1653
  %v1655 = vsel %vm190, %v1648, %v1650
  %v1656 = vsel %vm190, %v1650, %v1652
  %v1657 = vsel %vm190, %v1652, %v1654
  %v1660 = vsel %vm99, %v1603, %v1630
  %v1663 = vsel %vm99, %v1611, %v1631
  %v1666 = vsel %vm99, %v1610, %v1632
  %v1669 = vsel %vm99, %v1612, %v1629
  %v1671 = vsel %vm109, %v1660, %v1643
  %v1673 = vsel %vm109, %v1663, %v1644
  %v1675 = vsel %vm109, %v1666, %v1645
  %v1677 = vsel %vm109, %v1669, %v1642
  %v1679 = vsel %vm116, %v1671, %v1655
  %v1681 = vsel %vm116, %v1673, %v1656
  %v1683 = vsel %vm116, %v1675, %v1657
  %v1685 = vsel %vm116, %v1677, %v1654
  %1690 = vrot.lane.b32.xlu0 %v1679, 124
  %v1691 = vpop.permute.xlu0 %1690
  %1692 = vrot.lane.b32.xlu0 %v1681, 124
  %v1693 = vpop.permute.xlu0 %1692
  %1694 = vrot.lane.b32.xlu0 %v1683, 124
  %v1695 = vpop.permute.xlu0 %1694
  %1696 = vrot.lane.b32.xlu0 %v1685, 124
  %v1697 = vpop.permute.xlu0 %1696
  %v1698 = vsel %vm234, %v1691, %v1693
  %v1699 = vsel %vm234, %v1693, %v1695
  %v1700 = vsel %vm234, %v1695, %v1697
  %1704 = vst [vmem:[#allocation2 + $0x48] sm:$0xff] %v1698
  %1705 = vst [vmem:[#allocation2 + $0x50] sm:$0xff] %v1699
  %1706 = vst [vmem:[#allocation2 + $0x58] sm:$0xff] %v1700
  %v1707 = vld [vmem:[%s1485] sm:$0xff]
  %v1709 = vcombine.high %v1707, %v1707
  %v1711 = vunpack.c.l.s4 1983009808
  %v1712 = vunpack.c.0.s8 %v1711
  %v1713 = vlaneseq
  %v1714 = vshrl.u32 %v1713, 7
  %v1715 = vsub.s32 %v1712, %v1714
  %v1716 = vrot.slane %v1707, %v1715
  %v1718 = vunpack.c.l.s4 1983009808
  %v1719 = vunpack.c.0.s8 %v1718
  %v1720 = vlaneseq
  %v1721 = vshrl.u32 %v1720, 7
  %v1722 = vsub.s32 %v1719, %v1721
  %v1723 = vrot.slane %v1709, %v1722
  %v1724 = vcombine.high %v1716, %v1716
  %v1725 = vcombine.high %v1723, %v1723
  %v1726 = vcombine.low %v1707, %v1707
  %v1728 = vunpack.c.l.s4 1983009808
  %v1729 = vunpack.c.0.s8 %v1728
  %v1730 = vlaneseq
  %v1731 = vshrl.u32 %v1730, 7
  %v1732 = vsub.s32 %v1729, %v1731
  %v1733 = vrot.slane %v1726, %v1732
  %v1734 = vcombine.high %v1733, %v1733
  %1735 = vrot.lane.b32.xlu0 %v1733, 127
  %v1736 = vpop.permute.xlu0 %1735
  %1737 = vrot.lane.b32.xlu0 %v1734, 127
  %v1738 = vpop.permute.xlu0 %1737
  %1739 = vrot.lane.b32.xlu0 %v1716, 127
  %v1740 = vpop.permute.xlu0 %1739
  %1741 = vrot.lane.b32.xlu0 %v1724, 127
  %v1742 = vpop.permute.xlu0 %1741
  %v1743 = vsel %vm60, %v1736, %v1738
  %v1744 = vsel %vm60, %v1738, %v1740
  %v1745 = vsel %vm60, %v1740, %v1742
  %v1746 = vcombine.low %v1716, %v1716
  %v1747 = vcombine.low %v1723, %v1723
  %1748 = vrot.lane.b32.xlu0 %v1746, 126
  %v1749 = vpop.permute.xlu0 %1748
  %1750 = vrot.lane.b32.xlu0 %v1716, 126
  %v1751 = vpop.permute.xlu0 %1750
  %1752 = vrot.lane.b32.xlu0 %v1747, 126
  %v1753 = vpop.permute.xlu0 %1752
  %1754 = vrot.lane.b32.xlu0 %v1723, 126
  %v1755 = vpop.permute.xlu0 %1754
  %v1756 = vsel %vm82, %v1749, %v1751
  %v1757 = vsel %vm82, %v1751, %v1753
  %v1758 = vsel %vm82, %v1753, %v1755
  %v1759 = vcombine.low %v1733, %v1733
  %1760 = vrot.lane.b32.xlu0 %v1759, 125
  %v1761 = vpop.permute.xlu0 %1760
  %1762 = vrot.lane.b32.xlu0 %v1733, 125
  %v1763 = vpop.permute.xlu0 %1762
  %1764 = vrot.lane.b32.xlu0 %v1746, 125
  %v1765 = vpop.permute.xlu0 %1764
  %1766 = vrot.lane.b32.xlu0 %v1716, 125
  %v1767 = vpop.permute.xlu0 %1766
  %v1768 = vsel %vm95, %v1761, %v1763
  %v1769 = vsel %vm95, %v1763, %v1765
  %v1770 = vsel %vm95, %v1765, %v1767
  %v1773 = vsel %vm99, %v1716, %v1743
  %v1776 = vsel %vm99, %v1724, %v1744
  %v1779 = vsel %vm99, %v1723, %v1745
  %v1782 = vsel %vm99, %v1725, %v1742
  %v1784 = vsel %vm109, %v1773, %v1756
  %v1786 = vsel %vm109, %v1776, %v1757
  %v1788 = vsel %vm109, %v1779, %v1758
  %v1790 = vsel %vm109, %v1782, %v1755
  %v1792 = vsel %vm116, %v1784, %v1768
  %v1794 = vsel %vm116, %v1786, %v1769
  %v1796 = vsel %vm116, %v1788, %v1770
  %v1798 = vsel %vm116, %v1790, %v1767
  %1803 = vrot.lane.b32.xlu0 %v1792, 105
  %v1804 = vpop.permute.xlu0 %1803
  %1805 = vrot.lane.b32.xlu0 %v1794, 105
  %v1806 = vpop.permute.xlu0 %1805
  %1807 = vrot.lane.b32.xlu0 %v1796, 105
  %v1808 = vpop.permute.xlu0 %1807
  %1809 = vrot.lane.b32.xlu0 %v1798, 105
  %v1810 = vpop.permute.xlu0 %1809
  %v1811 = vsel %vm348, %v1804, %v1806
  %v1812 = vsel %vm348, %v1806, %v1808
  %v1813 = vsel %vm348, %v1808, %v1810
  %1817 = vst [vmem:[#allocation2 + $0x78] sm:$0xff] %v1811
  %1818 = vst [vmem:[#allocation2 + $0x80] sm:$0xff] %v1812
  %1819 = vst [vmem:[#allocation2 + $0x88] sm:$0xff] %v1813
  %v1820 = vld [vmem:[%s1485] sm:$0xff]
  %v1822 = vcombine.high %v1820, %v1820
  %v1824 = vunpack.c.l.s4 1983009808
  %v1825 = vunpack.c.0.s8 %v1824
  %v1826 = vlaneseq
  %v1827 = vshrl.u32 %v1826, 7
  %v1828 = vsub.s32 %v1825, %v1827
  %v1829 = vrot.slane %v1820, %v1828
  %v1831 = vunpack.c.l.s4 1983009808
  %v1832 = vunpack.c.0.s8 %v1831
  %v1833 = vlaneseq
  %v1834 = vshrl.u32 %v1833, 7
  %v1835 = vsub.s32 %v1832, %v1834
  %v1836 = vrot.slane %v1822, %v1835
  %v1837 = vcombine.high %v1829, %v1829
  %v1838 = vcombine.high %v1836, %v1836
  %v1839 = vcombine.low %v1820, %v1820
  %v1841 = vunpack.c.l.s4 1983009808
  %v1842 = vunpack.c.0.s8 %v1841
  %v1843 = vlaneseq
  %v1844 = vshrl.u32 %v1843, 7
  %v1845 = vsub.s32 %v1842, %v1844
  %v1846 = vrot.slane %v1839, %v1845
  %v1847 = vcombine.high %v1846, %v1846
  %1848 = vrot.lane.b32.xlu0 %v1846, 127
  %v1849 = vpop.permute.xlu0 %1848
  %1850 = vrot.lane.b32.xlu0 %v1847, 127
  %v1851 = vpop.permute.xlu0 %1850
  %1852 = vrot.lane.b32.xlu0 %v1829, 127
  %v1853 = vpop.permute.xlu0 %1852
  %1854 = vrot.lane.b32.xlu0 %v1837, 127
  %v1855 = vpop.permute.xlu0 %1854
  %v1856 = vsel %vm60, %v1849, %v1851
  %v1857 = vsel %vm60, %v1851, %v1853
  %v1858 = vsel %vm60, %v1853, %v1855
  %v1859 = vcombine.low %v1829, %v1829
  %v1860 = vcombine.low %v1836, %v1836
  %1861 = vrot.lane.b32.xlu0 %v1859, 111
  %v1862 = vpop.permute.xlu0 %1861
  %1863 = vrot.lane.b32.xlu0 %v1829, 111
  %v1864 = vpop.permute.xlu0 %1863
  %1865 = vrot.lane.b32.xlu0 %v1860, 111
  %v1866 = vpop.permute.xlu0 %1865
  %1867 = vrot.lane.b32.xlu0 %v1836, 111
  %v1868 = vpop.permute.xlu0 %1867
  %v1869 = vsel %vm407, %v1862, %v1864
  %v1870 = vsel %vm407, %v1864, %v1866
  %v1871 = vsel %vm407, %v1866, %v1868
  %v1872 = vcombine.low %v1846, %v1846
  %1873 = vrot.lane.b32.xlu0 %v1872, 110
  %v1874 = vpop.permute.xlu0 %1873
  %1875 = vrot.lane.b32.xlu0 %v1846, 110
  %v1876 = vpop.permute.xlu0 %1875
  %1877 = vrot.lane.b32.xlu0 %v1859, 110
  %v1878 = vpop.permute.xlu0 %1877
  %1879 = vrot.lane.b32.xlu0 %v1829, 110
  %v1880 = vpop.permute.xlu0 %1879
  %v1881 = vsel %vm190, %v1874, %v1876
  %v1882 = vsel %vm190, %v1876, %v1878
  %v1883 = vsel %vm190, %v1878, %v1880
  %v1886 = vsel %vm99, %v1829, %v1856
  %v1889 = vsel %vm99, %v1837, %v1857
  %v1892 = vsel %vm99, %v1836, %v1858
  %v1895 = vsel %vm99, %v1838, %v1855
  %v1897 = vsel %vm109, %v1886, %v1869
  %v1899 = vsel %vm109, %v1889, %v1870
  %v1901 = vsel %vm109, %v1892, %v1871
  %v1903 = vsel %vm109, %v1895, %v1868
  %v1905 = vsel %vm116, %v1897, %v1881
  %v1907 = vsel %vm116, %v1899, %v1882
  %v1909 = vsel %vm116, %v1901, %v1883
  %v1911 = vsel %vm116, %v1903, %v1880
  %1916 = vrot.lane.b32.xlu0 %v1905, 101
  %v1917 = vpop.permute.xlu0 %1916
  %1918 = vrot.lane.b32.xlu0 %v1907, 101
  %v1919 = vpop.permute.xlu0 %1918
  %1920 = vrot.lane.b32.xlu0 %v1909, 101
  %v1921 = vpop.permute.xlu0 %1920
  %1922 = vrot.lane.b32.xlu0 %v1911, 101
  %v1923 = vpop.permute.xlu0 %1922
  %v1924 = vsel %vm463, %v1917, %v1919
  %v1925 = vsel %vm463, %v1919, %v1921
  %v1926 = vsel %vm463, %v1921, %v1923
  %1930 = vst [vmem:[#allocation2 + $0xa8] sm:$0xff] %v1924
  %1931 = vst [vmem:[#allocation2 + $0xb0] sm:$0xff] %v1925
  %1932 = vst [vmem:[#allocation2 + $0xb8] sm:$0xff] %v1926
  %v1933 = vld [vmem:[%s1485] sm:$0xff]
  %v1935 = vcombine.high %v1933, %v1933
  %v1937 = vunpack.c.l.s4 1983009808
  %v1938 = vunpack.c.0.s8 %v1937
  %v1939 = vlaneseq
  %v1940 = vshrl.u32 %v1939, 7
  %v1941 = vsub.s32 %v1938, %v1940
  %v1942 = vrot.slane %v1933, %v1941
  %v1944 = vunpack.c.l.s4 1983009808
  %v1945 = vunpack.c.0.s8 %v1944
  %v1946 = vlaneseq
  %v1947 = vshrl.u32 %v1946, 7
  %v1948 = vsub.s32 %v1945, %v1947
  %v1949 = vrot.slane %v1935, %v1948
  %v1950 = vcombine.high %v1942, %v1942
  %v1951 = vcombine.high %v1949, %v1949
  %v1952 = vcombine.low %v1933, %v1933
  %v1954 = vunpack.c.l.s4 1983009808
  %v1955 = vunpack.c.0.s8 %v1954
  %v1956 = vlaneseq
  %v1957 = vshrl.u32 %v1956, 7
  %v1958 = vsub.s32 %v1955, %v1957
  %v1959 = vrot.slane %v1952, %v1958
  %v1960 = vcombine.high %v1959, %v1959
  %1961 = vrot.lane.b32.xlu0 %v1959, 127
  %v1962 = vpop.permute.xlu0 %1961
  %1963 = vrot.lane.b32.xlu0 %v1960, 127
  %v1964 = vpop.permute.xlu0 %1963
  %1965 = vrot.lane.b32.xlu0 %v1942, 127
  %v1966 = vpop.permute.xlu0 %1965
  %1967 = vrot.lane.b32.xlu0 %v1950, 127
  %v1968 = vpop.permute.xlu0 %1967
  %v1969 = vsel %vm60, %v1962, %v1964
  %v1970 = vsel %vm60, %v1964, %v1966
  %v1971 = vsel %vm60, %v1966, %v1968
  %v1972 = vcombine.low %v1942, %v1942
  %v1973 = vcombine.low %v1949, %v1949
  %1974 = vrot.lane.b32.xlu0 %v1972, 126
  %v1975 = vpop.permute.xlu0 %1974
  %1976 = vrot.lane.b32.xlu0 %v1942, 126
  %v1977 = vpop.permute.xlu0 %1976
  %1978 = vrot.lane.b32.xlu0 %v1973, 126
  %v1979 = vpop.permute.xlu0 %1978
  %1980 = vrot.lane.b32.xlu0 %v1949, 126
  %v1981 = vpop.permute.xlu0 %1980
  %v1982 = vsel %vm82, %v1975, %v1977
  %v1983 = vsel %vm82, %v1977, %v1979
  %v1984 = vsel %vm82, %v1979, %v1981
  %v1985 = vcombine.low %v1959, %v1959
  %1986 = vrot.lane.b32.xlu0 %v1985, 125
  %v1987 = vpop.permute.xlu0 %1986
  %1988 = vrot.lane.b32.xlu0 %v1959, 125
  %v1989 = vpop.permute.xlu0 %1988
  %1990 = vrot.lane.b32.xlu0 %v1972, 125
  %v1991 = vpop.permute.xlu0 %1990
  %1992 = vrot.lane.b32.xlu0 %v1942, 125
  %v1993 = vpop.permute.xlu0 %1992
  %v1994 = vsel %vm95, %v1987, %v1989
  %v1995 = vsel %vm95, %v1989, %v1991
  %v1996 = vsel %vm95, %v1991, %v1993
  %v1999 = vsel %vm99, %v1942, %v1969
  %v2002 = vsel %vm99, %v1950, %v1970
  %v2005 = vsel %vm99, %v1949, %v1971
  %v2008 = vsel %vm99, %v1951, %v1968
  %v2010 = vsel %vm109, %v1999, %v1982
  %v2012 = vsel %vm109, %v2002, %v1983
  %v2014 = vsel %vm109, %v2005, %v1984
  %v2016 = vsel %vm109, %v2008, %v1981
  %v2018 = vsel %vm116, %v2010, %v1994
  %v2020 = vsel %vm116, %v2012, %v1995
  %v2022 = vsel %vm116, %v2014, %v1996
  %v2024 = vsel %vm116, %v2016, %v1993
  %2029 = vrot.lane.b32.xlu0 %v2018, 82
  %v2030 = vpop.permute.xlu0 %2029
  %2031 = vrot.lane.b32.xlu0 %v2020, 82
  %v2032 = vpop.permute.xlu0 %2031
  %2033 = vrot.lane.b32.xlu0 %v2022, 82
  %v2034 = vpop.permute.xlu0 %2033
  %2035 = vrot.lane.b32.xlu0 %v2024, 82
  %v2036 = vpop.permute.xlu0 %2035
  %v2037 = vsel %vm577, %v2030, %v2032
  %v2038 = vsel %vm577, %v2032, %v2034
  %v2039 = vsel %vm577, %v2034, %v2036
  %2043 = vst [vmem:[#allocation2 + $0xd8] sm:$0xff] %v2037
  %2044 = vst [vmem:[#allocation2 + $0xe0] sm:$0xff] %v2038
  %2045 = vst [vmem:[#allocation2 + $0xe8] sm:$0xff] %v2039
  %v2046 = vld [vmem:[%s1485] sm:$0xff]
  %v2048 = vcombine.high %v2046, %v2046
  %v2050 = vunpack.c.l.s4 1983009808
  %v2051 = vunpack.c.0.s8 %v2050
  %v2052 = vlaneseq
  %v2053 = vshrl.u32 %v2052, 7
  %v2054 = vsub.s32 %v2051, %v2053
  %v2055 = vrot.slane %v2046, %v2054
  %v2057 = vunpack.c.l.s4 1983009808
  %v2058 = vunpack.c.0.s8 %v2057
  %v2059 = vlaneseq
  %v2060 = vshrl.u32 %v2059, 7
  %v2061 = vsub.s32 %v2058, %v2060
  %v2062 = vrot.slane %v2048, %v2061
  %v2063 = vcombine.high %v2055, %v2055
  %v2064 = vcombine.high %v2062, %v2062
  %v2065 = vcombine.low %v2046, %v2046
  %v2067 = vunpack.c.l.s4 1983009808
  %v2068 = vunpack.c.0.s8 %v2067
  %v2069 = vlaneseq
  %v2070 = vshrl.u32 %v2069, 7
  %v2071 = vsub.s32 %v2068, %v2070
  %v2072 = vrot.slane %v2065, %v2071
  %v2073 = vcombine.high %v2072, %v2072
  %2074 = vrot.lane.b32.xlu0 %v2072, 112
  %v2075 = vpop.permute.xlu0 %2074
  %2076 = vrot.lane.b32.xlu0 %v2073, 112
  %v2077 = vpop.permute.xlu0 %2076
  %2078 = vrot.lane.b32.xlu0 %v2055, 112
  %v2079 = vpop.permute.xlu0 %2078
  %2080 = vrot.lane.b32.xlu0 %v2063, 112
  %v2081 = vpop.permute.xlu0 %2080
  %v2082 = vsel %vm623, %v2075, %v2077
  %v2083 = vsel %vm623, %v2077, %v2079
  %v2084 = vsel %vm623, %v2079, %v2081
  %v2085 = vcombine.low %v2055, %v2055
  %v2086 = vcombine.low %v2062, %v2062
  %2087 = vrot.lane.b32.xlu0 %v2085, 111
  %v2088 = vpop.permute.xlu0 %2087
  %2089 = vrot.lane.b32.xlu0 %v2055, 111
  %v2090 = vpop.permute.xlu0 %2089
  %2091 = vrot.lane.b32.xlu0 %v2086, 111
  %v2092 = vpop.permute.xlu0 %2091
  %2093 = vrot.lane.b32.xlu0 %v2062, 111
  %v2094 = vpop.permute.xlu0 %2093
  %v2095 = vsel %vm407, %v2088, %v2090
  %v2096 = vsel %vm407, %v2090, %v2092
  %v2097 = vsel %vm407, %v2092, %v2094
  %v2098 = vcombine.low %v2072, %v2072
  %2099 = vrot.lane.b32.xlu0 %v2098, 110
  %v2100 = vpop.permute.xlu0 %2099
  %2101 = vrot.lane.b32.xlu0 %v2072, 110
  %v2102 = vpop.permute.xlu0 %2101
  %2103 = vrot.lane.b32.xlu0 %v2085, 110
  %v2104 = vpop.permute.xlu0 %2103
  %2105 = vrot.lane.b32.xlu0 %v2055, 110
  %v2106 = vpop.permute.xlu0 %2105
  %v2107 = vsel %vm190, %v2100, %v2102
  %v2108 = vsel %vm190, %v2102, %v2104
  %v2109 = vsel %vm190, %v2104, %v2106
  %v2112 = vsel %vm99, %v2055, %v2082
  %v2115 = vsel %vm99, %v2063, %v2083
  %v2118 = vsel %vm99, %v2062, %v2084
  %v2121 = vsel %vm99, %v2064, %v2081
  %v2123 = vsel %vm109, %v2112, %v2095
  %v2125 = vsel %vm109, %v2115, %v2096
  %v2127 = vsel %vm109, %v2118, %v2097
  %v2129 = vsel %vm109, %v2121, %v2094
  %v2131 = vsel %vm116, %v2123, %v2107
  %v2133 = vsel %vm116, %v2125, %v2108
  %v2135 = vsel %vm116, %v2127, %v2109
  %v2137 = vsel %vm116, %v2129, %v2106
  %2142 = vrot.lane.b32.xlu0 %v2131, 78
  %v2143 = vpop.permute.xlu0 %2142
  %2144 = vrot.lane.b32.xlu0 %v2133, 78
  %v2145 = vpop.permute.xlu0 %2144
  %2146 = vrot.lane.b32.xlu0 %v2135, 78
  %v2147 = vpop.permute.xlu0 %2146
  %2148 = vrot.lane.b32.xlu0 %v2137, 78
  %v2149 = vpop.permute.xlu0 %2148
  %v2150 = vsel %vm692, %v2143, %v2145
  %v2151 = vsel %vm692, %v2145, %v2147
  %v2152 = vsel %vm692, %v2147, %v2149
  %2156 = vst [vmem:[#allocation2 + $0x108] sm:$0xff] %v2150
  %2157 = vst [vmem:[#allocation2 + $0x110] sm:$0xff] %v2151
  %2158 = vst [vmem:[#allocation2 + $0x118] sm:$0xff] %v2152
  %v2159 = vld [vmem:[%s1485] sm:$0xff]
  %v2161 = vcombine.high %v2159, %v2159
  %v2163 = vunpack.c.l.s4 1983009808
  %v2164 = vunpack.c.0.s8 %v2163
  %v2165 = vlaneseq
  %v2166 = vshrl.u32 %v2165, 7
  %v2167 = vsub.s32 %v2164, %v2166
  %v2168 = vrot.slane %v2159, %v2167
  %v2170 = vunpack.c.l.s4 1983009808
  %v2171 = vunpack.c.0.s8 %v2170
  %v2172 = vlaneseq
  %v2173 = vshrl.u32 %v2172, 7
  %v2174 = vsub.s32 %v2171, %v2173
  %v2175 = vrot.slane %v2161, %v2174
  %v2176 = vcombine.high %v2168, %v2168
  %v2177 = vcombine.high %v2175, %v2175
  %v2178 = vcombine.low %v2159, %v2159
  %v2180 = vunpack.c.l.s4 1983009808
  %v2181 = vunpack.c.0.s8 %v2180
  %v2182 = vlaneseq
  %v2183 = vshrl.u32 %v2182, 7
  %v2184 = vsub.s32 %v2181, %v2183
  %v2185 = vrot.slane %v2178, %v2184
  %v2186 = vcombine.high %v2185, %v2185
  %2187 = vrot.lane.b32.xlu0 %v2185, 127
  %v2188 = vpop.permute.xlu0 %2187
  %2189 = vrot.lane.b32.xlu0 %v2186, 127
  %v2190 = vpop.permute.xlu0 %2189
  %2191 = vrot.lane.b32.xlu0 %v2168, 127
  %v2192 = vpop.permute.xlu0 %2191
  %2193 = vrot.lane.b32.xlu0 %v2176, 127
  %v2194 = vpop.permute.xlu0 %2193
  %v2195 = vsel %vm60, %v2188, %v2190
  %v2196 = vsel %vm60, %v2190, %v2192
  %v2197 = vsel %vm60, %v2192, %v2194
  %v2198 = vcombine.low %v2168, %v2168
  %v2199 = vcombine.low %v2175, %v2175
  %2200 = vrot.lane.b32.xlu0 %v2198, 126
  %v2201 = vpop.permute.xlu0 %2200
  %2202 = vrot.lane.b32.xlu0 %v2168, 126
  %v2203 = vpop.permute.xlu0 %2202
  %2204 = vrot.lane.b32.xlu0 %v2199, 126
  %v2205 = vpop.permute.xlu0 %2204
  %2206 = vrot.lane.b32.xlu0 %v2175, 126
  %v2207 = vpop.permute.xlu0 %2206
  %v2208 = vsel %vm82, %v2201, %v2203
  %v2209 = vsel %vm82, %v2203, %v2205
  %v2210 = vsel %vm82, %v2205, %v2207
  %v2211 = vcombine.low %v2185, %v2185
  %2212 = vrot.lane.b32.xlu0 %v2211, 125
  %v2213 = vpop.permute.xlu0 %2212
  %2214 = vrot.lane.b32.xlu0 %v2185, 125
  %v2215 = vpop.permute.xlu0 %2214
  %2216 = vrot.lane.b32.xlu0 %v2198, 125
  %v2217 = vpop.permute.xlu0 %2216
  %2218 = vrot.lane.b32.xlu0 %v2168, 125
  %v2219 = vpop.permute.xlu0 %2218
  %v2220 = vsel %vm95, %v2213, %v2215
  %v2221 = vsel %vm95, %v2215, %v2217
  %v2222 = vsel %vm95, %v2217, %v2219
  %v2225 = vsel %vm99, %v2168, %v2195
  %v2228 = vsel %vm99, %v2176, %v2196
  %v2231 = vsel %vm99, %v2175, %v2197
  %v2234 = vsel %vm99, %v2177, %v2194
  %v2236 = vsel %vm109, %v2225, %v2208
  %v2238 = vsel %vm109, %v2228, %v2209
  %v2240 = vsel %vm109, %v2231, %v2210
  %v2242 = vsel %vm109, %v2234, %v2207
  %v2244 = vsel %vm116, %v2236, %v2220
  %v2246 = vsel %vm116, %v2238, %v2221
  %v2248 = vsel %vm116, %v2240, %v2222
  %v2250 = vsel %vm116, %v2242, %v2219
  %2255 = vrot.lane.b32.xlu0 %v2244, 59
  %v2256 = vpop.permute.xlu0 %2255
  %2257 = vrot.lane.b32.xlu0 %v2246, 59
  %v2258 = vpop.permute.xlu0 %2257
  %2259 = vrot.lane.b32.xlu0 %v2248, 59
  %v2260 = vpop.permute.xlu0 %2259
  %2261 = vrot.lane.b32.xlu0 %v2250, 59
  %v2262 = vpop.permute.xlu0 %2261
  %v2263 = vsel %vm806, %v2256, %v2258
  %v2264 = vsel %vm806, %v2258, %v2260
  %v2265 = vsel %vm806, %v2260, %v2262
  %2269 = vst [vmem:[#allocation2 + $0x138] sm:$0xff] %v2263
  %2270 = vst [vmem:[#allocation2 + $0x140] sm:$0xff] %v2264
  %2271 = vst [vmem:[#allocation2 + $0x148] sm:$0xff] %v2265
  %v2272 = vld [vmem:[%s1485] sm:$0xff]
  %v2274 = vcombine.high %v2272, %v2272
  %v2276 = vunpack.c.l.s4 1983009808
  %v2277 = vunpack.c.0.s8 %v2276
  %v2278 = vlaneseq
  %v2279 = vshrl.u32 %v2278, 7
  %v2280 = vsub.s32 %v2277, %v2279
  %v2281 = vrot.slane %v2272, %v2280
  %v2283 = vunpack.c.l.s4 1983009808
  %v2284 = vunpack.c.0.s8 %v2283
  %v2285 = vlaneseq
  %v2286 = vshrl.u32 %v2285, 7
  %v2287 = vsub.s32 %v2284, %v2286
  %v2288 = vrot.slane %v2274, %v2287
  %v2289 = vcombine.high %v2281, %v2281
  %v2290 = vcombine.high %v2288, %v2288
  %v2291 = vcombine.low %v2272, %v2272
  %v2293 = vunpack.c.l.s4 1983009808
  %v2294 = vunpack.c.0.s8 %v2293
  %v2295 = vlaneseq
  %v2296 = vshrl.u32 %v2295, 7
  %v2297 = vsub.s32 %v2294, %v2296
  %v2298 = vrot.slane %v2291, %v2297
  %v2299 = vcombine.high %v2298, %v2298
  %2300 = vrot.lane.b32.xlu0 %v2298, 127
  %v2301 = vpop.permute.xlu0 %2300
  %2302 = vrot.lane.b32.xlu0 %v2299, 127
  %v2303 = vpop.permute.xlu0 %2302
  %2304 = vrot.lane.b32.xlu0 %v2281, 127
  %v2305 = vpop.permute.xlu0 %2304
  %2306 = vrot.lane.b32.xlu0 %v2289, 127
  %v2307 = vpop.permute.xlu0 %2306
  %v2308 = vsel %vm60, %v2301, %v2303
  %v2309 = vsel %vm60, %v2303, %v2305
  %v2310 = vsel %vm60, %v2305, %v2307
  %v2311 = vcombine.low %v2281, %v2281
  %v2312 = vcombine.low %v2288, %v2288
  %2313 = vrot.lane.b32.xlu0 %v2311, 126
  %v2314 = vpop.permute.xlu0 %2313
  %2315 = vrot.lane.b32.xlu0 %v2281, 126
  %v2316 = vpop.permute.xlu0 %2315
  %2317 = vrot.lane.b32.xlu0 %v2312, 126
  %v2318 = vpop.permute.xlu0 %2317
  %2319 = vrot.lane.b32.xlu0 %v2288, 126
  %v2320 = vpop.permute.xlu0 %2319
  %v2321 = vsel %vm82, %v2314, %v2316
  %v2322 = vsel %vm82, %v2316, %v2318
  %v2323 = vsel %vm82, %v2318, %v2320
  %v2324 = vcombine.low %v2298, %v2298
  %2325 = vrot.lane.b32.xlu0 %v2324, 125
  %v2326 = vpop.permute.xlu0 %2325
  %2327 = vrot.lane.b32.xlu0 %v2298, 125
  %v2328 = vpop.permute.xlu0 %2327
  %2329 = vrot.lane.b32.xlu0 %v2311, 125
  %v2330 = vpop.permute.xlu0 %2329
  %2331 = vrot.lane.b32.xlu0 %v2281, 125
  %v2332 = vpop.permute.xlu0 %2331
  %v2333 = vsel %vm95, %v2326, %v2328
  %v2334 = vsel %vm95, %v2328, %v2330
  %v2335 = vsel %vm95, %v2330, %v2332
  %v2338 = vsel %vm99, %v2281, %v2308
  %v2341 = vsel %vm99, %v2289, %v2309
  %v2344 = vsel %vm99, %v2288, %v2310
  %v2347 = vsel %vm99, %v2290, %v2307
  %v2349 = vsel %vm109, %v2338, %v2321
  %v2351 = vsel %vm109, %v2341, %v2322
  %v2353 = vsel %vm109, %v2344, %v2323
  %v2355 = vsel %vm109, %v2347, %v2320
  %v2357 = vsel %vm116, %v2349, %v2333
  %v2359 = vsel %vm116, %v2351, %v2334
  %v2361 = vsel %vm116, %v2353, %v2335
  %v2363 = vsel %vm116, %v2355, %v2332
  %2368 = vrot.lane.b32.xlu0 %v2357, 40
  %v2369 = vpop.permute.xlu0 %2368
  %2370 = vrot.lane.b32.xlu0 %v2359, 40
  %v2371 = vpop.permute.xlu0 %2370
  %2372 = vrot.lane.b32.xlu0 %v2361, 40
  %v2373 = vpop.permute.xlu0 %2372
  %2374 = vrot.lane.b32.xlu0 %v2363, 40
  %v2375 = vpop.permute.xlu0 %2374
  %v2376 = vsel %vm920, %v2369, %v2371
  %v2377 = vsel %vm920, %v2371, %v2373
  %v2378 = vsel %vm920, %v2373, %v2375
  %2382 = vst [vmem:[#allocation2 + $0x168] sm:$0xff] %v2376
  %2383 = vst [vmem:[#allocation2 + $0x170] sm:$0xff] %v2377
  %2384 = vst [vmem:[#allocation2 + $0x178] sm:$0xff] %v2378
  %v2385 = vld [vmem:[%s1485] sm:$0xff]
  %v2387 = vcombine.high %v2385, %v2385
  %v2389 = vunpack.c.l.s4 1983009808
  %v2390 = vunpack.c.0.s8 %v2389
  %v2391 = vlaneseq
  %v2392 = vshrl.u32 %v2391, 7
  %v2393 = vsub.s32 %v2390, %v2392
  %v2394 = vrot.slane %v2385, %v2393
  %v2396 = vunpack.c.l.s4 1983009808
  %v2397 = vunpack.c.0.s8 %v2396
  %v2398 = vlaneseq
  %v2399 = vshrl.u32 %v2398, 7
  %v2400 = vsub.s32 %v2397, %v2399
  %v2401 = vrot.slane %v2387, %v2400
  %v2402 = vcombine.high %v2394, %v2394
  %v2403 = vcombine.high %v2401, %v2401
  %v2404 = vcombine.low %v2385, %v2385
  %v2406 = vunpack.c.l.s4 1983009808
  %v2407 = vunpack.c.0.s8 %v2406
  %v2408 = vlaneseq
  %v2409 = vshrl.u32 %v2408, 7
  %v2410 = vsub.s32 %v2407, %v2409
  %v2411 = vrot.slane %v2404, %v2410
  %v2412 = vcombine.high %v2411, %v2411
  %2413 = vrot.lane.b32.xlu0 %v2411, 127
  %v2414 = vpop.permute.xlu0 %2413
  %2415 = vrot.lane.b32.xlu0 %v2412, 127
  %v2416 = vpop.permute.xlu0 %2415
  %2417 = vrot.lane.b32.xlu0 %v2394, 127
  %v2418 = vpop.permute.xlu0 %2417
  %2419 = vrot.lane.b32.xlu0 %v2402, 127
  %v2420 = vpop.permute.xlu0 %2419
  %v2421 = vsel %vm60, %v2414, %v2416
  %v2422 = vsel %vm60, %v2416, %v2418
  %v2423 = vsel %vm60, %v2418, %v2420
  %v2424 = vcombine.low %v2394, %v2394
  %v2425 = vcombine.low %v2401, %v2401
  %2426 = vrot.lane.b32.xlu0 %v2424, 126
  %v2427 = vpop.permute.xlu0 %2426
  %2428 = vrot.lane.b32.xlu0 %v2394, 126
  %v2429 = vpop.permute.xlu0 %2428
  %2430 = vrot.lane.b32.xlu0 %v2425, 126
  %v2431 = vpop.permute.xlu0 %2430
  %2432 = vrot.lane.b32.xlu0 %v2401, 126
  %v2433 = vpop.permute.xlu0 %2432
  %v2434 = vsel %vm82, %v2427, %v2429
  %v2435 = vsel %vm82, %v2429, %v2431
  %v2436 = vsel %vm82, %v2431, %v2433
  %v2437 = vcombine.low %v2411, %v2411
  %2438 = vrot.lane.b32.xlu0 %v2437, 110
  %v2439 = vpop.permute.xlu0 %2438
  %2440 = vrot.lane.b32.xlu0 %v2411, 110
  %v2441 = vpop.permute.xlu0 %2440
  %2442 = vrot.lane.b32.xlu0 %v2424, 110
  %v2443 = vpop.permute.xlu0 %2442
  %2444 = vrot.lane.b32.xlu0 %v2394, 110
  %v2445 = vpop.permute.xlu0 %2444
  %v2446 = vsel %vm190, %v2439, %v2441
  %v2447 = vsel %vm190, %v2441, %v2443
  %v2448 = vsel %vm190, %v2443, %v2445
  %v2451 = vsel %vm99, %v2394, %v2421
  %v2454 = vsel %vm99, %v2402, %v2422
  %v2457 = vsel %vm99, %v2401, %v2423
  %v2460 = vsel %vm99, %v2403, %v2420
  %v2462 = vsel %vm109, %v2451, %v2434
  %v2464 = vsel %vm109, %v2454, %v2435
  %v2466 = vsel %vm109, %v2457, %v2436
  %v2468 = vsel %vm109, %v2460, %v2433
  %v2470 = vsel %vm116, %v2462, %v2446
  %v2472 = vsel %vm116, %v2464, %v2447
  %v2474 = vsel %vm116, %v2466, %v2448
  %v2476 = vsel %vm116, %v2468, %v2445
  %2481 = vrot.lane.b32.xlu0 %v2470, 36
  %v2482 = vpop.permute.xlu0 %2481
  %2483 = vrot.lane.b32.xlu0 %v2472, 36
  %v2484 = vpop.permute.xlu0 %2483
  %2485 = vrot.lane.b32.xlu0 %v2474, 36
  %v2486 = vpop.permute.xlu0 %2485
  %2487 = vrot.lane.b32.xlu0 %v2476, 36
  %v2488 = vpop.permute.xlu0 %2487
  %v2489 = vsel %vm1034, %v2482, %v2484
  %v2490 = vsel %vm1034, %v2484, %v2486
  %v2491 = vsel %vm1034, %v2486, %v2488
  %2495 = vst [vmem:[#allocation2 + $0x198] sm:$0xff] %v2489
  %2496 = vst [vmem:[#allocation2 + $0x1a0] sm:$0xff] %v2490
  %2497 = vst [vmem:[#allocation2 + $0x1a8] sm:$0xff] %v2491
  %v2498 = vld [vmem:[%s1485] sm:$0xff]
  %v2500 = vcombine.high %v2498, %v2498
  %v2502 = vunpack.c.l.s4 1983009808
  %v2503 = vunpack.c.0.s8 %v2502
  %v2504 = vlaneseq
  %v2505 = vshrl.u32 %v2504, 7
  %v2506 = vsub.s32 %v2503, %v2505
  %v2507 = vrot.slane %v2498, %v2506
  %v2509 = vunpack.c.l.s4 1983009808
  %v2510 = vunpack.c.0.s8 %v2509
  %v2511 = vlaneseq
  %v2512 = vshrl.u32 %v2511, 7
  %v2513 = vsub.s32 %v2510, %v2512
  %v2514 = vrot.slane %v2500, %v2513
  %v2515 = vcombine.high %v2507, %v2507
  %v2516 = vcombine.high %v2514, %v2514
  %v2517 = vcombine.low %v2498, %v2498
  %v2519 = vunpack.c.l.s4 1983009808
  %v2520 = vunpack.c.0.s8 %v2519
  %v2521 = vlaneseq
  %v2522 = vshrl.u32 %v2521, 7
  %v2523 = vsub.s32 %v2520, %v2522
  %v2524 = vrot.slane %v2517, %v2523
  %v2525 = vcombine.high %v2524, %v2524
  %2526 = vrot.lane.b32.xlu0 %v2524, 127
  %v2527 = vpop.permute.xlu0 %2526
  %2528 = vrot.lane.b32.xlu0 %v2525, 127
  %v2529 = vpop.permute.xlu0 %2528
  %2530 = vrot.lane.b32.xlu0 %v2507, 127
  %v2531 = vpop.permute.xlu0 %2530
  %2532 = vrot.lane.b32.xlu0 %v2515, 127
  %v2533 = vpop.permute.xlu0 %2532
  %v2534 = vsel %vm60, %v2527, %v2529
  %v2535 = vsel %vm60, %v2529, %v2531
  %v2536 = vsel %vm60, %v2531, %v2533
  %v2537 = vcombine.low %v2507, %v2507
  %v2538 = vcombine.low %v2514, %v2514
  %2539 = vrot.lane.b32.xlu0 %v2537, 126
  %v2540 = vpop.permute.xlu0 %2539
  %2541 = vrot.lane.b32.xlu0 %v2507, 126
  %v2542 = vpop.permute.xlu0 %2541
  %2543 = vrot.lane.b32.xlu0 %v2538, 126
  %v2544 = vpop.permute.xlu0 %2543
  %2545 = vrot.lane.b32.xlu0 %v2514, 126
  %v2546 = vpop.permute.xlu0 %2545
  %v2547 = vsel %vm82, %v2540, %v2542
  %v2548 = vsel %vm82, %v2542, %v2544
  %v2549 = vsel %vm82, %v2544, %v2546
  %v2550 = vcombine.low %v2524, %v2524
  %2551 = vrot.lane.b32.xlu0 %v2550, 125
  %v2552 = vpop.permute.xlu0 %2551
  %2553 = vrot.lane.b32.xlu0 %v2524, 125
  %v2554 = vpop.permute.xlu0 %2553
  %2555 = vrot.lane.b32.xlu0 %v2537, 125
  %v2556 = vpop.permute.xlu0 %2555
  %2557 = vrot.lane.b32.xlu0 %v2507, 125
  %v2558 = vpop.permute.xlu0 %2557
  %v2559 = vsel %vm95, %v2552, %v2554
  %v2560 = vsel %vm95, %v2554, %v2556
  %v2561 = vsel %vm95, %v2556, %v2558
  %v2564 = vsel %vm99, %v2507, %v2534
  %v2567 = vsel %vm99, %v2515, %v2535
  %v2570 = vsel %vm99, %v2514, %v2536
  %v2573 = vsel %vm99, %v2516, %v2533
  %v2575 = vsel %vm109, %v2564, %v2547
  %v2577 = vsel %vm109, %v2567, %v2548
  %v2579 = vsel %vm109, %v2570, %v2549
  %v2581 = vsel %vm109, %v2573, %v2546
  %v2583 = vsel %vm116, %v2575, %v2559
  %v2585 = vsel %vm116, %v2577, %v2560
  %v2587 = vsel %vm116, %v2579, %v2561
  %v2589 = vsel %vm116, %v2581, %v2558
  %2594 = vrot.lane.b32.xlu0 %v2583, 17
  %v2595 = vpop.permute.xlu0 %2594
  %2596 = vrot.lane.b32.xlu0 %v2585, 17
  %v2597 = vpop.permute.xlu0 %2596
  %2598 = vrot.lane.b32.xlu0 %v2587, 17
  %v2599 = vpop.permute.xlu0 %2598
  %2600 = vrot.lane.b32.xlu0 %v2589, 17
  %v2601 = vpop.permute.xlu0 %2600
  %v2602 = vsel %vm1148, %v2595, %v2597
  %v2603 = vsel %vm1148, %v2597, %v2599
  %v2604 = vsel %vm1148, %v2599, %v2601
  %2608 = vst [vmem:[#allocation2 + $0x1c8] sm:$0xff] %v2602
  %2609 = vst [vmem:[#allocation2 + $0x1d0] sm:$0xff] %v2603
  %2610 = vst [vmem:[#allocation2 + $0x1d8] sm:$0xff] %v2604
  %v2611 = vld [vmem:[%s1485] sm:$0xff]
  %v2612 = vld [vmem:[%s1485 + $0x2] sm:$0xff]
  %v2614 = vcombine.high %v2611, %v2611
  %v2616 = vunpack.c.l.s4 1983009808
  %v2617 = vunpack.c.0.s8 %v2616
  %v2618 = vlaneseq
  %v2619 = vshrl.u32 %v2618, 7
  %v2620 = vsub.s32 %v2617, %v2619
  %v2621 = vrot.slane %v2611, %v2620
  %v2623 = vunpack.c.l.s4 1983009808
  %v2624 = vunpack.c.0.s8 %v2623
  %v2625 = vlaneseq
  %v2626 = vshrl.u32 %v2625, 7
  %v2627 = vsub.s32 %v2624, %v2626
  %v2628 = vrot.slane %v2614, %v2627
  %v2629 = vcombine.high %v2621, %v2621
  %v2630 = vcombine.high %v2628, %v2628
  %v2631 = vcombine.low %v2611, %v2611
  %v2633 = vunpack.c.l.s4 1983009808
  %v2634 = vunpack.c.0.s8 %v2633
  %v2635 = vlaneseq
  %v2636 = vshrl.u32 %v2635, 7
  %v2637 = vsub.s32 %v2634, %v2636
  %v2638 = vrot.slane %v2631, %v2637
  %v2639 = vcombine.high %v2638, %v2638
  %2640 = vrot.lane.b32.xlu0 %v2638, 127
  %v2641 = vpop.permute.xlu0 %2640
  %2642 = vrot.lane.b32.xlu0 %v2639, 127
  %v2643 = vpop.permute.xlu0 %2642
  %2644 = vrot.lane.b32.xlu0 %v2621, 127
  %v2645 = vpop.permute.xlu0 %2644
  %2646 = vrot.lane.b32.xlu0 %v2629, 127
  %v2647 = vpop.permute.xlu0 %2646
  %v2648 = vsel %vm60, %v2641, %v2643
  %v2649 = vsel %vm60, %v2643, %v2645
  %v2650 = vsel %vm60, %v2645, %v2647
  %v2652 = vcombine.high %v2612, %v2612
  %v2654 = vunpack.c.l.s4 1983009808
  %v2655 = vunpack.c.0.s8 %v2654
  %v2656 = vlaneseq
  %v2657 = vshrl.u32 %v2656, 7
  %v2658 = vsub.s32 %v2655, %v2657
  %v2659 = vrot.slane %v2612, %v2658
  %v2661 = vunpack.c.l.s4 1983009808
  %v2662 = vunpack.c.0.s8 %v2661
  %v2663 = vlaneseq
  %v2664 = vshrl.u32 %v2663, 7
  %v2665 = vsub.s32 %v2662, %v2664
  %v2666 = vrot.slane %v2652, %v2665
  %v2667 = vcombine.low %v2659, %v2659
  %v2668 = vcombine.low %v2666, %v2666
  %2669 = vrot.lane.b32.xlu0 %v2667, 111
  %v2670 = vpop.permute.xlu0 %2669
  %2671 = vrot.lane.b32.xlu0 %v2659, 111
  %v2672 = vpop.permute.xlu0 %2671
  %2673 = vrot.lane.b32.xlu0 %v2668, 111
  %v2674 = vpop.permute.xlu0 %2673
  %2675 = vrot.lane.b32.xlu0 %v2666, 111
  %v2676 = vpop.permute.xlu0 %2675
  %v2677 = vsel %vm407, %v2670, %v2672
  %v2678 = vsel %vm407, %v2672, %v2674
  %v2679 = vsel %vm407, %v2674, %v2676
  %v2680 = vcombine.low %v2612, %v2612
  %v2682 = vunpack.c.l.s4 1983009808
  %v2683 = vunpack.c.0.s8 %v2682
  %v2684 = vlaneseq
  %v2685 = vshrl.u32 %v2684, 7
  %v2686 = vsub.s32 %v2683, %v2685
  %v2687 = vrot.slane %v2680, %v2686
  %v2688 = vcombine.low %v2687, %v2687
  %2689 = vrot.lane.b32.xlu0 %v2688, 110
  %v2690 = vpop.permute.xlu0 %2689
  %2691 = vrot.lane.b32.xlu0 %v2687, 110
  %v2692 = vpop.permute.xlu0 %2691
  %2693 = vrot.lane.b32.xlu0 %v2667, 110
  %v2694 = vpop.permute.xlu0 %2693
  %2695 = vrot.lane.b32.xlu0 %v2659, 110
  %v2696 = vpop.permute.xlu0 %2695
  %v2697 = vsel %vm190, %v2690, %v2692
  %v2698 = vsel %vm190, %v2692, %v2694
  %v2699 = vsel %vm190, %v2694, %v2696
  %v2702 = vsel %vm99, %v2621, %v2648
  %v2705 = vsel %vm99, %v2629, %v2649
  %v2708 = vsel %vm99, %v2628, %v2650
  %v2711 = vsel %vm99, %v2630, %v2647
  %v2713 = vsel %vm109, %v2702, %v2670
  %v2715 = vsel %vm109, %v2705, %v2677
  %v2717 = vsel %vm109, %v2708, %v2678
  %v2719 = vsel %vm109, %v2711, %v2679
  %v2721 = vsel %vm116, %v2713, %v2690
  %v2723 = vsel %vm116, %v2715, %v2697
  %v2725 = vsel %vm116, %v2717, %v2698
  %v2727 = vsel %vm116, %v2719, %v2699
  %2732 = vrot.lane.b32.xlu0 %v2721, 13
  %v2733 = vpop.permute.xlu0 %2732
  %2734 = vrot.lane.b32.xlu0 %v2723, 13
  %v2735 = vpop.permute.xlu0 %2734
  %2736 = vrot.lane.b32.xlu0 %v2725, 13
  %v2737 = vpop.permute.xlu0 %2736
  %2738 = vrot.lane.b32.xlu0 %v2727, 13
  %v2739 = vpop.permute.xlu0 %2738
  %v2740 = vsel %vm1287, %v2733, %v2735
  %v2741 = vsel %vm1287, %v2735, %v2737
  %v2742 = vsel %vm1287, %v2737, %v2739
  %2746 = vst [vmem:[#allocation2 + $0x1f8] sm:$0xff] %v2740
  %2747 = vst [vmem:[#allocation2 + $0x200] sm:$0xff] %v2741
  %2748 = vst [vmem:[#allocation2 + $0x208] sm:$0xff] %v2742
  %v2749 = vld [vmem:[%s1485 + $0x2] sm:$0xff]
  %v2751 = vcombine.high %v2749, %v2749
  %v2753 = vunpack.c.l.s4 1983009808
  %v2754 = vunpack.c.0.s8 %v2753
  %v2755 = vlaneseq
  %v2756 = vshrl.u32 %v2755, 7
  %v2757 = vsub.s32 %v2754, %v2756
  %v2758 = vrot.slane %v2749, %v2757
  %v2760 = vunpack.c.l.s4 1983009808
  %v2761 = vunpack.c.0.s8 %v2760
  %v2762 = vlaneseq
  %v2763 = vshrl.u32 %v2762, 7
  %v2764 = vsub.s32 %v2761, %v2763
  %v2765 = vrot.slane %v2751, %v2764
  %v2766 = vcombine.high %v2758, %v2758
  %v2767 = vcombine.high %v2765, %v2765
  %v2768 = vcombine.low %v2749, %v2749
  %v2770 = vunpack.c.l.s4 1983009808
  %v2771 = vunpack.c.0.s8 %v2770
  %v2772 = vlaneseq
  %v2773 = vshrl.u32 %v2772, 7
  %v2774 = vsub.s32 %v2771, %v2773
  %v2775 = vrot.slane %v2768, %v2774
  %v2776 = vcombine.high %v2775, %v2775
  %2777 = vrot.lane.b32.xlu0 %v2775, 127
  %v2778 = vpop.permute.xlu0 %2777
  %2779 = vrot.lane.b32.xlu0 %v2776, 127
  %v2780 = vpop.permute.xlu0 %2779
  %2781 = vrot.lane.b32.xlu0 %v2758, 127
  %v2782 = vpop.permute.xlu0 %2781
  %2783 = vrot.lane.b32.xlu0 %v2766, 127
  %v2784 = vpop.permute.xlu0 %2783
  %v2785 = vsel %vm60, %v2778, %v2780
  %v2786 = vsel %vm60, %v2780, %v2782
  %v2787 = vsel %vm60, %v2782, %v2784
  %v2788 = vcombine.low %v2758, %v2758
  %v2789 = vcombine.low %v2765, %v2765
  %2790 = vrot.lane.b32.xlu0 %v2788, 126
  %v2791 = vpop.permute.xlu0 %2790
  %2792 = vrot.lane.b32.xlu0 %v2758, 126
  %v2793 = vpop.permute.xlu0 %2792
  %2794 = vrot.lane.b32.xlu0 %v2789, 126
  %v2795 = vpop.permute.xlu0 %2794
  %2796 = vrot.lane.b32.xlu0 %v2765, 126
  %v2797 = vpop.permute.xlu0 %2796
  %v2798 = vsel %vm82, %v2791, %v2793
  %v2799 = vsel %vm82, %v2793, %v2795
  %v2800 = vsel %vm82, %v2795, %v2797
  %v2801 = vcombine.low %v2775, %v2775
  %2802 = vrot.lane.b32.xlu0 %v2801, 125
  %v2803 = vpop.permute.xlu0 %2802
  %2804 = vrot.lane.b32.xlu0 %v2775, 125
  %v2805 = vpop.permute.xlu0 %2804
  %2806 = vrot.lane.b32.xlu0 %v2788, 125
  %v2807 = vpop.permute.xlu0 %2806
  %2808 = vrot.lane.b32.xlu0 %v2758, 125
  %v2809 = vpop.permute.xlu0 %2808
  %v2810 = vsel %vm95, %v2803, %v2805
  %v2811 = vsel %vm95, %v2805, %v2807
  %v2812 = vsel %vm95, %v2807, %v2809
  %v2815 = vsel %vm99, %v2758, %v2785
  %v2818 = vsel %vm99, %v2766, %v2786
  %v2821 = vsel %vm99, %v2765, %v2787
  %v2824 = vsel %vm99, %v2767, %v2784
  %v2826 = vsel %vm109, %v2815, %v2798
  %v2828 = vsel %vm109, %v2818, %v2799
  %v2830 = vsel %vm109, %v2821, %v2800
  %v2832 = vsel %vm109, %v2824, %v2797
  %v2834 = vsel %vm116, %v2826, %v2810
  %v2836 = vsel %vm116, %v2828, %v2811
  %v2838 = vsel %vm116, %v2830, %v2812
  %v2840 = vsel %vm116, %v2832, %v2809
  %2845 = vrot.lane.b32.xlu0 %v2834, 122
  %v2846 = vpop.permute.xlu0 %2845
  %2847 = vrot.lane.b32.xlu0 %v2836, 122
  %v2848 = vpop.permute.xlu0 %2847
  %2849 = vrot.lane.b32.xlu0 %v2838, 122
  %v2850 = vpop.permute.xlu0 %2849
  %2851 = vrot.lane.b32.xlu0 %v2840, 122
  %v2852 = vpop.permute.xlu0 %2851
  %v2853 = vsel %vm1401, %v2846, %v2848
  %v2854 = vsel %vm1401, %v2848, %v2850
  %v2855 = vsel %vm1401, %v2850, %v2852
  %2859 = vst [vmem:[#allocation2 + $0x228] sm:$0xff] %v2853
  %2860 = vst [vmem:[#allocation2 + $0x230] sm:$0xff] %v2854
  %2861 = vst [vmem:[#allocation2 + $0x238] sm:$0xff] %v2855
  %v2862 = vld [vmem:[%s1485 + $0x2] sm:$0xff]
  %v2864 = vcombine.high %v2862, %v2862
  %v2866 = vunpack.c.l.s4 1983009808
  %v2867 = vunpack.c.0.s8 %v2866
  %v2868 = vlaneseq
  %v2869 = vshrl.u32 %v2868, 7
  %v2870 = vsub.s32 %v2867, %v2869
  %v2871 = vrot.slane %v2862, %v2870
  %v2873 = vunpack.c.l.s4 1983009808
  %v2874 = vunpack.c.0.s8 %v2873
  %v2875 = vlaneseq
  %v2876 = vshrl.u32 %v2875, 7
  %v2877 = vsub.s32 %v2874, %v2876
  %v2878 = vrot.slane %v2864, %v2877
  %v2879 = vcombine.high %v2871, %v2871
  %v2880 = vcombine.high %v2878, %v2878
  %v2881 = vcombine.low %v2862, %v2862
  %v2883 = vunpack.c.l.s4 1983009808
  %v2884 = vunpack.c.0.s8 %v2883
  %v2885 = vlaneseq
  %v2886 = vshrl.u32 %v2885, 7
  %v2887 = vsub.s32 %v2884, %v2886
  %v2888 = vrot.slane %v2881, %v2887
  %v2889 = vcombine.high %v2888, %v2888
  %v2890 = vcombine.low %v2871, %v2871
  %v2891 = vcombine.low %v2878, %v2878
  %v2892 = vcombine.low %v2888, %v2888
  %v2895 = vsel %vm99, %v2871, %v2888
  %v2898 = vsel %vm99, %v2879, %v2889
  %v2900 = vsel %vm99, %v2878, %v2871
  %v2902 = vsel %vm99, %v2880, %v2879
  %v2904 = vsel %vm109, %v2895, %v2890
  %v2905 = vsel %vm109, %v2898, %v2871
  %v2907 = vsel %vm109, %v2900, %v2891
  %v2908 = vsel %vm109, %v2902, %v2878
  %v2910 = vsel %vm116, %v2904, %v2892
  %v2911 = vsel %vm116, %v2905, %v2888
  %v2912 = vsel %vm116, %v2907, %v2890
  %v2913 = vsel %vm116, %v2908, %v2871
  %2918 = vrot.lane.b32.xlu0 %v2910, 118
  %v2919 = vpop.permute.xlu0 %2918
  %2920 = vrot.lane.b32.xlu0 %v2911, 118
  %v2921 = vpop.permute.xlu0 %2920
  %2922 = vrot.lane.b32.xlu0 %v2912, 118
  %v2923 = vpop.permute.xlu0 %2922
  %2924 = vrot.lane.b32.xlu0 %v2913, 118
  %v2925 = vpop.permute.xlu0 %2924
  %v2926 = vsel %vm1475, %v2919, %v2921
  %v2927 = vsel %vm1475, %v2921, %v2923
  %v2928 = vsel %vm1475, %v2923, %v2925
  %2932 = vst [vmem:[#allocation2 + $0x258] sm:$0xff] %v2926
  %2933 = vst [vmem:[#allocation2 + $0x260] sm:$0xff] %v2927
  %2934 = vst [vmem:[#allocation2 + $0x268] sm:$0xff] %v2928
  %v2935 = vld [vmem:[%s1] sm:$0xff]
  %v2936 = vld [vmem:[%s1 + $0x8] sm:$0xff]
  %v2937 = vld [vmem:[%s1 + $0x10] sm:$0xff]
  %v2938 = vld [vmem:[#allocation2] sm:$0xff]
  %v2939 = vld [vmem:[#allocation2 + $0x8] sm:$0xff]
  %v2940 = vld [vmem:[#allocation2 + $0x10] sm:$0xff]
  %v2941 = vld [vmem:[#allocation2 + $0x18] sm:$0xff]
  %v2942 = vld [vmem:[#allocation2 + $0x20] sm:$0xff]
  %v2943 = vld [vmem:[#allocation2 + $0x28] sm:$0xff]
  %v2944 = vld [vmem:[#allocation2 + $0x30] sm:$0xff]
  %v2945 = vld [vmem:[#allocation2 + $0x38] sm:$0xff]
  %v2946 = vld [vmem:[#allocation2 + $0x40] sm:$0xff]
  %v2947 = vld [vmem:[#allocation2 + $0x48] sm:$0xff]
  %v2948 = vld [vmem:[#allocation2 + $0x50] sm:$0xff]
  %v2949 = vld [vmem:[#allocation2 + $0x58] sm:$0xff]
  %v2950 = vld [vmem:[#allocation2 + $0x60] sm:$0xff]
  %v2951 = vld [vmem:[#allocation2 + $0x68] sm:$0xff]
  %v2952 = vld [vmem:[#allocation2 + $0x70] sm:$0xff]
  %v2953 = vld [vmem:[#allocation2 + $0x78] sm:$0xff]
  %v2954 = vld [vmem:[#allocation2 + $0x80] sm:$0xff]
  %v2955 = vld [vmem:[#allocation2 + $0x88] sm:$0xff]
  %v2956 = vld [vmem:[#allocation2 + $0x90] sm:$0xff]
  %v2957 = vld [vmem:[#allocation2 + $0x98] sm:$0xff]
  %v2958 = vld [vmem:[#allocation2 + $0xa0] sm:$0xff]
  %v2959 = vld [vmem:[#allocation2 + $0xa8] sm:$0xff]
  %v2960 = vld [vmem:[#allocation2 + $0xb0] sm:$0xff]
  %v2961 = vld [vmem:[#allocation2 + $0xb8] sm:$0xff]
  %v2962 = vld [vmem:[#allocation2 + $0xc0] sm:$0xff]
  %v2963 = vld [vmem:[#allocation2 + $0xc8] sm:$0xff]
  %v2964 = vld [vmem:[#allocation2 + $0xd0] sm:$0xff]
  %v2965 = vld [vmem:[#allocation2 + $0xd8] sm:$0xff]
  %v2966 = vld [vmem:[#allocation2 + $0xe0] sm:$0xff]
  %v2967 = vld [vmem:[#allocation2 + $0xe8] sm:$0xff]
  %v2968 = vld [vmem:[#allocation2 + $0xf0] sm:$0xff]
  %v2969 = vld [vmem:[#allocation2 + $0xf8] sm:$0xff]
  %v2970 = vld [vmem:[#allocation2 + $0x100] sm:$0xff]
  %v2971 = vld [vmem:[#allocation2 + $0x108] sm:$0xff]
  %v2972 = vld [vmem:[#allocation2 + $0x110] sm:$0xff]
  %v2973 = vld [vmem:[#allocation2 + $0x118] sm:$0xff]
  %v2974 = vld [vmem:[#allocation2 + $0x120] sm:$0xff]
  %v2975 = vld [vmem:[#allocation2 + $0x128] sm:$0xff]
  %v2976 = vld [vmem:[#allocation2 + $0x130] sm:$0xff]
  %v2977 = vld [vmem:[#allocation2 + $0x138] sm:$0xff]
  %v2978 = vld [vmem:[#allocation2 + $0x140] sm:$0xff]
  %v2979 = vld [vmem:[#allocation2 + $0x148] sm:$0xff]
  %v2980 = vld [vmem:[#allocation2 + $0x150] sm:$0xff]
  %v2981 = vld [vmem:[#allocation2 + $0x158] sm:$0xff]
  %v2982 = vld [vmem:[#allocation2 + $0x160] sm:$0xff]
  %v2983 = vld [vmem:[#allocation2 + $0x168] sm:$0xff]
  %v2984 = vld [vmem:[#allocation2 + $0x170] sm:$0xff]
  %v2985 = vld [vmem:[#allocation2 + $0x178] sm:$0xff]
  %v2986 = vld [vmem:[#allocation2 + $0x180] sm:$0xff]
  %v2987 = vld [vmem:[#allocation2 + $0x188] sm:$0xff]
  %v2988 = vld [vmem:[#allocation2 + $0x190] sm:$0xff]
  %v2989 = vld [vmem:[#allocation2 + $0x198] sm:$0xff]
  %v2990 = vld [vmem:[#allocation2 + $0x1a0] sm:$0xff]
  %v2991 = vld [vmem:[#allocation2 + $0x1a8] sm:$0xff]
  %v2992 = vld [vmem:[#allocation2 + $0x1b0] sm:$0xff]
  %v2993 = vld [vmem:[#allocation2 + $0x1b8] sm:$0xff]
  %v2994 = vld [vmem:[#allocation2 + $0x1c0] sm:$0xff]
  %v2995 = vld [vmem:[#allocation2 + $0x1c8] sm:$0xff]
  %v2996 = vld [vmem:[#allocation2 + $0x1d0] sm:$0xff]
  %v2997 = vld [vmem:[#allocation2 + $0x1d8] sm:$0xff]
  %v2998 = vld [vmem:[#allocation2 + $0x1e0] sm:$0xff]
  %v2999 = vld [vmem:[#allocation2 + $0x1e8] sm:$0xff]
  %v3000 = vld [vmem:[#allocation2 + $0x1f0] sm:$0xff]
  %v3001 = vld [vmem:[#allocation2 + $0x1f8] sm:$0xff]
  %v3002 = vld [vmem:[#allocation2 + $0x200] sm:$0xff]
  %v3003 = vld [vmem:[#allocation2 + $0x208] sm:$0xff]
  %v3004 = vld [vmem:[#allocation2 + $0x210] sm:$0xff]
  %v3005 = vld [vmem:[#allocation2 + $0x218] sm:$0xff]
  %v3006 = vld [vmem:[#allocation2 + $0x220] sm:$0xff]
  %v3007 = vld [vmem:[#allocation2 + $0x228] sm:$0xff]
  %v3008 = vld [vmem:[#allocation2 + $0x230] sm:$0xff]
  %v3009 = vld [vmem:[#allocation2 + $0x238] sm:$0xff]
  %v3010 = vld [vmem:[#allocation2 + $0x240] sm:$0xff]
  %v3011 = vld [vmem:[#allocation2 + $0x248] sm:$0xff]
  %v3012 = vld [vmem:[#allocation2 + $0x250] sm:$0xff]
  %v3013 = vld [vmem:[#allocation2 + $0x258] sm:$0xff]
  %v3014 = vld [vmem:[#allocation2 + $0x260] sm:$0xff]
  %v3015 = vld [vmem:[#allocation2 + $0x268] sm:$0xff]
  %v3016 = vld [vmem:[%s2] sm:$0xff]
  %v3017 = vld [vmem:[%s2 + $0x8] sm:$0xff]
  %v3018 = vld [vmem:[%s2 + $0x10] sm:$0xff]
  %3020 = vset.pattern.permute.xlu0 0
  %3021 = vperm.xlu0 %3020, %v3016
  %v3022 = vpop.permute.xlu0 %3021
  %3025 = vset.pattern.permute.xlu0 0
  %3026 = vperm.xlu0 %3025, %v3017
  %v3027 = vpop.permute.xlu0 %3026
  %3030 = vset.pattern.permute.xlu0 0
  %3031 = vperm.xlu0 %3030, %v3018
  %v3032 = vpop.permute.xlu0 %3031
  %v3037 = vunpack.c.l.b16 %v2935
  %v3038 = vunpack.c.h.b16 %v2935
  %v3039 = vunpack.c.l.b16 %v2936
  %v3040 = vunpack.c.h.b16 %v2936
  %v3041 = vunpack.c.l.b16 %v2937
  %v3042 = vunpack.c.h.b16 %v2937
  %v3043 = vpack.c.b16 %v3039, %v3037
  %v3044 = vpack.c.b16 %v3040, %v3038
  %v3045 = vpack.c.b16 %v3041, %v3041
  %v3046 = vpack.c.b16 %v3042, %v3042
  %vm3049 = vcmask 654336
  %v3051 = vsel %vm3049, %v3044, 0
  %v3054 = vsel %vm3049, %v3046, 0
  %3056 = vmatprep.subr.bf16.mxu0 %v2939
  %3057 = vmatpush1.bf16.msra.mxu0 %v2938
  %3058 = vmatprep.subr.bf16.mxu0 %v2945
  %3059 = vmatpush1.bf16.msra.mxu0 %v2944
  %3060 = vmatprep.subr.bf16.mxu0 %v2951
  %3061 = vmatpush1.bf16.msra.mxu0 %v2950
  %3062 = vmatprep.subr.bf16.mxu0 %v2957
  %3063 = vmatpush1.bf16.msra.mxu0 %v2956
  %3064 = vmatprep.subr.bf16.mxu0 %v2963
  %3065 = vmatpush1.bf16.msra.mxu0 %v2962
  %3066 = vmatprep.subr.bf16.mxu0 %v2969
  %3067 = vmatpush1.bf16.msra.mxu0 %v2968
  %3068 = vmatprep.subr.bf16.mxu0 %v2975
  %3069 = vmatpush1.bf16.msra.mxu0 %v2974
  %3070 = vmatprep.subr.bf16.mxu0 %v2981
  %3071 = vmatpush1.bf16.msra.mxu0 %v2980
  %3072 = vmatprep.subr.bf16.mxu0 %v2987
  %3073 = vmatpush1.bf16.msra.mxu0 %v2986
  %3074 = vmatprep.subr.bf16.mxu0 %v2993
  %3075 = vmatpush1.bf16.msra.mxu0 %v2992
  %3076 = vmatprep.subr.bf16.mxu0 %v2999
  %3077 = vmatpush1.bf16.msra.mxu0 %v2998
  %3078 = vmatprep.subr.bf16.mxu0 %v3005
  %3079 = vmatpush1.bf16.msra.mxu0 %v3004
  %3080 = vmatprep.subr.bf16.mxu0 %v3011
  %3081 = vmatpush1.bf16.msra.mxu0 %v3010
  %3082 = vmatprep.subr.bf16.mxu0 0
  %3083 = vmatpush1.bf16.msra.mxu0 0
  %3084 = vmatprep.subr.bf16.mxu0 0
  %3085 = vmatpush1.bf16.msra.mxu0 0
  %3086 = vmatprep.subr.bf16.mxu0 0
  %3087 = vmatpush1.bf16.msra.mxu0 0
  %3088 = vmatprep.mubr.bf16.mxu0 %v3051
  %3089 = vmatmul.mubr.bf16.gmra.mrb[0].mxu0 %v3043
  %v3090 = vpop.f32.mrb[0].mxu0
  %v3091 = vadd.f32 %v3022, %v3090
  %v3092 = vpop.f32.mrb[0].mxu0
  %v3093 = vadd.f32 %v3022, %v3092
  %v3094 = vpop.f32.mrb[0].mxu0
  %v3095 = vadd.f32 %v3027, %v3094
  %v3096 = vpop.f32.mrb[0].mxu0
  %v3097 = vadd.f32 %v3027, %v3096
  %3098 = vmatprep.mubr.bf16.mxu0 %v3054
  %3099 = vmatmul.mubr.bf16.gmra.mrb[0].mxu0 %v3045
  %v3100 = vpop.f32.mrb[0].mxu0
  %v3101 = vadd.f32 %v3032, %v3100
  %v3102 = vpop.f32.mrb[0].mxu0
  %v3103 = vadd.f32 %v3032, %v3102
  %v3104 = vpop.f32.mrb[0].mxu0
  %v3105 = vpop.f32.mrb[0].mxu0
  %3106 = vdwg.mxu0
  %3107 = vmatprep.subr.bf16.mxu0 %v2941
  %3108 = vmatpush1.bf16.msra.mxu0 %v2940
  %3109 = vmatprep.subr.bf16.mxu0 %v2947
  %3110 = vmatpush1.bf16.msra.mxu0 %v2946
  %3111 = vmatprep.subr.bf16.mxu0 %v2953
  %3112 = vmatpush1.bf16.msra.mxu0 %v2952
  %3113 = vmatprep.subr.bf16.mxu0 %v2959
  %3114 = vmatpush1.bf16.msra.mxu0 %v2958
  %3115 = vmatprep.subr.bf16.mxu0 %v2965
  %3116 = vmatpush1.bf16.msra.mxu0 %v2964
  %3117 = vmatprep.subr.bf16.mxu0 %v2971
  %3118 = vmatpush1.bf16.msra.mxu0 %v2970
  %3119 = vmatprep.subr.bf16.mxu0 %v2977
  %3120 = vmatpush1.bf16.msra.mxu0 %v2976
  %3121 = vmatprep.subr.bf16.mxu0 %v2983
  %3122 = vmatpush1.bf16.msra.mxu0 %v2982
  %3123 = vmatprep.subr.bf16.mxu0 %v2989
  %3124 = vmatpush1.bf16.msra.mxu0 %v2988
  %3125 = vmatprep.subr.bf16.mxu0 %v2995
  %3126 = vmatpush1.bf16.msra.mxu0 %v2994
  %3127 = vmatprep.subr.bf16.mxu0 %v3001
  %3128 = vmatpush1.bf16.msra.mxu0 %v3000
  %3129 = vmatprep.subr.bf16.mxu0 %v3007
  %3130 = vmatpush1.bf16.msra.mxu0 %v3006
  %3131 = vmatprep.subr.bf16.mxu0 %v3013
  %3132 = vmatpush1.bf16.msra.mxu0 %v3012
  %3133 = vmatprep.subr.bf16.mxu0 0
  %3134 = vmatpush1.bf16.msra.mxu0 0
  %3135 = vmatprep.subr.bf16.mxu0 0
  %3136 = vmatpush1.bf16.msra.mxu0 0
  %3137 = vmatprep.subr.bf16.mxu0 0
  %3138 = vmatpush1.bf16.msra.mxu0 0
  %3139 = vmatprep.mubr.bf16.mxu0 %v3051
  %3140 = vmatmul.mubr.bf16.gmra.mrb[0].mxu0 %v3043
  %v3141 = vpop.f32.mrb[0].mxu0
  %v3142 = vadd.f32 %v3022, %v3141
  %v3143 = vpop.f32.mrb[0].mxu0
  %v3144 = vadd.f32 %v3022, %v3143
  %v3145 = vpop.f32.mrb[0].mxu0
  %v3146 = vadd.f32 %v3027, %v3145
  %v3147 = vpop.f32.mrb[0].mxu0
  %v3148 = vadd.f32 %v3027, %v3147
  %3149 = vmatprep.mubr.bf16.mxu0 %v3054
  %3150 = vmatmul.mubr.bf16.gmra.mrb[0].mxu0 %v3045
  %v3151 = vpop.f32.mrb[0].mxu0
  %v3152 = vadd.f32 %v3032, %v3151
  %v3153 = vpop.f32.mrb[0].mxu0
  %v3154 = vadd.f32 %v3032, %v3153
  %v3155 = vpop.f32.mrb[0].mxu0
  %v3156 = vpop.f32.mrb[0].mxu0
  %3157 = vdwg.mxu0
  %3158 = vmatprep.subr.bf16.mxu0 %v2943
  %3159 = vmatpush1.bf16.msra.mxu0 %v2942
  %3160 = vmatprep.subr.bf16.mxu0 %v2949
  %3161 = vmatpush1.bf16.msra.mxu0 %v2948
  %3162 = vmatprep.subr.bf16.mxu0 %v2955
  %3163 = vmatpush1.bf16.msra.mxu0 %v2954
  %3164 = vmatprep.subr.bf16.mxu0 %v2961
  %3165 = vmatpush1.bf16.msra.mxu0 %v2960
  %3166 = vmatprep.subr.bf16.mxu0 %v2967
  %3167 = vmatpush1.bf16.msra.mxu0 %v2966
  %3168 = vmatprep.subr.bf16.mxu0 %v2973
  %3169 = vmatpush1.bf16.msra.mxu0 %v2972
  %3170 = vmatprep.subr.bf16.mxu0 %v2979
  %3171 = vmatpush1.bf16.msra.mxu0 %v2978
  %3172 = vmatprep.subr.bf16.mxu0 %v2985
  %3173 = vmatpush1.bf16.msra.mxu0 %v2984
  %3174 = vmatprep.subr.bf16.mxu0 %v2991
  %3175 = vmatpush1.bf16.msra.mxu0 %v2990
  %3176 = vmatprep.subr.bf16.mxu0 %v2997
  %3177 = vmatpush1.bf16.msra.mxu0 %v2996
  %3178 = vmatprep.subr.bf16.mxu0 %v3003
  %3179 = vmatpush1.bf16.msra.mxu0 %v3002
  %3180 = vmatprep.subr.bf16.mxu0 %v3009
  %3181 = vmatpush1.bf16.msra.mxu0 %v3008
  %3182 = vmatprep.subr.bf16.mxu0 %v3015
  %3183 = vmatpush1.bf16.msra.mxu0 %v3014
  %3184 = vmatprep.subr.bf16.mxu0 0
  %3185 = vmatpush1.bf16.msra.mxu0 0
  %3186 = vmatprep.subr.bf16.mxu0 0
  %3187 = vmatpush1.bf16.msra.mxu0 0
  %3188 = vmatprep.subr.bf16.mxu0 0
  %3189 = vmatpush1.bf16.msra.mxu0 0
  %3190 = vmatprep.mubr.bf16.mxu0 %v3051
  %3191 = vmatmul.mubr.bf16.gmra.mrb[0].mxu0 %v3043
  %v3192 = vpop.f32.mrb[0].mxu0
  %v3193 = vadd.f32 %v3022, %v3192
  %v3194 = vpop.f32.mrb[0].mxu0
  %v3195 = vadd.f32 %v3022, %v3194
  %v3196 = vpop.f32.mrb[0].mxu0
  %v3197 = vadd.f32 %v3027, %v3196
  %v3198 = vpop.f32.mrb[0].mxu0
  %v3199 = vadd.f32 %v3027, %v3198
  %3200 = vmatprep.mubr.bf16.mxu0 %v3054
  %3201 = vmatmul.mubr.bf16.gmra.mrb[0].mxu0 %v3045
  %v3202 = vpop.f32.mrb[0].mxu0
  %v3203 = vadd.f32 %v3032, %v3202
  %v3204 = vpop.f32.mrb[0].mxu0
  %v3205 = vadd.f32 %v3032, %v3204
  %v3206 = vpop.f32.mrb[0].mxu0
  %v3207 = vpop.f32.mrb[0].mxu0
  %3208 = vdwg.mxu0
  %3209 = vst [vmem:[%s3] sm:$0xff] %v3091
  %3210 = vst [vmem:[%s3 + $0x8] sm:$0xff] %v3093
  %3211 = vst [vmem:[%s3 + $0x10] sm:$0xff] %v3142
  %3212 = vst [vmem:[%s3 + $0x18] sm:$0xff] %v3095
  %3213 = vst [vmem:[%s3 + $0x20] sm:$0xff] %v3097
  %3214 = vst [vmem:[%s3 + $0x28] sm:$0xff] %v3146
  %3215 = vst [vmem:[%s3 + $0x30] sm:$0xff] %v3101
  %3216 = vst [vmem:[%s3 + $0x38] sm:$0xff] %v3103
  %3217 = vst [vmem:[%s3 + $0x40] sm:$0xff] %v3152
  %s3218 = scalar_lea.vmem %s3, 72
  %3219 = vst [vmem:[%s3218] sm:$0xff] %v3144
  %3220 = vst [vmem:[%s3218 + $0x8] sm:$0xff] %v3193
  %3221 = vst [vmem:[%s3218 + $0x10] sm:$0xff] %v3195
  %3222 = vst [vmem:[%s3218 + $0x18] sm:$0xff] %v3148
  %3223 = vst [vmem:[%s3218 + $0x20] sm:$0xff] %v3197
  %3224 = vst [vmem:[%s3218 + $0x28] sm:$0xff] %v3199
  %3225 = vst [vmem:[%s3218 + $0x30] sm:$0xff] %v3154
  %3226 = vst [vmem:[%s3218 + $0x38] sm:$0xff] %v3203
  %3227 = vst [vmem:[%s3218 + $0x40] sm:$0xff] %v3205
  // Predicated region
  $region14: #{mrconv_forward.1} parent=0 // pred_check
    _
  $region15: #{mrconv_forward.1} parent=0 // pred_check_branch
    %3229 = sbr.rel (0) target = $region17
  $region16: #{mrconv_forward.1} parent=0 // pred_region
    _
  $region17: #{mrconv_forward.1} parent=0 // pred_fallthru
    _
  // Predicated region
  $region18: #{mrconv_forward.1} parent=0 // pred_check
    _
  $region19: #{mrconv_forward.1} parent=0 // pred_check_branch
    %3231 = sbr.rel (0) target = $region21
  $region20: #{mrconv_forward.1} parent=0 // pred_region
    _
  $region21: #{mrconv_forward.1} parent=0 // pred_fallthru
    _

</llo_original>
